<compile_context>
chip_gen: v5e
topology: v5e:2x2
jax: 0.10.0
libtpu: 0.0.40
codegen_flags: <defaults>
</compile_context>

<pallas_src>
import jax
import jax.numpy as jnp
from jax.experimental import pallas as pl
from jax.experimental.pallas import tpu as pltpu

INPUT_DIM = 784
HIDDEN_DIM = 400
LATENT_DIM = 2
NUM_CLASSES = 10

MAX_BATCH_TILE = 512   # ~85% of HBM roofline per tile-size sweep; small VMEM footprint
MIN_SPLIT_BATCH = 32   # below this, forcing 2 grid steps costs more in padding than it gains


def cvae_kernel(
    x_ref, y_ref, eps_ref,
    w1x_ref, w1y_ref, b1_ref,
    w2_ref, b2_ref,            # fused fc21|fc22: (400, 2*LATENT)
    w3z_ref, w3y_ref, b3_ref,
    w4_ref, b4_ref,
    recon_ref, mulogvar_ref,
):
    x = x_ref[...]                            # (Bt, 784) bf16
    y = y_ref[...]                            # (Bt, 10)  bf16 one-hot condition
    eps = eps_ref[...]                        # (Bt, 2)   f32

    # ---- encode: h = relu(fc1(cat([x, y]))) == relu(x@W1x + y@W1y + b1) ----
    h = jnp.dot(x, w1x_ref[...], preferred_element_type=jnp.float32)
    h = h + jnp.dot(y, w1y_ref[...], preferred_element_type=jnp.float32)
    h = jnp.maximum(h + b1_ref[...], 0.0)

    # ---- fused fc21/fc22: one (400, 4) matmul; columns [0:2]=mu, [2:4]=logvar
    ml = jnp.dot(h.astype(jnp.bfloat16), w2_ref[...],
                 preferred_element_type=jnp.float32) + b2_ref[...]
    mu = ml[:, :LATENT_DIM]
    logvar = ml[:, LATENT_DIM:]

    # ---- reparameterize (f32 elementwise): z = mu + eps * exp(0.5*logvar) ----
    z = mu + eps * jnp.exp(0.5 * logvar)

    # ---- decode: h2 = relu(fc3(cat([z, y]))), recon = sigmoid(fc4(h2)) ----
    h2 = jnp.dot(z.astype(jnp.bfloat16), w3z_ref[...],
                 preferred_element_type=jnp.float32)
    h2 = h2 + jnp.dot(y, w3y_ref[...], preferred_element_type=jnp.float32)
    h2 = jnp.maximum(h2 + b3_ref[...], 0.0)

    logits = jnp.dot(h2.astype(jnp.bfloat16), w4_ref[...],
                     preferred_element_type=jnp.float32) + b4_ref[...]
    # sigmoid computed in f32, stored bf16 (halves the dominant output stream)
    recon_ref[...] = jax.nn.sigmoid(logits).astype(recon_ref.dtype)
    mulogvar_ref[...] = ml


def _round_up(n, m):
    return ((n + m - 1) // m) * m


def cvae_forward(x, y, eps, params, *, block_b=MAX_BATCH_TILE):
    """Pallas-backed CVAE forward. Returns (recon[bf16], mu[f32], logvar[f32])."""
    B = x.shape[0]

    # bf16 activation streaming (supply bf16 upstream to avoid this one-time cast).
    x = x.astype(jnp.bfloat16)
    y = y.astype(jnp.bfloat16)
    eps = eps.astype(jnp.float32)

    # Batch tiling: always >= 2 grid steps once B is large enough so both v7x
    # TensorCores get work; 16-row alignment keeps bf16 blocks sublane-packed.
    if B < MIN_SPLIT_BATCH:
        steps, Bt = 1, B
    else:
        steps = max(2, pl.cdiv(B, block_b))
        Bt = _round_up(pl.cdiv(B, steps), 16)
    Bp = steps * Bt
    pad = Bp - B
    if pad:
        x = jnp.pad(x, ((0, pad), (0, 0)))
        y = jnp.pad(y, ((0, pad), (0, 0)))
        eps = jnp.pad(eps, ((0, pad), (0, 0)))
    grid = (steps,)

    def batch_spec(d):
        return pl.BlockSpec((Bt, d), lambda i: (i, 0))

    def resident_spec(a):
        # Whole weight as one block, same block index every grid step -> stays
        # resident in VMEM instead of being re-DMA'd per batch tile.
        return pl.BlockSpec(a.shape, lambda i: (0, 0))

    weights = (
        params["w1x"], params["w1y"], params["b1"],
        params["w2"], params["b2"],
        params["w3z"], params["w3y"], params["b3"],
        params["w4"], params["b4"],
    )
    args = (x, y, eps) + weights

    in_specs = (
        [batch_spec(INPUT_DIM), batch_spec(NUM_CLASSES), batch_spec(LATENT_DIM)]
        + [resident_spec(w) for w in weights]
    )
    out_specs = (batch_spec(INPUT_DIM), batch_spec(2 * LATENT_DIM))
    out_shape = (
        jax.ShapeDtypeStruct((Bp, INPUT_DIM), jnp.bfloat16),      # recon (bf16 writeback)
        jax.ShapeDtypeStruct((Bp, 2 * LATENT_DIM), jnp.float32),  # mu || logvar
    )

    # Advisory cost estimate so XLA can schedule surrounding ops around us.
    per_sample_madds = (
        INPUT_DIM * HIDDEN_DIM + NUM_CLASSES * HIDDEN_DIM       # fc1
        + HIDDEN_DIM * 2 * LATENT_DIM                            # fc21|fc22
        + LATENT_DIM * HIDDEN_DIM + NUM_CLASSES * HIDDEN_DIM     # fc3
        + HIDDEN_DIM * INPUT_DIM                                 # fc4
    )
    weight_bytes = sum(int(w.size) * w.dtype.itemsize for w in weights)
    io_bytes = (
        int(x.size) * x.dtype.itemsize
        + int(y.size) * y.dtype.itemsize
        + int(eps.size) * eps.dtype.itemsize
        + Bp * INPUT_DIM * 2              # recon out, bf16
        + Bp * 2 * LATENT_DIM * 4         # mu||logvar out, f32
    )
    cost = pl.CostEstimate(
        flops=2 * Bp * per_sample_madds,
        transcendentals=Bp * (LATENT_DIM + INPUT_DIM),  # exp + sigmoid
        bytes_accessed=weight_bytes + io_bytes,
    )

    recon, ml = pl.pallas_call(
        cvae_kernel,
        out_shape=out_shape,
        grid=grid,
        in_specs=in_specs,
        out_specs=out_specs,
        compiler_params=pltpu.CompilerParams(
            dimension_semantics=("parallel",),
            vmem_limit_bytes=32 * 1024 * 1024,  # Bt=512 working set ~10 MiB; fits all gens
        ),
        cost_estimate=cost,
    )(*args)

    if pad:
        recon = recon[:B]
        ml = ml[:B]
    mu = ml[:, :LATENT_DIM]
    logvar = ml[:, LATENT_DIM:]
    return recon, mu, logvar


def init_params(key):
    """Deterministic synthetic parameters (shapes match the PyTorch module)."""
    ks = jax.random.split(key, 10)

    def lin(kw, kb, fan_in, fan_out):
        # PyTorch default Linear init: U(-1/sqrt(fan_in), 1/sqrt(fan_in))
        bound = 1.0 / jnp.sqrt(jnp.float32(fan_in))
        w = jax.random.uniform(kw, (fan_in, fan_out), jnp.float32, -bound, bound)
        b = jax.random.uniform(kb, (1, fan_out), jnp.float32, -bound, bound)
        return w, b

    # fc1: (784 + 10) -> 400, stored split into x-part and y-part
    w1, b1 = lin(ks[0], ks[1], INPUT_DIM + NUM_CLASSES, HIDDEN_DIM)
    w1x, w1y = w1[:INPUT_DIM], w1[INPUT_DIM:]
    # fc21 / fc22: 400 -> 2 each, fused into one (400, 4) weight
    w21, b21 = lin(ks[2], ks[3], HIDDEN_DIM, LATENT_DIM)
    w22, b22 = lin(ks[4], ks[5], HIDDEN_DIM, LATENT_DIM)
    w2 = jnp.concatenate([w21, w22], axis=1)
    b2 = jnp.concatenate([b21, b22], axis=1)
    # fc3: (2 + 10) -> 400, split into z-part and y-part
    w3, b3 = lin(ks[6], ks[7], LATENT_DIM + NUM_CLASSES, HIDDEN_DIM)
    w3z, w3y = w3[:LATENT_DIM], w3[LATENT_DIM:]
    # fc4: 400 -> 784
    w4, b4 = lin(ks[8], ks[9], HIDDEN_DIM, INPUT_DIM)

    bf16 = jnp.bfloat16
    return dict(
        # weights in bf16 (halves HBM traffic, native MXU rate); biases in f32
        w1x=w1x.astype(bf16), w1y=w1y.astype(bf16), b1=b1,
        w2=w2.astype(bf16), b2=b2,
        w3z=w3z.astype(bf16), w3y=w3y.astype(bf16), b3=b3,
        w4=w4.astype(bf16), b4=b4,
    )


def reference_forward(x, y, eps, p):
    """Pure-JAX reference mirroring the PyTorch forward (same bf16 weights/inputs)."""
    xb = x.astype(jnp.bfloat16)
    yb = y.astype(jnp.bfloat16)
    h = jax.nn.relu(
        jnp.dot(xb, p["w1x"], preferred_element_type=jnp.float32)
        + jnp.dot(yb, p["w1y"], preferred_element_type=jnp.float32)
        + p["b1"])
    ml = (jnp.dot(h.astype(jnp.bfloat16), p["w2"],
                  preferred_element_type=jnp.float32) + p["b2"])
    mu, logvar = ml[:, :LATENT_DIM], ml[:, LATENT_DIM:]
    z = mu + eps * jnp.exp(0.5 * logvar)
    h2 = jax.nn.relu(
        jnp.dot(z.astype(jnp.bfloat16), p["w3z"], preferred_element_type=jnp.float32)
        + jnp.dot(yb, p["w3y"], preferred_element_type=jnp.float32)
        + p["b3"])
    recon = jax.nn.sigmoid(
        jnp.dot(h2.astype(jnp.bfloat16), p["w4"],
                preferred_element_type=jnp.float32) + p["b4"])
    return recon, mu, logvar


def _check(B, key, params):
    k_x, k_y, k_eps = jax.random.split(key, 3)
    # x: flattened MNIST-like images in [0, 1]; y: one-hot class condition.
    x = jax.random.uniform(k_x, (B, INPUT_DIM), jnp.float32)
    labels = jax.random.randint(k_y, (B,), 0, NUM_CLASSES)
    y = jax.nn.one_hot(labels, NUM_CLASSES, dtype=jnp.float32)
    # eps corresponds to torch.randn_like(std); passed in for determinism.
    eps = jax.random.normal(k_eps, (B, LATENT_DIM), jnp.float32)

    recon, mu, logvar = jax.block_until_ready(cvae_forward(x, y, eps, params))
    r_ref, mu_ref, lv_ref = reference_forward(x, y, eps, params)

    assert recon.shape == (B, INPUT_DIM) and recon.dtype == jnp.bfloat16
    assert mu.shape == (B, LATENT_DIM) and logvar.shape == (B, LATENT_DIM)
    assert jnp.allclose(recon.astype(jnp.float32), r_ref, atol=1e-2, rtol=1e-2)
    assert jnp.allclose(mu, mu_ref, atol=5e-3, rtol=5e-3)
    assert jnp.allclose(logvar, lv_ref, atol=5e-3, rtol=5e-3)


if __name__ == "__main__":
    key = jax.random.PRNGKey(0)
    k_param, k_small, k_big = jax.random.split(key, 3)
    params = init_params(k_param)

    # Small batch: single grid step (block == full batch).
    _check(8, k_small, params)
    # Larger batch: exercises the padded, >=2-step (dual-TensorCore) grid path.
    _check(40, k_big, params)

    print("KERNEL_OK")
</pallas_src>

<mosaic_0001>
module attributes {stable_mosaic.version = 11 : i64} {
  func.func @cvae_kernel(%arg0: i32, %arg1: memref<8x784xbf16, #tpu.memory_space<vmem>>, %arg2: memref<8x10xbf16, #tpu.memory_space<vmem>>, %arg3: memref<8x2xf32, #tpu.memory_space<vmem>>, %arg4: memref<784x400xbf16, #tpu.memory_space<vmem>>, %arg5: memref<10x400xbf16, #tpu.memory_space<vmem>>, %arg6: memref<1x400xf32, #tpu.memory_space<vmem>>, %arg7: memref<400x4xbf16, #tpu.memory_space<vmem>>, %arg8: memref<1x4xf32, #tpu.memory_space<vmem>>, %arg9: memref<2x400xbf16, #tpu.memory_space<vmem>>, %arg10: memref<10x400xbf16, #tpu.memory_space<vmem>>, %arg11: memref<1x400xf32, #tpu.memory_space<vmem>>, %arg12: memref<400x784xbf16, #tpu.memory_space<vmem>>, %arg13: memref<1x784xf32, #tpu.memory_space<vmem>>, %arg14: memref<8x784xbf16, #tpu.memory_space<vmem>>, %arg15: memref<8x4xf32, #tpu.memory_space<vmem>>) attributes {dimension_semantics = [#tpu.dimension_semantics<parallel>], iteration_bounds = array<i64: 1>, scalar_prefetch = 0 : i64, scratch_operands = 0 : i64, tpu.core_type = #tpu.core_type<tc>, window_params = [{transform_indices = @transform_0, window_bounds = array<i64: 8, 784>}, {transform_indices = @transform_1, window_bounds = array<i64: 8, 10>}, {transform_indices = @transform_2, window_bounds = array<i64: 8, 2>}, {pipeline_mode = #tpu.pipeline_mode<synchronous>, transform_indices = @transform_3, window_bounds = array<i64: 784, 400>}, {pipeline_mode = #tpu.pipeline_mode<synchronous>, transform_indices = @transform_4, window_bounds = array<i64: 10, 400>}, {pipeline_mode = #tpu.pipeline_mode<synchronous>, transform_indices = @transform_5, window_bounds = array<i64: 1, 400>}, {pipeline_mode = #tpu.pipeline_mode<synchronous>, transform_indices = @transform_6, window_bounds = array<i64: 400, 4>}, {pipeline_mode = #tpu.pipeline_mode<synchronous>, transform_indices = @transform_7, window_bounds = array<i64: 1, 4>}, {pipeline_mode = #tpu.pipeline_mode<synchronous>, transform_indices = @transform_8, window_bounds = array<i64: 2, 400>}, {pipeline_mode = #tpu.pipeline_mode<synchronous>, transform_indices = @transform_9, window_bounds = array<i64: 10, 400>}, {pipeline_mode = #tpu.pipeline_mode<synchronous>, transform_indices = @transform_10, window_bounds = array<i64: 1, 400>}, {pipeline_mode = #tpu.pipeline_mode<synchronous>, transform_indices = @transform_11, window_bounds = array<i64: 400, 784>}, {pipeline_mode = #tpu.pipeline_mode<synchronous>, transform_indices = @transform_12, window_bounds = array<i64: 1, 784>}, {transform_indices = @transform_13, window_bounds = array<i64: 8, 784>}, {transform_indices = @transform_14, window_bounds = array<i64: 8, 4>}]} {
    %c0 = arith.constant 0 : index
    %c0_0 = arith.constant 0 : index
    %0 = vector.load %arg1[%c0, %c0_0] : memref<8x784xbf16, #tpu.memory_space<vmem>>, vector<8x784xbf16>
    %c0_1 = arith.constant 0 : index
    %c0_2 = arith.constant 0 : index
    %1 = vector.load %arg2[%c0_1, %c0_2] : memref<8x10xbf16, #tpu.memory_space<vmem>>, vector<8x10xbf16>
    %c0_3 = arith.constant 0 : index
    %c0_4 = arith.constant 0 : index
    %2 = vector.load %arg3[%c0_3, %c0_4] : memref<8x2xf32, #tpu.memory_space<vmem>>, vector<8x2xf32>
    %c0_5 = arith.constant 0 : index
    %c0_6 = arith.constant 0 : index
    %3 = vector.load %arg4[%c0_5, %c0_6] : memref<784x400xbf16, #tpu.memory_space<vmem>>, vector<784x400xbf16>
    %cst = arith.constant dense<0.000000e+00> : vector<8x400xf32>
    %4 = tpu.matmul %0, %3, %cst {dimension_numbers = #tpu.dot_dimension_numbers<[1], [0], [0], [1], [0, 0, 1, 1], [], []>} : vector<8x784xbf16>, vector<784x400xbf16>, vector<8x400xf32> -> vector<8x400xf32>
    %c0_7 = arith.constant 0 : index
    %c0_8 = arith.constant 0 : index
    %5 = vector.load %arg5[%c0_7, %c0_8] : memref<10x400xbf16, #tpu.memory_space<vmem>>, vector<10x400xbf16>
    %cst_9 = arith.constant dense<0.000000e+00> : vector<8x400xf32>
    %6 = tpu.matmul %1, %5, %cst_9 {dimension_numbers = #tpu.dot_dimension_numbers<[1], [0], [0], [1], [0, 0, 1, 1], [], []>} : vector<8x10xbf16>, vector<10x400xbf16>, vector<8x400xf32> -> vector<8x400xf32>
    %7 = arith.addf %4, %6 : vector<8x400xf32>
    %c0_10 = arith.constant 0 : index
    %c0_11 = arith.constant 0 : index
    %8 = vector.load %arg6[%c0_10, %c0_11] : memref<1x400xf32, #tpu.memory_space<vmem>>, vector<1x400xf32>
    %9 = vector.broadcast %8 : vector<1x400xf32> to vector<8x400xf32>
    %10 = arith.addf %7, %9 : vector<8x400xf32>
    %cst_12 = arith.constant 0.000000e+00 : f32
    %11 = vector.broadcast %cst_12 : f32 to vector<8x400xf32>
    %12 = arith.maximumf %10, %11 : vector<8x400xf32>
    %13 = arith.truncf %12 : vector<8x400xf32> to vector<8x400xbf16>
    %c0_13 = arith.constant 0 : index
    %c0_14 = arith.constant 0 : index
    %14 = vector.load %arg7[%c0_13, %c0_14] : memref<400x4xbf16, #tpu.memory_space<vmem>>, vector<400x4xbf16>
    %cst_15 = arith.constant dense<0.000000e+00> : vector<8x4xf32>
    %15 = tpu.matmul %13, %14, %cst_15 {dimension_numbers = #tpu.dot_dimension_numbers<[1], [0], [0], [1], [0, 0, 1, 1], [], []>} : vector<8x400xbf16>, vector<400x4xbf16>, vector<8x4xf32> -> vector<8x4xf32>
    %c0_16 = arith.constant 0 : index
    %c0_17 = arith.constant 0 : index
    %16 = vector.load %arg8[%c0_16, %c0_17] : memref<1x4xf32, #tpu.memory_space<vmem>>, vector<1x4xf32>
    %17 = vector.broadcast %16 : vector<1x4xf32> to vector<8x4xf32>
    %18 = arith.addf %15, %17 : vector<8x4xf32>
    %19 = vector.extract_strided_slice %18 {offsets = [0, 0], sizes = [8, 2], strides = [1, 1]} : vector<8x4xf32> to vector<8x2xf32>
    %20 = vector.extract_strided_slice %18 {offsets = [0, 2], sizes = [8, 2], strides = [1, 1]} : vector<8x4xf32> to vector<8x2xf32>
    %cst_18 = arith.constant 5.000000e-01 : f32
    %21 = vector.broadcast %cst_18 : f32 to vector<8x2xf32>
    %22 = arith.mulf %21, %20 : vector<8x2xf32>
    %23 = math.exp %22 : vector<8x2xf32>
    %24 = arith.mulf %2, %23 : vector<8x2xf32>
    %25 = arith.addf %19, %24 : vector<8x2xf32>
    %26 = arith.truncf %25 : vector<8x2xf32> to vector<8x2xbf16>
    %c0_19 = arith.constant 0 : index
    %c0_20 = arith.constant 0 : index
    %27 = vector.load %arg9[%c0_19, %c0_20] : memref<2x400xbf16, #tpu.memory_space<vmem>>, vector<2x400xbf16>
    %cst_21 = arith.constant dense<0.000000e+00> : vector<8x400xf32>
    %28 = tpu.matmul %26, %27, %cst_21 {dimension_numbers = #tpu.dot_dimension_numbers<[1], [0], [0], [1], [0, 0, 1, 1], [], []>} : vector<8x2xbf16>, vector<2x400xbf16>, vector<8x400xf32> -> vector<8x400xf32>
    %c0_22 = arith.constant 0 : index
    %c0_23 = arith.constant 0 : index
    %29 = vector.load %arg10[%c0_22, %c0_23] : memref<10x400xbf16, #tpu.memory_space<vmem>>, vector<10x400xbf16>
    %cst_24 = arith.constant dense<0.000000e+00> : vector<8x400xf32>
    %30 = tpu.matmul %1, %29, %cst_24 {dimension_numbers = #tpu.dot_dimension_numbers<[1], [0], [0], [1], [0, 0, 1, 1], [], []>} : vector<8x10xbf16>, vector<10x400xbf16>, vector<8x400xf32> -> vector<8x400xf32>
    %31 = arith.addf %28, %30 : vector<8x400xf32>
    %c0_25 = arith.constant 0 : index
    %c0_26 = arith.constant 0 : index
    %32 = vector.load %arg11[%c0_25, %c0_26] : memref<1x400xf32, #tpu.memory_space<vmem>>, vector<1x400xf32>
    %33 = vector.broadcast %32 : vector<1x400xf32> to vector<8x400xf32>
    %34 = arith.addf %31, %33 : vector<8x400xf32>
    %cst_27 = arith.constant 0.000000e+00 : f32
    %35 = vector.broadcast %cst_27 : f32 to vector<8x400xf32>
    %36 = arith.maximumf %34, %35 : vector<8x400xf32>
    %37 = arith.truncf %36 : vector<8x400xf32> to vector<8x400xbf16>
    %c0_28 = arith.constant 0 : index
    %c0_29 = arith.constant 0 : index
    %38 = vector.load %arg12[%c0_28, %c0_29] : memref<400x784xbf16, #tpu.memory_space<vmem>>, vector<400x784xbf16>
    %cst_30 = arith.constant dense<0.000000e+00> : vector<8x784xf32>
    %39 = tpu.matmul %37, %38, %cst_30 {dimension_numbers = #tpu.dot_dimension_numbers<[1], [0], [0], [1], [0, 0, 1, 1], [], []>} : vector<8x400xbf16>, vector<400x784xbf16>, vector<8x784xf32> -> vector<8x784xf32>
    %c0_31 = arith.constant 0 : index
    %c0_32 = arith.constant 0 : index
    %40 = vector.load %arg13[%c0_31, %c0_32] : memref<1x784xf32, #tpu.memory_space<vmem>>, vector<1x784xf32>
    %41 = vector.broadcast %40 : vector<1x784xf32> to vector<8x784xf32>
    %42 = arith.addf %39, %41 : vector<8x784xf32>
    %43 = arith.negf %42 : vector<8x784xf32>
    %44 = math.exp %43 : vector<8x784xf32>
    %cst_33 = arith.constant 1.000000e+00 : f32
    %45 = vector.broadcast %cst_33 : f32 to vector<8x784xf32>
    %46 = arith.addf %45, %44 : vector<8x784xf32>
    %47 = arith.divf %45, %46 : vector<8x784xf32>
    %48 = arith.truncf %47 : vector<8x784xf32> to vector<8x784xbf16>
    %c0_34 = arith.constant 0 : index
    %c0_35 = arith.constant 0 : index
    %49 = vector.load %arg14[%c0_34, %c0_35] : memref<8x784xbf16, #tpu.memory_space<vmem>>, vector<8x784xbf16>
    tpu.vector_store %arg14[%c0_34, %c0_35], %48 {strides = array<i32>} : memref<8x784xbf16, #tpu.memory_space<vmem>>, vector<8x784xbf16>,
    %c0_36 = arith.constant 0 : index
    %c0_37 = arith.constant 0 : index
    %50 = vector.load %arg15[%c0_36, %c0_37] : memref<8x4xf32, #tpu.memory_space<vmem>>, vector<8x4xf32>
    tpu.vector_store %arg15[%c0_36, %c0_37], %18 {strides = array<i32>} : memref<8x4xf32, #tpu.memory_space<vmem>>, vector<8x4xf32>,
    return
  }
  func.func @transform_0(%arg0: i32) -> (i32, i32) {
    %c0_i32 = arith.constant 0 : i32
    %c0_i32_0 = arith.constant 0 : i32
    return %arg0, %c0_i32 : i32, i32
  }
  func.func @transform_1(%arg0: i32) -> (i32, i32) {
    %c0_i32 = arith.constant 0 : i32
    %c0_i32_0 = arith.constant 0 : i32
    return %arg0, %c0_i32 : i32, i32
  }
  func.func @transform_2(%arg0: i32) -> (i32, i32) {
    %c0_i32 = arith.constant 0 : i32
    %c0_i32_0 = arith.constant 0 : i32
    return %arg0, %c0_i32 : i32, i32
  }
  func.func @transform_3(%arg0: i32) -> (i32, i32) {
    %c0_i32 = arith.constant 0 : i32
    %c0_i32_0 = arith.constant 0 : i32
    %c0_i32_1 = arith.constant 0 : i32
    return %c0_i32, %c0_i32_0 : i32, i32
  }
  func.func @transform_4(%arg0: i32) -> (i32, i32) {
    %c0_i32 = arith.constant 0 : i32
    %c0_i32_0 = arith.constant 0 : i32
    %c0_i32_1 = arith.constant 0 : i32
    return %c0_i32, %c0_i32_0 : i32, i32
  }
  func.func @transform_5(%arg0: i32) -> (i32, i32) {
    %c0_i32 = arith.constant 0 : i32
    %c0_i32_0 = arith.constant 0 : i32
    %c0_i32_1 = arith.constant 0 : i32
    return %c0_i32, %c0_i32_0 : i32, i32
  }
  func.func @transform_6(%arg0: i32) -> (i32, i32) {
    %c0_i32 = arith.constant 0 : i32
    %c0_i32_0 = arith.constant 0 : i32
    %c0_i32_1 = arith.constant 0 : i32
    return %c0_i32, %c0_i32_0 : i32, i32
  }
  func.func @transform_7(%arg0: i32) -> (i32, i32) {
    %c0_i32 = arith.constant 0 : i32
    %c0_i32_0 = arith.constant 0 : i32
    %c0_i32_1 = arith.constant 0 : i32
    return %c0_i32, %c0_i32_0 : i32, i32
  }
  func.func @transform_8(%arg0: i32) -> (i32, i32) {
    %c0_i32 = arith.constant 0 : i32
    %c0_i32_0 = arith.constant 0 : i32
    %c0_i32_1 = arith.constant 0 : i32
    return %c0_i32, %c0_i32_0 : i32, i32
  }
  func.func @transform_9(%arg0: i32) -> (i32, i32) {
    %c0_i32 = arith.constant 0 : i32
    %c0_i32_0 = arith.constant 0 : i32
    %c0_i32_1 = arith.constant 0 : i32
    return %c0_i32, %c0_i32_0 : i32, i32
  }
  func.func @transform_10(%arg0: i32) -> (i32, i32) {
    %c0_i32 = arith.constant 0 : i32
    %c0_i32_0 = arith.constant 0 : i32
    %c0_i32_1 = arith.constant 0 : i32
    return %c0_i32, %c0_i32_0 : i32, i32
  }
  func.func @transform_11(%arg0: i32) -> (i32, i32) {
    %c0_i32 = arith.constant 0 : i32
    %c0_i32_0 = arith.constant 0 : i32
    %c0_i32_1 = arith.constant 0 : i32
    return %c0_i32, %c0_i32_0 : i32, i32
  }
  func.func @transform_12(%arg0: i32) -> (i32, i32) {
    %c0_i32 = arith.constant 0 : i32
    %c0_i32_0 = arith.constant 0 : i32
    %c0_i32_1 = arith.constant 0 : i32
    return %c0_i32, %c0_i32_0 : i32, i32
  }
  func.func @transform_13(%arg0: i32) -> (i32, i32) {
    %c0_i32 = arith.constant 0 : i32
    %c0_i32_0 = arith.constant 0 : i32
    return %arg0, %c0_i32 : i32, i32
  }
  func.func @transform_14(%arg0: i32) -> (i32, i32) {
    %c0_i32 = arith.constant 0 : i32
    %c0_i32_0 = arith.constant 0 : i32
    return %arg0, %c0_i32 : i32, i32
  }
}

</mosaic_0001>

<llo_original>
// kernel: tpu_custom_call.1
$region0: #{tpu_custom_call.1}
  #allocation0 [shape = 'u32[]', space=smem, size = 0x4, offset = 0x4, fixed_abs, tag = 'smem constant byte address 0x4 - core index']
  #allocation1 [shape = 'u32[72,128]{1,0:T(1,128)}', space=vmem, size = 0x9000, scoped, tag = 'internal scratch']
  %s0 = inlined_call_operand.vmem [shape: bf16[8,784], index: 0, kind: input, shape index: {}]
  %s1 = inlined_call_operand.vmem [shape: bf16[8,10], index: 1, kind: input, shape index: {}]
  %s2 = inlined_call_operand.vmem [shape: f32[8,2], index: 2, kind: input, shape index: {}]
  %s3 = inlined_call_operand.vmem [shape: bf16[784,400], index: 3, kind: input, shape index: {}]
  %s4 = inlined_call_operand.vmem [shape: bf16[10,400], index: 4, kind: input, shape index: {}]
  %s5 = inlined_call_operand.vmem [shape: f32[1,400], index: 5, kind: input, shape index: {}]
  %s6 = inlined_call_operand.vmem [shape: bf16[400,4], index: 6, kind: input, shape index: {}]
  %s7 = inlined_call_operand.vmem [shape: f32[1,4], index: 7, kind: input, shape index: {}]
  %s8 = inlined_call_operand.vmem [shape: bf16[2,400], index: 8, kind: input, shape index: {}]
  %s9 = inlined_call_operand.vmem [shape: bf16[10,400], index: 9, kind: input, shape index: {}]
  %s10 = inlined_call_operand.vmem [shape: f32[1,400], index: 10, kind: input, shape index: {}]
  %s11 = inlined_call_operand.vmem [shape: bf16[400,784], index: 11, kind: input, shape index: {}]
  %s12 = inlined_call_operand.vmem [shape: f32[1,784], index: 12, kind: input, shape index: {}]
  %s13 = inlined_call_operand.hbm [shape: bf16[8,784], index: 13, kind: output, shape index: {0}]
  %s14 = inlined_call_operand.vmem [shape: f32[8,4], index: 14, kind: output, shape index: {1}]
  %15 = xla_tuple %s13, %s14
  %s16 = sld [smem:[#allocation0]]
  $region70: #{tpu_custom_call.1} parent=0
    _
  %s18 = ssub.s32 1, %s16
  %s19 = scalar_select 0, %s18, %s16
  $region1: #{tpu_custom_call.1} parent=0
    #allocation2 [shape = 'u8[14336]{0}', space=vmem, size = 0x3800, scoped, tag = 'output window, operand 0, single buffered']
    #allocation3 [shape = 's32[1]{0}', space=sflag, size = 0x4, scoped, tag = 'scoped memory for tpu_custom_call.1']
    %20 = vsyncpa [#allocation3], 0
    // Predicated region
    $region2: #{tpu_custom_call.1} parent=1 // pred_check
      _
    $region3: #{tpu_custom_call.1} parent=1 // pred_check_branch
      %22 = sbr.rel (0) target = $region5
    $region4: #{tpu_custom_call.1} parent=1 // pred_region
      _
    $region5: #{tpu_custom_call.1} parent=1 // pred_fallthru
      _
    // Predicated region
    $region6: #{tpu_custom_call.1} parent=1 // pred_check
      _
    $region7: #{tpu_custom_call.1} parent=1 // pred_check_branch
      %24 = sbr.rel (0) target = $region9
    $region8: #{tpu_custom_call.1} parent=1 // pred_region
      _
    $region9: #{tpu_custom_call.1} parent=1 // pred_fallthru
      _
    // Predicated region
    $region10: #{tpu_custom_call.1} parent=1 // pred_check
      _
    $region11: #{tpu_custom_call.1} parent=1 // pred_check_branch
      %26 = sbr.rel (0) target = $region13
    $region12: #{tpu_custom_call.1} parent=1 // pred_region
      _
    $region13: #{tpu_custom_call.1} parent=1 // pred_fallthru
      _
    // Predicated region
    $region14: #{tpu_custom_call.1} parent=1 // pred_check
      _
    $region15: #{tpu_custom_call.1} parent=1 // pred_check_branch
      %28 = sbr.rel (0) target = $region17
    $region16: #{tpu_custom_call.1} parent=1 // pred_region
      _
    $region17: #{tpu_custom_call.1} parent=1 // pred_fallthru
      _
    // Predicated region
    $region18: #{tpu_custom_call.1} parent=1 // pred_check
      _
    $region19: #{tpu_custom_call.1} parent=1 // pred_check_branch
      %30 = sbr.rel (0) target = $region21
    $region20: #{tpu_custom_call.1} parent=1 // pred_region
      _
    $region21: #{tpu_custom_call.1} parent=1 // pred_fallthru
      _
    // Predicated region
    $region22: #{tpu_custom_call.1} parent=1 // pred_check
      _
    $region23: #{tpu_custom_call.1} parent=1 // pred_check_branch
      %32 = sbr.rel (0) target = $region25
    $region24: #{tpu_custom_call.1} parent=1 // pred_region
      _
    $region25: #{tpu_custom_call.1} parent=1 // pred_fallthru
      _
    // Predicated region
    $region26: #{tpu_custom_call.1} parent=1 // pred_check
      _
    $region27: #{tpu_custom_call.1} parent=1 // pred_check_branch
      %34 = sbr.rel (0) target = $region29
    $region28: #{tpu_custom_call.1} parent=1 // pred_region
      _
    $region29: #{tpu_custom_call.1} parent=1 // pred_fallthru
      _
    // Predicated region
    $region30: #{tpu_custom_call.1} parent=1 // pred_check
      _
    $region31: #{tpu_custom_call.1} parent=1 // pred_check_branch
      %36 = sbr.rel (0) target = $region33
    $region32: #{tpu_custom_call.1} parent=1 // pred_region
      _
    $region33: #{tpu_custom_call.1} parent=1 // pred_fallthru
      _
    // Predicated region
    $region34: #{tpu_custom_call.1} parent=1 // pred_check
      _
    $region35: #{tpu_custom_call.1} parent=1 // pred_check_branch
      %38 = sbr.rel (0) target = $region37
    $region36: #{tpu_custom_call.1} parent=1 // pred_region
      _
    $region37: #{tpu_custom_call.1} parent=1 // pred_fallthru
      _
    // Predicated region
    $region38: #{tpu_custom_call.1} parent=1 // pred_check
      _
    $region39: #{tpu_custom_call.1} parent=1 // pred_check_branch
      %40 = sbr.rel (0) target = $region41
    $region40: #{tpu_custom_call.1} parent=1 // pred_region
      _
    $region41: #{tpu_custom_call.1} parent=1 // pred_fallthru
      _
    // Predicated region
    $region42: #{tpu_custom_call.1} parent=1 // pred_check
      _
    $region43: #{tpu_custom_call.1} parent=1 // pred_check_branch
      %42 = sbr.rel (0) target = $region45
    $region44: #{tpu_custom_call.1} parent=1 // pred_region
      _
    $region45: #{tpu_custom_call.1} parent=1 // pred_fallthru
      _
    // Predicated region
    $region46: #{tpu_custom_call.1} parent=1 // pred_check
      _
    $region47: #{tpu_custom_call.1} parent=1 // pred_check_branch
      %44 = sbr.rel (0) target = $region49
    $region48: #{tpu_custom_call.1} parent=1 // pred_region
      _
    $region49: #{tpu_custom_call.1} parent=1 // pred_fallthru
      _
    // Predicated region
    $region50: #{tpu_custom_call.1} parent=1 // pred_check
      _
    $region51: #{tpu_custom_call.1} parent=1 // pred_check_branch
      %46 = sbr.rel (0) target = $region53
    $region52: #{tpu_custom_call.1} parent=1 // pred_region
      _
    $region53: #{tpu_custom_call.1} parent=1 // pred_fallthru
      _
    %v48 = vld [vmem:[%s0] sm:$0xff]
    %v49 = vld [vmem:[%s0 + $0x8] sm:$0xff]
    %v50 = vld [vmem:[%s0 + $0x10] sm:$0xff]
    %v51 = vld [vmem:[%s0 + $0x18] sm:$0xf]
    %v52 = vld [vmem:[%s1] sm:$0xf]
    %v53 = vld [vmem:[%s2] sm:$0xff]
    %v54 = vld [vmem:[%s3] sm:$0xff]
    %v55 = vld [vmem:[%s3 + $0x8] sm:$0xff]
    %v56 = vld [vmem:[%s3 + $0x10] sm:$0xff]
    %v57 = vld [vmem:[%s3 + $0x18] sm:$0xff]
    %v58 = vld [vmem:[%s3 + $0x20] sm:$0xff]
    %v59 = vld [vmem:[%s3 + $0x28] sm:$0xff]
    %v60 = vld [vmem:[%s3 + $0x30] sm:$0xff]
    %v61 = vld [vmem:[%s3 + $0x38] sm:$0xff]
    %v62 = vld [vmem:[%s3 + $0x40] sm:$0xff]
    %v63 = vld [vmem:[%s3 + $0x48] sm:$0xff]
    %v64 = vld [vmem:[%s3 + $0x50] sm:$0xff]
    %v65 = vld [vmem:[%s3 + $0x58] sm:$0xff]
    %v66 = vld [vmem:[%s3 + $0x60] sm:$0xff]
    %v67 = vld [vmem:[%s3 + $0x68] sm:$0xff]
    %v68 = vld [vmem:[%s3 + $0x70] sm:$0xff]
    %v69 = vld [vmem:[%s3 + $0x78] sm:$0xff]
    %v70 = vld [vmem:[%s3 + $0x80] sm:$0xff]
    %v71 = vld [vmem:[%s3 + $0x88] sm:$0xff]
    %v72 = vld [vmem:[%s3 + $0x90] sm:$0xff]
    %v73 = vld [vmem:[%s3 + $0x98] sm:$0xff]
    %v74 = vld [vmem:[%s3 + $0xa0] sm:$0xff]
    %v75 = vld [vmem:[%s3 + $0xa8] sm:$0xff]
    %v76 = vld [vmem:[%s3 + $0xb0] sm:$0xff]
    %v77 = vld [vmem:[%s3 + $0xb8] sm:$0xff]
    %v78 = vld [vmem:[%s3 + $0xc0] sm:$0xff]
    %v79 = vld [vmem:[%s3 + $0xc8] sm:$0xff]
    %v80 = vld [vmem:[%s3 + $0xd0] sm:$0xff]
    %v81 = vld [vmem:[%s3 + $0xd8] sm:$0xff]
    %v82 = vld [vmem:[%s3 + $0xe0] sm:$0xff]
    %v83 = vld [vmem:[%s3 + $0xe8] sm:$0xff]
    %v84 = vld [vmem:[%s3 + $0xf0] sm:$0xff]
    %v85 = vld [vmem:[%s3 + $0xf8] sm:$0xff]
    %v86 = vld [vmem:[%s3 + $0x100] sm:$0xff]
    %v87 = vld [vmem:[%s3 + $0x108] sm:$0xff]
    %v88 = vld [vmem:[%s3 + $0x110] sm:$0xff]
    %v89 = vld [vmem:[%s3 + $0x118] sm:$0xff]
    %v90 = vld [vmem:[%s3 + $0x120] sm:$0xff]
    %v91 = vld [vmem:[%s3 + $0x128] sm:$0xff]
    %v92 = vld [vmem:[%s3 + $0x130] sm:$0xff]
    %v93 = vld [vmem:[%s3 + $0x138] sm:$0xff]
    %v94 = vld [vmem:[%s3 + $0x140] sm:$0xff]
    %v95 = vld [vmem:[%s3 + $0x148] sm:$0xff]
    %v96 = vld [vmem:[%s3 + $0x150] sm:$0xff]
    %v97 = vld [vmem:[%s3 + $0x158] sm:$0xff]
    %v98 = vld [vmem:[%s3 + $0x160] sm:$0xff]
    %v99 = vld [vmem:[%s3 + $0x168] sm:$0xff]
    %v100 = vld [vmem:[%s3 + $0x170] sm:$0xff]
    %v101 = vld [vmem:[%s3 + $0x178] sm:$0xff]
    %v102 = vld [vmem:[%s3 + $0x180] sm:$0xff]
    %v103 = vld [vmem:[%s3 + $0x188] sm:$0xff]
    %v104 = vld [vmem:[%s3 + $0x190] sm:$0xff]
    %v105 = vld [vmem:[%s3 + $0x198] sm:$0xff]
    %v106 = vld [vmem:[%s3 + $0x1a0] sm:$0xff]
    %v107 = vld [vmem:[%s3 + $0x1a8] sm:$0xff]
    %v108 = vld [vmem:[%s3 + $0x1b0] sm:$0xff]
    %v109 = vld [vmem:[%s3 + $0x1b8] sm:$0xff]
    %v110 = vld [vmem:[%s3 + $0x1c0] sm:$0xff]
    %v111 = vld [vmem:[%s3 + $0x1c8] sm:$0xff]
    %v112 = vld [vmem:[%s3 + $0x1d0] sm:$0xff]
    %v113 = vld [vmem:[%s3 + $0x1d8] sm:$0xff]
    %v114 = vld [vmem:[%s3 + $0x1e0] sm:$0xff]
    %v115 = vld [vmem:[%s3 + $0x1e8] sm:$0xff]
    %v116 = vld [vmem:[%s3 + $0x1f0] sm:$0xff]
    %v117 = vld [vmem:[%s3 + $0x1f8] sm:$0xff]
    %v118 = vld [vmem:[%s3 + $0x200] sm:$0xff]
    %v119 = vld [vmem:[%s3 + $0x208] sm:$0xff]
    %v120 = vld [vmem:[%s3 + $0x210] sm:$0xff]
    %v121 = vld [vmem:[%s3 + $0x218] sm:$0xff]
    %v122 = vld [vmem:[%s3 + $0x220] sm:$0xff]
    %v123 = vld [vmem:[%s3 + $0x228] sm:$0xff]
    %v124 = vld [vmem:[%s3 + $0x230] sm:$0xff]
    %v125 = vld [vmem:[%s3 + $0x238] sm:$0xff]
    %v126 = vld [vmem:[%s3 + $0x240] sm:$0xff]
    %v127 = vld [vmem:[%s3 + $0x248] sm:$0xff]
    %v128 = vld [vmem:[%s3 + $0x250] sm:$0xff]
    %v129 = vld [vmem:[%s3 + $0x258] sm:$0xff]
    %v130 = vld [vmem:[%s3 + $0x260] sm:$0xff]
    %v131 = vld [vmem:[%s3 + $0x268] sm:$0xff]
    %v132 = vld [vmem:[%s3 + $0x270] sm:$0xff]
    %v133 = vld [vmem:[%s3 + $0x278] sm:$0xff]
    %v134 = vld [vmem:[%s3 + $0x280] sm:$0xff]
    %v135 = vld [vmem:[%s3 + $0x288] sm:$0xff]
    %v136 = vld [vmem:[%s3 + $0x290] sm:$0xff]
    %v137 = vld [vmem:[%s3 + $0x298] sm:$0xff]
    %v138 = vld [vmem:[%s3 + $0x2a0] sm:$0xff]
    %v139 = vld [vmem:[%s3 + $0x2a8] sm:$0xff]
    %v140 = vld [vmem:[%s3 + $0x2b0] sm:$0xff]
    %v141 = vld [vmem:[%s3 + $0x2b8] sm:$0xff]
    %v142 = vld [vmem:[%s3 + $0x2c0] sm:$0xff]
    %v143 = vld [vmem:[%s3 + $0x2c8] sm:$0xff]
    %v144 = vld [vmem:[%s3 + $0x2d0] sm:$0xff]
    %v145 = vld [vmem:[%s3 + $0x2d8] sm:$0xff]
    %v146 = vld [vmem:[%s3 + $0x2e0] sm:$0xff]
    %v147 = vld [vmem:[%s3 + $0x2e8] sm:$0xff]
    %v148 = vld [vmem:[%s3 + $0x2f0] sm:$0xff]
    %v149 = vld [vmem:[%s3 + $0x2f8] sm:$0xff]
    %v150 = vld [vmem:[%s3 + $0x300] sm:$0xff]
    %v151 = vld [vmem:[%s3 + $0x308] sm:$0xff]
    %v152 = vld [vmem:[%s3 + $0x310] sm:$0xff]
    %v153 = vld [vmem:[%s3 + $0x318] sm:$0xff]
    %v154 = vld [vmem:[%s3 + $0x320] sm:$0xff]
    %v155 = vld [vmem:[%s3 + $0x328] sm:$0xff]
    %v156 = vld [vmem:[%s3 + $0x330] sm:$0xff]
    %v157 = vld [vmem:[%s3 + $0x338] sm:$0xff]
    %v158 = vld [vmem:[%s3 + $0x340] sm:$0xff]
    %v159 = vld [vmem:[%s3 + $0x348] sm:$0xff]
    %v160 = vld [vmem:[%s3 + $0x350] sm:$0xff]
    %v161 = vld [vmem:[%s3 + $0x358] sm:$0xff]
    %v162 = vld [vmem:[%s3 + $0x360] sm:$0xff]
    %v163 = vld [vmem:[%s3 + $0x368] sm:$0xff]
    %v164 = vld [vmem:[%s3 + $0x370] sm:$0xff]
    %v165 = vld [vmem:[%s3 + $0x378] sm:$0xff]
    %v166 = vld [vmem:[%s3 + $0x380] sm:$0xff]
    %v167 = vld [vmem:[%s3 + $0x388] sm:$0xff]
    %v168 = vld [vmem:[%s3 + $0x390] sm:$0xff]
    %v169 = vld [vmem:[%s3 + $0x398] sm:$0xff]
    %v170 = vld [vmem:[%s3 + $0x3a0] sm:$0xff]
    %v171 = vld [vmem:[%s3 + $0x3a8] sm:$0xff]
    %v172 = vld [vmem:[%s3 + $0x3b0] sm:$0xff]
    %v173 = vld [vmem:[%s3 + $0x3b8] sm:$0xff]
    %v174 = vld [vmem:[%s3 + $0x3c0] sm:$0xff]
    %v175 = vld [vmem:[%s3 + $0x3c8] sm:$0xff]
    %v176 = vld [vmem:[%s3 + $0x3d0] sm:$0xff]
    %v177 = vld [vmem:[%s3 + $0x3d8] sm:$0xff]
    %v178 = vld [vmem:[%s3 + $0x3e0] sm:$0xff]
    %v179 = vld [vmem:[%s3 + $0x3e8] sm:$0xff]
    %v180 = vld [vmem:[%s3 + $0x3f0] sm:$0xff]
    %v181 = vld [vmem:[%s3 + $0x3f8] sm:$0xff]
    %v182 = vld [vmem:[%s3 + $0x400] sm:$0xff]
    %v183 = vld [vmem:[%s3 + $0x408] sm:$0xff]
    %v184 = vld [vmem:[%s3 + $0x410] sm:$0xff]
    %v185 = vld [vmem:[%s3 + $0x418] sm:$0xff]
    %v186 = vld [vmem:[%s3 + $0x420] sm:$0xff]
    %v187 = vld [vmem:[%s3 + $0x428] sm:$0xff]
    %v188 = vld [vmem:[%s3 + $0x430] sm:$0xff]
    %v189 = vld [vmem:[%s3 + $0x438] sm:$0xff]
    %v190 = vld [vmem:[%s3 + $0x440] sm:$0xff]
    %v191 = vld [vmem:[%s3 + $0x448] sm:$0xff]
    %v192 = vld [vmem:[%s3 + $0x450] sm:$0xff]
    %v193 = vld [vmem:[%s3 + $0x458] sm:$0xff]
    %v194 = vld [vmem:[%s3 + $0x460] sm:$0xff]
    %v195 = vld [vmem:[%s3 + $0x468] sm:$0xff]
    %v196 = vld [vmem:[%s3 + $0x470] sm:$0xff]
    %v197 = vld [vmem:[%s3 + $0x478] sm:$0xff]
    %v198 = vld [vmem:[%s3 + $0x480] sm:$0xff]
    %v199 = vld [vmem:[%s3 + $0x488] sm:$0xff]
    %v200 = vld [vmem:[%s3 + $0x490] sm:$0xff]
    %v201 = vld [vmem:[%s3 + $0x498] sm:$0xff]
    %v202 = vld [vmem:[%s3 + $0x4a0] sm:$0xff]
    %v203 = vld [vmem:[%s3 + $0x4a8] sm:$0xff]
    %v204 = vld [vmem:[%s3 + $0x4b0] sm:$0xff]
    %v205 = vld [vmem:[%s3 + $0x4b8] sm:$0xff]
    %v206 = vld [vmem:[%s3 + $0x4c0] sm:$0xff]
    %v207 = vld [vmem:[%s3 + $0x4c8] sm:$0xff]
    %v208 = vld [vmem:[%s3 + $0x4d0] sm:$0xff]
    %v209 = vld [vmem:[%s3 + $0x4d8] sm:$0xff]
    %v210 = vld [vmem:[%s3 + $0x4e0] sm:$0xff]
    %v211 = vld [vmem:[%s3 + $0x4e8] sm:$0xff]
    %v212 = vld [vmem:[%s3 + $0x4f0] sm:$0xff]
    %v213 = vld [vmem:[%s3 + $0x4f8] sm:$0xff]
    %v214 = vld [vmem:[%s3 + $0x500] sm:$0xff]
    %v215 = vld [vmem:[%s3 + $0x508] sm:$0xff]
    %v216 = vld [vmem:[%s3 + $0x510] sm:$0xff]
    %v217 = vld [vmem:[%s3 + $0x518] sm:$0xff]
    %v218 = vld [vmem:[%s3 + $0x520] sm:$0xff]
    %v219 = vld [vmem:[%s3 + $0x528] sm:$0xff]
    %v220 = vld [vmem:[%s3 + $0x530] sm:$0xff]
    %v221 = vld [vmem:[%s3 + $0x538] sm:$0xff]
    %v222 = vld [vmem:[%s3 + $0x540] sm:$0xff]
    %v223 = vld [vmem:[%s3 + $0x548] sm:$0xff]
    %v224 = vld [vmem:[%s3 + $0x550] sm:$0xff]
    %v225 = vld [vmem:[%s3 + $0x558] sm:$0xff]
    %v226 = vld [vmem:[%s3 + $0x560] sm:$0xff]
    %v227 = vld [vmem:[%s3 + $0x568] sm:$0xff]
    %v228 = vld [vmem:[%s3 + $0x570] sm:$0xff]
    %v229 = vld [vmem:[%s3 + $0x578] sm:$0xff]
    %v230 = vld [vmem:[%s3 + $0x580] sm:$0xff]
    %v231 = vld [vmem:[%s3 + $0x588] sm:$0xff]
    %v232 = vld [vmem:[%s3 + $0x590] sm:$0xff]
    %v233 = vld [vmem:[%s3 + $0x598] sm:$0xff]
    %v234 = vld [vmem:[%s3 + $0x5a0] sm:$0xff]
    %v235 = vld [vmem:[%s3 + $0x5a8] sm:$0xff]
    %v236 = vld [vmem:[%s3 + $0x5b0] sm:$0xff]
    %v237 = vld [vmem:[%s3 + $0x5b8] sm:$0xff]
    %v238 = vld [vmem:[%s3 + $0x5c0] sm:$0xff]
    %v239 = vld [vmem:[%s3 + $0x5c8] sm:$0xff]
    %v240 = vld [vmem:[%s3 + $0x5d0] sm:$0xff]
    %v241 = vld [vmem:[%s3 + $0x5d8] sm:$0xff]
    %v242 = vld [vmem:[%s3 + $0x5e0] sm:$0xff]
    %v243 = vld [vmem:[%s3 + $0x5e8] sm:$0xff]
    %v244 = vld [vmem:[%s3 + $0x5f0] sm:$0xff]
    %v245 = vld [vmem:[%s3 + $0x5f8] sm:$0xff]
    %v246 = vld [vmem:[%s3 + $0x600] sm:$0xff]
    %v247 = vld [vmem:[%s3 + $0x608] sm:$0xff]
    %v248 = vld [vmem:[%s3 + $0x610] sm:$0xff]
    %v249 = vld [vmem:[%s3 + $0x618] sm:$0xff]
    %v250 = vld [vmem:[%s4] sm:$0xff]
    %v251 = vld [vmem:[%s4 + $0x8] sm:$0xff]
    %v252 = vld [vmem:[%s4 + $0x10] sm:$0x11]
    %v253 = vld [vmem:[%s4 + $0x18] sm:$0x11]
    %v258 = vunpack.c.l.b16 %v250
    %v259 = vunpack.c.h.b16 %v250
    %v260 = vunpack.c.l.b16 %v251
    %v261 = vunpack.c.h.b16 %v251
    %v262 = vunpack.c.l.b16 %v252
    %v263 = vunpack.c.h.b16 %v252
    %v264 = vunpack.c.l.b16 %v253
    %v265 = vunpack.c.h.b16 %v253
    %v266 = vpack.c.b16 %v262, %v258
    %v267 = vpack.c.b16 %v263, %v259
    %v268 = vpack.c.b16 %v264, %v260
    %v269 = vpack.c.b16 %v265, %v261
    %vm270 = vcmask 80896
    %v272 = vsel %vm270, %v52, 0
    %vm274 = vcmask 1044480
    %v276 = vsel %vm274, %v266, 0
    %v279 = vsel %vm274, %v267, 0
    %v282 = vsel %vm274, %v268, 0
    %v285 = vsel %vm274, %v269, 0
    %287 = vmatpush.bf16.msra.mxu0 0
    %288 = vmatpush.bf16.msra.mxu0 0
    %289 = vmatpush.bf16.msra.mxu0 0
    %290 = vmatpush.bf16.msra.mxu0 0
    %291 = vmatpush.bf16.msra.mxu0 0
    %292 = vmatpush.bf16.msra.mxu0 0
    %293 = vmatpush.bf16.msra.mxu0 0
    %294 = vmatpush.bf16.msra.mxu0 %v276
    %295 = vmatmul.bf16.gmra.mxu0 %v272
    %v296 = vpop.f32.mrf.mxu0
    %v297 = vadd.f32 0.0, %v296
    %v298 = vpop.f32.mrf.mxu0
    %299 = vdwg.mxu0
    %300 = vmatpush.bf16.msra.mxu0 0
    %301 = vmatpush.bf16.msra.mxu0 0
    %302 = vmatpush.bf16.msra.mxu0 0
    %303 = vmatpush.bf16.msra.mxu0 0
    %304 = vmatpush.bf16.msra.mxu0 0
    %305 = vmatpush.bf16.msra.mxu0 0
    %306 = vmatpush.bf16.msra.mxu0 0
    %307 = vmatpush.bf16.msra.mxu0 %v279
    %308 = vmatmul.bf16.gmra.mxu0 %v272
    %v309 = vpop.f32.mrf.mxu0
    %v310 = vadd.f32 0.0, %v309
    %v311 = vpop.f32.mrf.mxu0
    %312 = vdwg.mxu0
    %313 = vmatpush.bf16.msra.mxu0 0
    %314 = vmatpush.bf16.msra.mxu0 0
    %315 = vmatpush.bf16.msra.mxu0 0
    %316 = vmatpush.bf16.msra.mxu0 0
    %317 = vmatpush.bf16.msra.mxu0 0
    %318 = vmatpush.bf16.msra.mxu0 0
    %319 = vmatpush.bf16.msra.mxu0 0
    %320 = vmatpush.bf16.msra.mxu0 %v282
    %321 = vmatmul.bf16.gmra.mxu0 %v272
    %v322 = vpop.f32.mrf.mxu0
    %v323 = vadd.f32 0.0, %v322
    %v324 = vpop.f32.mrf.mxu0
    %325 = vdwg.mxu0
    %326 = vmatpush.bf16.msra.mxu0 0
    %327 = vmatpush.bf16.msra.mxu0 0
    %328 = vmatpush.bf16.msra.mxu0 0
    %329 = vmatpush.bf16.msra.mxu0 0
    %330 = vmatpush.bf16.msra.mxu0 0
    %331 = vmatpush.bf16.msra.mxu0 0
    %332 = vmatpush.bf16.msra.mxu0 0
    %333 = vmatpush.bf16.msra.mxu0 %v285
    %334 = vmatmul.bf16.gmra.mxu0 %v272
    %v335 = vpop.f32.mrf.mxu0
    %v336 = vadd.f32 0.0, %v335
    %v337 = vpop.f32.mrf.mxu0
    %338 = vdwg.mxu0
    %v343 = vunpack.c.l.b16 %v48
    %v344 = vunpack.c.h.b16 %v48
    %v345 = vunpack.c.l.b16 %v49
    %v346 = vunpack.c.h.b16 %v49
    %v347 = vunpack.c.l.b16 %v50
    %v348 = vunpack.c.h.b16 %v50
    %v349 = vunpack.c.l.b16 %v51
    %v350 = vpack.c.b16 %v343, %v343
    %v351 = vpack.c.b16 %v344, %v344
    %v352 = vpack.c.b16 %v345, %v345
    %v353 = vpack.c.b16 %v346, %v346
    %v354 = vpack.c.b16 %v347, %v347
    %v355 = vpack.c.b16 %v348, %v348
    %v356 = vpack.c.b16 %v349, %v349
    %v559 = vunpack.c.l.b16 %v54
    %v560 = vunpack.c.h.b16 %v54
    %v561 = vunpack.c.l.b16 %v55
    %v562 = vunpack.c.h.b16 %v55
    %v563 = vunpack.c.l.b16 %v56
    %v564 = vunpack.c.h.b16 %v56
    %v565 = vunpack.c.l.b16 %v57
    %v566 = vunpack.c.h.b16 %v57
    %v567 = vunpack.c.l.b16 %v58
    %v568 = vunpack.c.h.b16 %v58
    %v569 = vunpack.c.l.b16 %v59
    %v570 = vunpack.c.h.b16 %v59
    %v571 = vunpack.c.l.b16 %v60
    %v572 = vunpack.c.h.b16 %v60
    %v573 = vunpack.c.l.b16 %v61
    %v574 = vunpack.c.h.b16 %v61
    %v575 = vunpack.c.l.b16 %v62
    %v576 = vunpack.c.h.b16 %v62
    %v577 = vunpack.c.l.b16 %v63
    %v578 = vunpack.c.h.b16 %v63
    %v579 = vunpack.c.l.b16 %v64
    %v580 = vunpack.c.h.b16 %v64
    %v581 = vunpack.c.l.b16 %v65
    %v582 = vunpack.c.h.b16 %v65
    %v583 = vunpack.c.l.b16 %v66
    %v584 = vunpack.c.h.b16 %v66
    %v585 = vunpack.c.l.b16 %v67
    %v586 = vunpack.c.h.b16 %v67
    %v587 = vunpack.c.l.b16 %v68
    %v588 = vunpack.c.h.b16 %v68
    %v589 = vunpack.c.l.b16 %v69
    %v590 = vunpack.c.h.b16 %v69
    %v591 = vunpack.c.l.b16 %v70
    %v592 = vunpack.c.h.b16 %v70
    %v593 = vunpack.c.l.b16 %v71
    %v594 = vunpack.c.h.b16 %v71
    %v595 = vunpack.c.l.b16 %v72
    %v596 = vunpack.c.h.b16 %v72
    %v597 = vunpack.c.l.b16 %v73
    %v598 = vunpack.c.h.b16 %v73
    %v599 = vunpack.c.l.b16 %v74
    %v600 = vunpack.c.h.b16 %v74
    %v601 = vunpack.c.l.b16 %v75
    %v602 = vunpack.c.h.b16 %v75
    %v603 = vunpack.c.l.b16 %v76
    %v604 = vunpack.c.h.b16 %v76
    %v605 = vunpack.c.l.b16 %v77
    %v606 = vunpack.c.h.b16 %v77
    %v607 = vunpack.c.l.b16 %v78
    %v608 = vunpack.c.h.b16 %v78
    %v609 = vunpack.c.l.b16 %v79
    %v610 = vunpack.c.h.b16 %v79
    %v611 = vunpack.c.l.b16 %v80
    %v612 = vunpack.c.h.b16 %v80
    %v613 = vunpack.c.l.b16 %v81
    %v614 = vunpack.c.h.b16 %v81
    %v615 = vunpack.c.l.b16 %v82
    %v616 = vunpack.c.h.b16 %v82
    %v617 = vunpack.c.l.b16 %v83
    %v618 = vunpack.c.h.b16 %v83
    %v619 = vunpack.c.l.b16 %v84
    %v620 = vunpack.c.h.b16 %v84
    %v621 = vunpack.c.l.b16 %v85
    %v622 = vunpack.c.h.b16 %v85
    %v623 = vunpack.c.l.b16 %v86
    %v624 = vunpack.c.h.b16 %v86
    %v625 = vunpack.c.l.b16 %v87
    %v626 = vunpack.c.h.b16 %v87
    %v627 = vunpack.c.l.b16 %v88
    %v628 = vunpack.c.h.b16 %v88
    %v629 = vunpack.c.l.b16 %v89
    %v630 = vunpack.c.h.b16 %v89
    %v631 = vunpack.c.l.b16 %v90
    %v632 = vunpack.c.h.b16 %v90
    %v633 = vunpack.c.l.b16 %v91
    %v634 = vunpack.c.h.b16 %v91
    %v635 = vunpack.c.l.b16 %v92
    %v636 = vunpack.c.h.b16 %v92
    %v637 = vunpack.c.l.b16 %v93
    %v638 = vunpack.c.h.b16 %v93
    %v639 = vunpack.c.l.b16 %v94
    %v640 = vunpack.c.h.b16 %v94
    %v641 = vunpack.c.l.b16 %v95
    %v642 = vunpack.c.h.b16 %v95
    %v643 = vunpack.c.l.b16 %v96
    %v644 = vunpack.c.h.b16 %v96
    %v645 = vunpack.c.l.b16 %v97
    %v646 = vunpack.c.h.b16 %v97
    %v647 = vunpack.c.l.b16 %v98
    %v648 = vunpack.c.h.b16 %v98
    %v649 = vunpack.c.l.b16 %v99
    %v650 = vunpack.c.h.b16 %v99
    %v651 = vunpack.c.l.b16 %v100
    %v652 = vunpack.c.h.b16 %v100
    %v653 = vunpack.c.l.b16 %v101
    %v654 = vunpack.c.h.b16 %v101
    %v655 = vunpack.c.l.b16 %v102
    %v656 = vunpack.c.h.b16 %v102
    %v657 = vunpack.c.l.b16 %v103
    %v658 = vunpack.c.h.b16 %v103
    %v659 = vunpack.c.l.b16 %v104
    %v660 = vunpack.c.h.b16 %v104
    %v661 = vunpack.c.l.b16 %v105
    %v662 = vunpack.c.h.b16 %v105
    %v663 = vunpack.c.l.b16 %v106
    %v664 = vunpack.c.h.b16 %v106
    %v665 = vunpack.c.l.b16 %v107
    %v666 = vunpack.c.h.b16 %v107
    %v667 = vunpack.c.l.b16 %v108
    %v668 = vunpack.c.h.b16 %v108
    %v669 = vunpack.c.l.b16 %v109
    %v670 = vunpack.c.h.b16 %v109
    %v671 = vunpack.c.l.b16 %v110
    %v672 = vunpack.c.h.b16 %v110
    %v673 = vunpack.c.l.b16 %v111
    %v674 = vunpack.c.h.b16 %v111
    %v675 = vunpack.c.l.b16 %v112
    %v676 = vunpack.c.h.b16 %v112
    %v677 = vunpack.c.l.b16 %v113
    %v678 = vunpack.c.h.b16 %v113
    %v679 = vunpack.c.l.b16 %v114
    %v680 = vunpack.c.h.b16 %v114
    %v681 = vunpack.c.l.b16 %v115
    %v682 = vunpack.c.h.b16 %v115
    %v683 = vunpack.c.l.b16 %v116
    %v684 = vunpack.c.h.b16 %v116
    %v685 = vunpack.c.l.b16 %v117
    %v686 = vunpack.c.h.b16 %v117
    %v687 = vunpack.c.l.b16 %v118
    %v688 = vunpack.c.h.b16 %v118
    %v689 = vunpack.c.l.b16 %v119
    %v690 = vunpack.c.h.b16 %v119
    %v691 = vunpack.c.l.b16 %v120
    %v692 = vunpack.c.h.b16 %v120
    %v693 = vunpack.c.l.b16 %v121
    %v694 = vunpack.c.h.b16 %v121
    %v695 = vunpack.c.l.b16 %v122
    %v696 = vunpack.c.h.b16 %v122
    %v697 = vunpack.c.l.b16 %v123
    %v698 = vunpack.c.h.b16 %v123
    %v699 = vunpack.c.l.b16 %v124
    %v700 = vunpack.c.h.b16 %v124
    %v701 = vunpack.c.l.b16 %v125
    %v702 = vunpack.c.h.b16 %v125
    %v703 = vunpack.c.l.b16 %v126
    %v704 = vunpack.c.h.b16 %v126
    %v705 = vunpack.c.l.b16 %v127
    %v706 = vunpack.c.h.b16 %v127
    %v707 = vunpack.c.l.b16 %v128
    %v708 = vunpack.c.h.b16 %v128
    %v709 = vunpack.c.l.b16 %v129
    %v710 = vunpack.c.h.b16 %v129
    %v711 = vunpack.c.l.b16 %v130
    %v712 = vunpack.c.h.b16 %v130
    %v713 = vunpack.c.l.b16 %v131
    %v714 = vunpack.c.h.b16 %v131
    %v715 = vunpack.c.l.b16 %v132
    %v716 = vunpack.c.h.b16 %v132
    %v717 = vunpack.c.l.b16 %v133
    %v718 = vunpack.c.h.b16 %v133
    %v719 = vunpack.c.l.b16 %v134
    %v720 = vunpack.c.h.b16 %v134
    %v721 = vunpack.c.l.b16 %v135
    %v722 = vunpack.c.h.b16 %v135
    %v723 = vunpack.c.l.b16 %v136
    %v724 = vunpack.c.h.b16 %v136
    %v725 = vunpack.c.l.b16 %v137
    %v726 = vunpack.c.h.b16 %v137
    %v727 = vunpack.c.l.b16 %v138
    %v728 = vunpack.c.h.b16 %v138
    %v729 = vunpack.c.l.b16 %v139
    %v730 = vunpack.c.h.b16 %v139
    %v731 = vunpack.c.l.b16 %v140
    %v732 = vunpack.c.h.b16 %v140
    %v733 = vunpack.c.l.b16 %v141
    %v734 = vunpack.c.h.b16 %v141
    %v735 = vunpack.c.l.b16 %v142
    %v736 = vunpack.c.h.b16 %v142
    %v737 = vunpack.c.l.b16 %v143
    %v738 = vunpack.c.h.b16 %v143
    %v739 = vunpack.c.l.b16 %v144
    %v740 = vunpack.c.h.b16 %v144
    %v741 = vunpack.c.l.b16 %v145
    %v742 = vunpack.c.h.b16 %v145
    %v743 = vunpack.c.l.b16 %v146
    %v744 = vunpack.c.h.b16 %v146
    %v745 = vunpack.c.l.b16 %v147
    %v746 = vunpack.c.h.b16 %v147
    %v747 = vunpack.c.l.b16 %v148
    %v748 = vunpack.c.h.b16 %v148
    %v749 = vunpack.c.l.b16 %v149
    %v750 = vunpack.c.h.b16 %v149
    %v751 = vunpack.c.l.b16 %v150
    %v752 = vunpack.c.h.b16 %v150
    %v753 = vunpack.c.l.b16 %v151
    %v754 = vunpack.c.h.b16 %v151
    %v755 = vunpack.c.l.b16 %v152
    %v756 = vunpack.c.h.b16 %v152
    %v757 = vunpack.c.l.b16 %v153
    %v758 = vunpack.c.h.b16 %v153
    %v759 = vunpack.c.l.b16 %v154
    %v760 = vunpack.c.h.b16 %v154
    %v761 = vunpack.c.l.b16 %v155
    %v762 = vunpack.c.h.b16 %v155
    %v763 = vunpack.c.l.b16 %v156
    %v764 = vunpack.c.h.b16 %v156
    %v765 = vunpack.c.l.b16 %v157
    %v766 = vunpack.c.h.b16 %v157
    %v767 = vunpack.c.l.b16 %v158
    %v768 = vunpack.c.h.b16 %v158
    %v769 = vunpack.c.l.b16 %v159
    %v770 = vunpack.c.h.b16 %v159
    %v771 = vunpack.c.l.b16 %v160
    %v772 = vunpack.c.h.b16 %v160
    %v773 = vunpack.c.l.b16 %v161
    %v774 = vunpack.c.h.b16 %v161
    %v775 = vunpack.c.l.b16 %v162
    %v776 = vunpack.c.h.b16 %v162
    %v777 = vunpack.c.l.b16 %v163
    %v778 = vunpack.c.h.b16 %v163
    %v779 = vunpack.c.l.b16 %v164
    %v780 = vunpack.c.h.b16 %v164
    %v781 = vunpack.c.l.b16 %v165
    %v782 = vunpack.c.h.b16 %v165
    %v783 = vunpack.c.l.b16 %v166
    %v784 = vunpack.c.h.b16 %v166
    %v785 = vunpack.c.l.b16 %v167
    %v786 = vunpack.c.h.b16 %v167
    %v787 = vunpack.c.l.b16 %v168
    %v788 = vunpack.c.h.b16 %v168
    %v789 = vunpack.c.l.b16 %v169
    %v790 = vunpack.c.h.b16 %v169
    %v791 = vunpack.c.l.b16 %v170
    %v792 = vunpack.c.h.b16 %v170
    %v793 = vunpack.c.l.b16 %v171
    %v794 = vunpack.c.h.b16 %v171
    %v795 = vunpack.c.l.b16 %v172
    %v796 = vunpack.c.h.b16 %v172
    %v797 = vunpack.c.l.b16 %v173
    %v798 = vunpack.c.h.b16 %v173
    %v799 = vunpack.c.l.b16 %v174
    %v800 = vunpack.c.h.b16 %v174
    %v801 = vunpack.c.l.b16 %v175
    %v802 = vunpack.c.h.b16 %v175
    %v803 = vunpack.c.l.b16 %v176
    %v804 = vunpack.c.h.b16 %v176
    %v805 = vunpack.c.l.b16 %v177
    %v806 = vunpack.c.h.b16 %v177
    %v807 = vunpack.c.l.b16 %v178
    %v808 = vunpack.c.h.b16 %v178
    %v809 = vunpack.c.l.b16 %v179
    %v810 = vunpack.c.h.b16 %v179
    %v811 = vunpack.c.l.b16 %v180
    %v812 = vunpack.c.h.b16 %v180
    %v813 = vunpack.c.l.b16 %v181
    %v814 = vunpack.c.h.b16 %v181
    %v815 = vunpack.c.l.b16 %v182
    %v816 = vunpack.c.h.b16 %v182
    %v817 = vunpack.c.l.b16 %v183
    %v818 = vunpack.c.h.b16 %v183
    %v819 = vunpack.c.l.b16 %v184
    %v820 = vunpack.c.h.b16 %v184
    %v821 = vunpack.c.l.b16 %v185
    %v822 = vunpack.c.h.b16 %v185
    %v823 = vunpack.c.l.b16 %v186
    %v824 = vunpack.c.h.b16 %v186
    %v825 = vunpack.c.l.b16 %v187
    %v826 = vunpack.c.h.b16 %v187
    %v827 = vunpack.c.l.b16 %v188
    %v828 = vunpack.c.h.b16 %v188
    %v829 = vunpack.c.l.b16 %v189
    %v830 = vunpack.c.h.b16 %v189
    %v831 = vunpack.c.l.b16 %v190
    %v832 = vunpack.c.h.b16 %v190
    %v833 = vunpack.c.l.b16 %v191
    %v834 = vunpack.c.h.b16 %v191
    %v835 = vunpack.c.l.b16 %v192
    %v836 = vunpack.c.h.b16 %v192
    %v837 = vunpack.c.l.b16 %v193
    %v838 = vunpack.c.h.b16 %v193
    %v839 = vunpack.c.l.b16 %v194
    %v840 = vunpack.c.h.b16 %v194
    %v841 = vunpack.c.l.b16 %v195
    %v842 = vunpack.c.h.b16 %v195
    %v843 = vunpack.c.l.b16 %v196
    %v844 = vunpack.c.h.b16 %v196
    %v845 = vunpack.c.l.b16 %v197
    %v846 = vunpack.c.h.b16 %v197
    %v847 = vunpack.c.l.b16 %v198
    %v848 = vunpack.c.h.b16 %v198
    %v849 = vunpack.c.l.b16 %v199
    %v850 = vunpack.c.h.b16 %v199
    %v851 = vunpack.c.l.b16 %v200
    %v852 = vunpack.c.h.b16 %v200
    %v853 = vunpack.c.l.b16 %v201
    %v854 = vunpack.c.h.b16 %v201
    %v855 = vunpack.c.l.b16 %v202
    %v856 = vunpack.c.h.b16 %v202
    %v857 = vunpack.c.l.b16 %v203
    %v858 = vunpack.c.h.b16 %v203
    %v859 = vunpack.c.l.b16 %v204
    %v860 = vunpack.c.h.b16 %v204
    %v861 = vunpack.c.l.b16 %v205
    %v862 = vunpack.c.h.b16 %v205
    %v863 = vunpack.c.l.b16 %v206
    %v864 = vunpack.c.h.b16 %v206
    %v865 = vunpack.c.l.b16 %v207
    %v866 = vunpack.c.h.b16 %v207
    %v867 = vunpack.c.l.b16 %v208
    %v868 = vunpack.c.h.b16 %v208
    %v869 = vunpack.c.l.b16 %v209
    %v870 = vunpack.c.h.b16 %v209
    %v871 = vunpack.c.l.b16 %v210
    %v872 = vunpack.c.h.b16 %v210
    %v873 = vunpack.c.l.b16 %v211
    %v874 = vunpack.c.h.b16 %v211
    %v875 = vunpack.c.l.b16 %v212
    %v876 = vunpack.c.h.b16 %v212
    %v877 = vunpack.c.l.b16 %v213
    %v878 = vunpack.c.h.b16 %v213
    %v879 = vunpack.c.l.b16 %v214
    %v880 = vunpack.c.h.b16 %v214
    %v881 = vunpack.c.l.b16 %v215
    %v882 = vunpack.c.h.b16 %v215
    %v883 = vunpack.c.l.b16 %v216
    %v884 = vunpack.c.h.b16 %v216
    %v885 = vunpack.c.l.b16 %v217
    %v886 = vunpack.c.h.b16 %v217
    %v887 = vunpack.c.l.b16 %v218
    %v888 = vunpack.c.h.b16 %v218
    %v889 = vunpack.c.l.b16 %v219
    %v890 = vunpack.c.h.b16 %v219
    %v891 = vunpack.c.l.b16 %v220
    %v892 = vunpack.c.h.b16 %v220
    %v893 = vunpack.c.l.b16 %v221
    %v894 = vunpack.c.h.b16 %v221
    %v895 = vunpack.c.l.b16 %v222
    %v896 = vunpack.c.h.b16 %v222
    %v897 = vunpack.c.l.b16 %v223
    %v898 = vunpack.c.h.b16 %v223
    %v899 = vunpack.c.l.b16 %v224
    %v900 = vunpack.c.h.b16 %v224
    %v901 = vunpack.c.l.b16 %v225
    %v902 = vunpack.c.h.b16 %v225
    %v903 = vunpack.c.l.b16 %v226
    %v904 = vunpack.c.h.b16 %v226
    %v905 = vunpack.c.l.b16 %v227
    %v906 = vunpack.c.h.b16 %v227
    %v907 = vunpack.c.l.b16 %v228
    %v908 = vunpack.c.h.b16 %v228
    %v909 = vunpack.c.l.b16 %v229
    %v910 = vunpack.c.h.b16 %v229
    %v911 = vunpack.c.l.b16 %v230
    %v912 = vunpack.c.h.b16 %v230
    %v913 = vunpack.c.l.b16 %v231
    %v914 = vunpack.c.h.b16 %v231
    %v915 = vunpack.c.l.b16 %v232
    %v916 = vunpack.c.h.b16 %v232
    %v917 = vunpack.c.l.b16 %v233
    %v918 = vunpack.c.h.b16 %v233
    %v919 = vunpack.c.l.b16 %v234
    %v920 = vunpack.c.h.b16 %v234
    %v921 = vunpack.c.l.b16 %v235
    %v922 = vunpack.c.h.b16 %v235
    %v923 = vunpack.c.l.b16 %v236
    %v924 = vunpack.c.h.b16 %v236
    %v925 = vunpack.c.l.b16 %v237
    %v926 = vunpack.c.h.b16 %v237
    %v927 = vunpack.c.l.b16 %v238
    %v928 = vunpack.c.h.b16 %v238
    %v929 = vunpack.c.l.b16 %v239
    %v930 = vunpack.c.h.b16 %v239
    %v931 = vunpack.c.l.b16 %v240
    %v932 = vunpack.c.h.b16 %v240
    %v933 = vunpack.c.l.b16 %v241
    %v934 = vunpack.c.h.b16 %v241
    %v935 = vunpack.c.l.b16 %v242
    %v936 = vunpack.c.h.b16 %v242
    %v937 = vunpack.c.l.b16 %v243
    %v938 = vunpack.c.h.b16 %v243
    %v939 = vunpack.c.l.b16 %v244
    %v940 = vunpack.c.h.b16 %v244
    %v941 = vunpack.c.l.b16 %v245
    %v942 = vunpack.c.h.b16 %v245
    %v943 = vunpack.c.l.b16 %v246
    %v944 = vunpack.c.h.b16 %v246
    %v945 = vunpack.c.l.b16 %v247
    %v946 = vunpack.c.h.b16 %v247
    %v947 = vunpack.c.l.b16 %v248
    %v948 = vunpack.c.h.b16 %v248
    %v949 = vunpack.c.l.b16 %v249
    %v950 = vunpack.c.h.b16 %v249
    %v951 = vpack.c.b16 %v563, %v559
    %v952 = vpack.c.b16 %v564, %v560
    %v953 = vpack.c.b16 %v565, %v561
    %v954 = vpack.c.b16 %v566, %v562
    %v955 = vpack.c.b16 %v571, %v567
    %v956 = vpack.c.b16 %v572, %v568
    %v957 = vpack.c.b16 %v573, %v569
    %v958 = vpack.c.b16 %v574, %v570
    %v959 = vpack.c.b16 %v579, %v575
    %v960 = vpack.c.b16 %v580, %v576
    %v961 = vpack.c.b16 %v581, %v577
    %v962 = vpack.c.b16 %v582, %v578
    %v963 = vpack.c.b16 %v587, %v583
    %v964 = vpack.c.b16 %v588, %v584
    %v965 = vpack.c.b16 %v589, %v585
    %v966 = vpack.c.b16 %v590, %v586
    %v967 = vpack.c.b16 %v595, %v591
    %v968 = vpack.c.b16 %v596, %v592
    %v969 = vpack.c.b16 %v597, %v593
    %v970 = vpack.c.b16 %v598, %v594
    %v971 = vpack.c.b16 %v603, %v599
    %v972 = vpack.c.b16 %v604, %v600
    %v973 = vpack.c.b16 %v605, %v601
    %v974 = vpack.c.b16 %v606, %v602
    %v975 = vpack.c.b16 %v611, %v607
    %v976 = vpack.c.b16 %v612, %v608
    %v977 = vpack.c.b16 %v613, %v609
    %v978 = vpack.c.b16 %v614, %v610
    %v979 = vpack.c.b16 %v619, %v615
    %v980 = vpack.c.b16 %v620, %v616
    %v981 = vpack.c.b16 %v621, %v617
    %v982 = vpack.c.b16 %v622, %v618
    %v983 = vpack.c.b16 %v627, %v623
    %v984 = vpack.c.b16 %v628, %v624
    %v985 = vpack.c.b16 %v629, %v625
    %v986 = vpack.c.b16 %v630, %v626
    %v987 = vpack.c.b16 %v635, %v631
    %v988 = vpack.c.b16 %v636, %v632
    %v989 = vpack.c.b16 %v637, %v633
    %v990 = vpack.c.b16 %v638, %v634
    %v991 = vpack.c.b16 %v643, %v639
    %v992 = vpack.c.b16 %v644, %v640
    %v993 = vpack.c.b16 %v645, %v641
    %v994 = vpack.c.b16 %v646, %v642
    %v995 = vpack.c.b16 %v651, %v647
    %v996 = vpack.c.b16 %v652, %v648
    %v997 = vpack.c.b16 %v653, %v649
    %v998 = vpack.c.b16 %v654, %v650
    %v999 = vpack.c.b16 %v659, %v655
    %v1000 = vpack.c.b16 %v660, %v656
    %v1001 = vpack.c.b16 %v661, %v657
    %v1002 = vpack.c.b16 %v662, %v658
    %v1003 = vpack.c.b16 %v667, %v663
    %v1004 = vpack.c.b16 %v668, %v664
    %v1005 = vpack.c.b16 %v669, %v665
    %v1006 = vpack.c.b16 %v670, %v666
    %v1007 = vpack.c.b16 %v675, %v671
    %v1008 = vpack.c.b16 %v676, %v672
    %v1009 = vpack.c.b16 %v677, %v673
    %v1010 = vpack.c.b16 %v678, %v674
    %v1011 = vpack.c.b16 %v683, %v679
    %v1012 = vpack.c.b16 %v684, %v680
    %v1013 = vpack.c.b16 %v685, %v681
    %v1014 = vpack.c.b16 %v686, %v682
    %v1015 = vpack.c.b16 %v691, %v687
    %v1016 = vpack.c.b16 %v692, %v688
    %v1017 = vpack.c.b16 %v693, %v689
    %v1018 = vpack.c.b16 %v694, %v690
    %v1019 = vpack.c.b16 %v699, %v695
    %v1020 = vpack.c.b16 %v700, %v696
    %v1021 = vpack.c.b16 %v701, %v697
    %v1022 = vpack.c.b16 %v702, %v698
    %v1023 = vpack.c.b16 %v707, %v703
    %v1024 = vpack.c.b16 %v708, %v704
    %v1025 = vpack.c.b16 %v709, %v705
    %v1026 = vpack.c.b16 %v710, %v706
    %v1027 = vpack.c.b16 %v715, %v711
    %v1028 = vpack.c.b16 %v716, %v712
    %v1029 = vpack.c.b16 %v717, %v713
    %v1030 = vpack.c.b16 %v718, %v714
    %v1031 = vpack.c.b16 %v723, %v719
    %v1032 = vpack.c.b16 %v724, %v720
    %v1033 = vpack.c.b16 %v725, %v721
    %v1034 = vpack.c.b16 %v726, %v722
    %v1035 = vpack.c.b16 %v731, %v727
    %v1036 = vpack.c.b16 %v732, %v728
    %v1037 = vpack.c.b16 %v733, %v729
    %v1038 = vpack.c.b16 %v734, %v730
    %v1039 = vpack.c.b16 %v739, %v735
    %v1040 = vpack.c.b16 %v740, %v736
    %v1041 = vpack.c.b16 %v741, %v737
    %v1042 = vpack.c.b16 %v742, %v738
    %v1043 = vpack.c.b16 %v747, %v743
    %v1044 = vpack.c.b16 %v748, %v744
    %v1045 = vpack.c.b16 %v749, %v745
    %v1046 = vpack.c.b16 %v750, %v746
    %v1047 = vpack.c.b16 %v755, %v751
    %v1048 = vpack.c.b16 %v756, %v752
    %v1049 = vpack.c.b16 %v757, %v753
    %v1050 = vpack.c.b16 %v758, %v754
    %v1051 = vpack.c.b16 %v763, %v759
    %v1052 = vpack.c.b16 %v764, %v760
    %v1053 = vpack.c.b16 %v765, %v761
    %v1054 = vpack.c.b16 %v766, %v762
    %v1055 = vpack.c.b16 %v771, %v767
    %v1056 = vpack.c.b16 %v772, %v768
    %v1057 = vpack.c.b16 %v773, %v769
    %v1058 = vpack.c.b16 %v774, %v770
    %v1059 = vpack.c.b16 %v779, %v775
    %v1060 = vpack.c.b16 %v780, %v776
    %v1061 = vpack.c.b16 %v781, %v777
    %v1062 = vpack.c.b16 %v782, %v778
    %v1063 = vpack.c.b16 %v787, %v783
    %v1064 = vpack.c.b16 %v788, %v784
    %v1065 = vpack.c.b16 %v789, %v785
    %v1066 = vpack.c.b16 %v790, %v786
    %v1067 = vpack.c.b16 %v795, %v791
    %v1068 = vpack.c.b16 %v796, %v792
    %v1069 = vpack.c.b16 %v797, %v793
    %v1070 = vpack.c.b16 %v798, %v794
    %v1071 = vpack.c.b16 %v803, %v799
    %v1072 = vpack.c.b16 %v804, %v800
    %v1073 = vpack.c.b16 %v805, %v801
    %v1074 = vpack.c.b16 %v806, %v802
    %v1075 = vpack.c.b16 %v811, %v807
    %v1076 = vpack.c.b16 %v812, %v808
    %v1077 = vpack.c.b16 %v813, %v809
    %v1078 = vpack.c.b16 %v814, %v810
    %v1079 = vpack.c.b16 %v819, %v815
    %v1080 = vpack.c.b16 %v820, %v816
    %v1081 = vpack.c.b16 %v821, %v817
    %v1082 = vpack.c.b16 %v822, %v818
    %v1083 = vpack.c.b16 %v827, %v823
    %v1084 = vpack.c.b16 %v828, %v824
    %v1085 = vpack.c.b16 %v829, %v825
    %v1086 = vpack.c.b16 %v830, %v826
    %v1087 = vpack.c.b16 %v835, %v831
    %v1088 = vpack.c.b16 %v836, %v832
    %v1089 = vpack.c.b16 %v837, %v833
    %v1090 = vpack.c.b16 %v838, %v834
    %v1091 = vpack.c.b16 %v843, %v839
    %v1092 = vpack.c.b16 %v844, %v840
    %v1093 = vpack.c.b16 %v845, %v841
    %v1094 = vpack.c.b16 %v846, %v842
    %v1095 = vpack.c.b16 %v851, %v847
    %v1096 = vpack.c.b16 %v852, %v848
    %v1097 = vpack.c.b16 %v853, %v849
    %v1098 = vpack.c.b16 %v854, %v850
    %v1099 = vpack.c.b16 %v859, %v855
    %v1100 = vpack.c.b16 %v860, %v856
    %v1101 = vpack.c.b16 %v861, %v857
    %v1102 = vpack.c.b16 %v862, %v858
    %v1103 = vpack.c.b16 %v867, %v863
    %v1104 = vpack.c.b16 %v868, %v864
    %v1105 = vpack.c.b16 %v869, %v865
    %v1106 = vpack.c.b16 %v870, %v866
    %v1107 = vpack.c.b16 %v875, %v871
    %v1108 = vpack.c.b16 %v876, %v872
    %v1109 = vpack.c.b16 %v877, %v873
    %v1110 = vpack.c.b16 %v878, %v874
    %v1111 = vpack.c.b16 %v883, %v879
    %v1112 = vpack.c.b16 %v884, %v880
    %v1113 = vpack.c.b16 %v885, %v881
    %v1114 = vpack.c.b16 %v886, %v882
    %v1115 = vpack.c.b16 %v891, %v887
    %v1116 = vpack.c.b16 %v892, %v888
    %v1117 = vpack.c.b16 %v893, %v889
    %v1118 = vpack.c.b16 %v894, %v890
    %v1119 = vpack.c.b16 %v899, %v895
    %v1120 = vpack.c.b16 %v900, %v896
    %v1121 = vpack.c.b16 %v901, %v897
    %v1122 = vpack.c.b16 %v902, %v898
    %v1123 = vpack.c.b16 %v907, %v903
    %v1124 = vpack.c.b16 %v908, %v904
    %v1125 = vpack.c.b16 %v909, %v905
    %v1126 = vpack.c.b16 %v910, %v906
    %v1127 = vpack.c.b16 %v915, %v911
    %v1128 = vpack.c.b16 %v916, %v912
    %v1129 = vpack.c.b16 %v917, %v913
    %v1130 = vpack.c.b16 %v918, %v914
    %v1131 = vpack.c.b16 %v923, %v919
    %v1132 = vpack.c.b16 %v924, %v920
    %v1133 = vpack.c.b16 %v925, %v921
    %v1134 = vpack.c.b16 %v926, %v922
    %v1135 = vpack.c.b16 %v931, %v927
    %v1136 = vpack.c.b16 %v932, %v928
    %v1137 = vpack.c.b16 %v933, %v929
    %v1138 = vpack.c.b16 %v934, %v930
    %v1139 = vpack.c.b16 %v939, %v935
    %v1140 = vpack.c.b16 %v940, %v936
    %v1141 = vpack.c.b16 %v941, %v937
    %v1142 = vpack.c.b16 %v942, %v938
    %v1143 = vpack.c.b16 %v947, %v943
    %v1144 = vpack.c.b16 %v948, %v944
    %v1145 = vpack.c.b16 %v949, %v945
    %v1146 = vpack.c.b16 %v950, %v946
    %vm1343 = vcmask 130048
    %v1345 = vsel %vm1343, %v356, 0
    %1347 = vmatpush.bf16.msra.mxu0 %v979
    %1348 = vmatpush.bf16.msra.mxu0 %v975
    %1349 = vmatpush.bf16.msra.mxu0 %v971
    %1350 = vmatpush.bf16.msra.mxu0 %v967
    %1351 = vmatpush.bf16.msra.mxu0 %v963
    %1352 = vmatpush.bf16.msra.mxu0 %v959
    %1353 = vmatpush.bf16.msra.mxu0 %v955
    %1354 = vmatpush.bf16.msra.mxu0 %v951
    %1355 = vmatmul.bf16.gmra.mxu0 %v350
    %v1356 = vpop.f32.mrf.mxu0
    %v1357 = vadd.f32 %v297, %v1356
    %v1358 = vpop.f32.mrf.mxu0
    %1359 = vdwg.mxu0
    %1360 = vmatpush.bf16.msra.mxu0 %v1011
    %1361 = vmatpush.bf16.msra.mxu0 %v1007
    %1362 = vmatpush.bf16.msra.mxu0 %v1003
    %1363 = vmatpush.bf16.msra.mxu0 %v999
    %1364 = vmatpush.bf16.msra.mxu0 %v995
    %1365 = vmatpush.bf16.msra.mxu0 %v991
    %1366 = vmatpush.bf16.msra.mxu0 %v987
    %1367 = vmatpush.bf16.msra.mxu0 %v983
    %1368 = vmatmul.bf16.gmra.mxu0 %v351
    %v1369 = vpop.f32.mrf.mxu0
    %v1370 = vadd.f32 %v1357, %v1369
    %v1371 = vpop.f32.mrf.mxu0
    %1372 = vdwg.mxu0
    %1373 = vmatpush.bf16.msra.mxu0 %v1043
    %1374 = vmatpush.bf16.msra.mxu0 %v1039
    %1375 = vmatpush.bf16.msra.mxu0 %v1035
    %1376 = vmatpush.bf16.msra.mxu0 %v1031
    %1377 = vmatpush.bf16.msra.mxu0 %v1027
    %1378 = vmatpush.bf16.msra.mxu0 %v1023
    %1379 = vmatpush.bf16.msra.mxu0 %v1019
    %1380 = vmatpush.bf16.msra.mxu0 %v1015
    %1381 = vmatmul.bf16.gmra.mxu0 %v352
    %v1382 = vpop.f32.mrf.mxu0
    %v1383 = vadd.f32 %v1370, %v1382
    %v1384 = vpop.f32.mrf.mxu0
    %1385 = vdwg.mxu0
    %1386 = vmatpush.bf16.msra.mxu0 %v1075
    %1387 = vmatpush.bf16.msra.mxu0 %v1071
    %1388 = vmatpush.bf16.msra.mxu0 %v1067
    %1389 = vmatpush.bf16.msra.mxu0 %v1063
    %1390 = vmatpush.bf16.msra.mxu0 %v1059
    %1391 = vmatpush.bf16.msra.mxu0 %v1055
    %1392 = vmatpush.bf16.msra.mxu0 %v1051
    %1393 = vmatpush.bf16.msra.mxu0 %v1047
    %1394 = vmatmul.bf16.gmra.mxu0 %v353
    %v1395 = vpop.f32.mrf.mxu0
    %v1396 = vadd.f32 %v1383, %v1395
    %v1397 = vpop.f32.mrf.mxu0
    %1398 = vdwg.mxu0
    %1399 = vmatpush.bf16.msra.mxu0 %v1107
    %1400 = vmatpush.bf16.msra.mxu0 %v1103
    %1401 = vmatpush.bf16.msra.mxu0 %v1099
    %1402 = vmatpush.bf16.msra.mxu0 %v1095
    %1403 = vmatpush.bf16.msra.mxu0 %v1091
    %1404 = vmatpush.bf16.msra.mxu0 %v1087
    %1405 = vmatpush.bf16.msra.mxu0 %v1083
    %1406 = vmatpush.bf16.msra.mxu0 %v1079
    %1407 = vmatmul.bf16.gmra.mxu0 %v354
    %v1408 = vpop.f32.mrf.mxu0
    %v1409 = vadd.f32 %v1396, %v1408
    %v1410 = vpop.f32.mrf.mxu0
    %1411 = vdwg.mxu0
    %1412 = vmatpush.bf16.msra.mxu0 %v1139
    %1413 = vmatpush.bf16.msra.mxu0 %v1135
    %1414 = vmatpush.bf16.msra.mxu0 %v1131
    %1415 = vmatpush.bf16.msra.mxu0 %v1127
    %1416 = vmatpush.bf16.msra.mxu0 %v1123
    %1417 = vmatpush.bf16.msra.mxu0 %v1119
    %1418 = vmatpush.bf16.msra.mxu0 %v1115
    %1419 = vmatpush.bf16.msra.mxu0 %v1111
    %1420 = vmatmul.bf16.gmra.mxu0 %v355
    %v1421 = vpop.f32.mrf.mxu0
    %v1422 = vadd.f32 %v1409, %v1421
    %v1423 = vpop.f32.mrf.mxu0
    %1424 = vdwg.mxu0
    %1425 = vmatpush.bf16.msra.mxu0 0
    %1426 = vmatpush.bf16.msra.mxu0 0
    %1427 = vmatpush.bf16.msra.mxu0 0
    %1428 = vmatpush.bf16.msra.mxu0 0
    %1429 = vmatpush.bf16.msra.mxu0 0
    %1430 = vmatpush.bf16.msra.mxu0 0
    %1431 = vmatpush.bf16.msra.mxu0 0
    %1432 = vmatpush.bf16.msra.mxu0 %v1143
    %1433 = vmatmul.bf16.gmra.mxu0 %v1345
    %v1434 = vpop.f32.mrf.mxu0
    %v1435 = vadd.f32 %v1422, %v1434
    %v1436 = vpop.f32.mrf.mxu0
    %1437 = vdwg.mxu0
    %1438 = vmatpush.bf16.msra.mxu0 %v980
    %1439 = vmatpush.bf16.msra.mxu0 %v976
    %1440 = vmatpush.bf16.msra.mxu0 %v972
    %1441 = vmatpush.bf16.msra.mxu0 %v968
    %1442 = vmatpush.bf16.msra.mxu0 %v964
    %1443 = vmatpush.bf16.msra.mxu0 %v960
    %1444 = vmatpush.bf16.msra.mxu0 %v956
    %1445 = vmatpush.bf16.msra.mxu0 %v952
    %1446 = vmatmul.bf16.gmra.mxu0 %v350
    %v1447 = vpop.f32.mrf.mxu0
    %v1448 = vadd.f32 %v310, %v1447
    %v1449 = vpop.f32.mrf.mxu0
    %1450 = vdwg.mxu0
    %1451 = vmatpush.bf16.msra.mxu0 %v1012
    %1452 = vmatpush.bf16.msra.mxu0 %v1008
    %1453 = vmatpush.bf16.msra.mxu0 %v1004
    %1454 = vmatpush.bf16.msra.mxu0 %v1000
    %1455 = vmatpush.bf16.msra.mxu0 %v996
    %1456 = vmatpush.bf16.msra.mxu0 %v992
    %1457 = vmatpush.bf16.msra.mxu0 %v988
    %1458 = vmatpush.bf16.msra.mxu0 %v984
    %1459 = vmatmul.bf16.gmra.mxu0 %v351
    %v1460 = vpop.f32.mrf.mxu0
    %v1461 = vadd.f32 %v1448, %v1460
    %v1462 = vpop.f32.mrf.mxu0
    %1463 = vdwg.mxu0
    %1464 = vmatpush.bf16.msra.mxu0 %v1044
    %1465 = vmatpush.bf16.msra.mxu0 %v1040
    %1466 = vmatpush.bf16.msra.mxu0 %v1036
    %1467 = vmatpush.bf16.msra.mxu0 %v1032
    %1468 = vmatpush.bf16.msra.mxu0 %v1028
    %1469 = vmatpush.bf16.msra.mxu0 %v1024
    %1470 = vmatpush.bf16.msra.mxu0 %v1020
    %1471 = vmatpush.bf16.msra.mxu0 %v1016
    %1472 = vmatmul.bf16.gmra.mxu0 %v352
    %v1473 = vpop.f32.mrf.mxu0
    %v1474 = vadd.f32 %v1461, %v1473
    %v1475 = vpop.f32.mrf.mxu0
    %1476 = vdwg.mxu0
    %1477 = vmatpush.bf16.msra.mxu0 %v1076
    %1478 = vmatpush.bf16.msra.mxu0 %v1072
    %1479 = vmatpush.bf16.msra.mxu0 %v1068
    %1480 = vmatpush.bf16.msra.mxu0 %v1064
    %1481 = vmatpush.bf16.msra.mxu0 %v1060
    %1482 = vmatpush.bf16.msra.mxu0 %v1056
    %1483 = vmatpush.bf16.msra.mxu0 %v1052
    %1484 = vmatpush.bf16.msra.mxu0 %v1048
    %1485 = vmatmul.bf16.gmra.mxu0 %v353
    %v1486 = vpop.f32.mrf.mxu0
    %v1487 = vadd.f32 %v1474, %v1486
    %v1488 = vpop.f32.mrf.mxu0
    %1489 = vdwg.mxu0
    %1490 = vmatpush.bf16.msra.mxu0 %v1108
    %1491 = vmatpush.bf16.msra.mxu0 %v1104
    %1492 = vmatpush.bf16.msra.mxu0 %v1100
    %1493 = vmatpush.bf16.msra.mxu0 %v1096
    %1494 = vmatpush.bf16.msra.mxu0 %v1092
    %1495 = vmatpush.bf16.msra.mxu0 %v1088
    %1496 = vmatpush.bf16.msra.mxu0 %v1084
    %1497 = vmatpush.bf16.msra.mxu0 %v1080
    %1498 = vmatmul.bf16.gmra.mxu0 %v354
    %v1499 = vpop.f32.mrf.mxu0
    %v1500 = vadd.f32 %v1487, %v1499
    %v1501 = vpop.f32.mrf.mxu0
    %1502 = vdwg.mxu0
    %1503 = vmatpush.bf16.msra.mxu0 %v1140
    %1504 = vmatpush.bf16.msra.mxu0 %v1136
    %1505 = vmatpush.bf16.msra.mxu0 %v1132
    %1506 = vmatpush.bf16.msra.mxu0 %v1128
    %1507 = vmatpush.bf16.msra.mxu0 %v1124
    %1508 = vmatpush.bf16.msra.mxu0 %v1120
    %1509 = vmatpush.bf16.msra.mxu0 %v1116
    %1510 = vmatpush.bf16.msra.mxu0 %v1112
    %1511 = vmatmul.bf16.gmra.mxu0 %v355
    %v1512 = vpop.f32.mrf.mxu0
    %v1513 = vadd.f32 %v1500, %v1512
    %v1514 = vpop.f32.mrf.mxu0
    %1515 = vdwg.mxu0
    %1516 = vmatpush.bf16.msra.mxu0 0
    %1517 = vmatpush.bf16.msra.mxu0 0
    %1518 = vmatpush.bf16.msra.mxu0 0
    %1519 = vmatpush.bf16.msra.mxu0 0
    %1520 = vmatpush.bf16.msra.mxu0 0
    %1521 = vmatpush.bf16.msra.mxu0 0
    %1522 = vmatpush.bf16.msra.mxu0 0
    %1523 = vmatpush.bf16.msra.mxu0 %v1144
    %1524 = vmatmul.bf16.gmra.mxu0 %v1345
    %v1525 = vpop.f32.mrf.mxu0
    %v1526 = vadd.f32 %v1513, %v1525
    %v1527 = vpop.f32.mrf.mxu0
    %1528 = vdwg.mxu0
    %1529 = vmatpush.bf16.msra.mxu0 %v981
    %1530 = vmatpush.bf16.msra.mxu0 %v977
    %1531 = vmatpush.bf16.msra.mxu0 %v973
    %1532 = vmatpush.bf16.msra.mxu0 %v969
    %1533 = vmatpush.bf16.msra.mxu0 %v965
    %1534 = vmatpush.bf16.msra.mxu0 %v961
    %1535 = vmatpush.bf16.msra.mxu0 %v957
    %1536 = vmatpush.bf16.msra.mxu0 %v953
    %1537 = vmatmul.bf16.gmra.mxu0 %v350
    %v1538 = vpop.f32.mrf.mxu0
    %v1539 = vadd.f32 %v323, %v1538
    %v1540 = vpop.f32.mrf.mxu0
    %1541 = vdwg.mxu0
    %1542 = vmatpush.bf16.msra.mxu0 %v1013
    %1543 = vmatpush.bf16.msra.mxu0 %v1009
    %1544 = vmatpush.bf16.msra.mxu0 %v1005
    %1545 = vmatpush.bf16.msra.mxu0 %v1001
    %1546 = vmatpush.bf16.msra.mxu0 %v997
    %1547 = vmatpush.bf16.msra.mxu0 %v993
    %1548 = vmatpush.bf16.msra.mxu0 %v989
    %1549 = vmatpush.bf16.msra.mxu0 %v985
    %1550 = vmatmul.bf16.gmra.mxu0 %v351
    %v1551 = vpop.f32.mrf.mxu0
    %v1552 = vadd.f32 %v1539, %v1551
    %v1553 = vpop.f32.mrf.mxu0
    %1554 = vdwg.mxu0
    %1555 = vmatpush.bf16.msra.mxu0 %v1045
    %1556 = vmatpush.bf16.msra.mxu0 %v1041
    %1557 = vmatpush.bf16.msra.mxu0 %v1037
    %1558 = vmatpush.bf16.msra.mxu0 %v1033
    %1559 = vmatpush.bf16.msra.mxu0 %v1029
    %1560 = vmatpush.bf16.msra.mxu0 %v1025
    %1561 = vmatpush.bf16.msra.mxu0 %v1021
    %1562 = vmatpush.bf16.msra.mxu0 %v1017
    %1563 = vmatmul.bf16.gmra.mxu0 %v352
    %v1564 = vpop.f32.mrf.mxu0
    %v1565 = vadd.f32 %v1552, %v1564
    %v1566 = vpop.f32.mrf.mxu0
    %1567 = vdwg.mxu0
    %1568 = vmatpush.bf16.msra.mxu0 %v1077
    %1569 = vmatpush.bf16.msra.mxu0 %v1073
    %1570 = vmatpush.bf16.msra.mxu0 %v1069
    %1571 = vmatpush.bf16.msra.mxu0 %v1065
    %1572 = vmatpush.bf16.msra.mxu0 %v1061
    %1573 = vmatpush.bf16.msra.mxu0 %v1057
    %1574 = vmatpush.bf16.msra.mxu0 %v1053
    %1575 = vmatpush.bf16.msra.mxu0 %v1049
    %1576 = vmatmul.bf16.gmra.mxu0 %v353
    %v1577 = vpop.f32.mrf.mxu0
    %v1578 = vadd.f32 %v1565, %v1577
    %v1579 = vpop.f32.mrf.mxu0
    %1580 = vdwg.mxu0
    %1581 = vmatpush.bf16.msra.mxu0 %v1109
    %1582 = vmatpush.bf16.msra.mxu0 %v1105
    %1583 = vmatpush.bf16.msra.mxu0 %v1101
    %1584 = vmatpush.bf16.msra.mxu0 %v1097
    %1585 = vmatpush.bf16.msra.mxu0 %v1093
    %1586 = vmatpush.bf16.msra.mxu0 %v1089
    %1587 = vmatpush.bf16.msra.mxu0 %v1085
    %1588 = vmatpush.bf16.msra.mxu0 %v1081
    %1589 = vmatmul.bf16.gmra.mxu0 %v354
    %v1590 = vpop.f32.mrf.mxu0
    %v1591 = vadd.f32 %v1578, %v1590
    %v1592 = vpop.f32.mrf.mxu0
    %1593 = vdwg.mxu0
    %1594 = vmatpush.bf16.msra.mxu0 %v1141
    %1595 = vmatpush.bf16.msra.mxu0 %v1137
    %1596 = vmatpush.bf16.msra.mxu0 %v1133
    %1597 = vmatpush.bf16.msra.mxu0 %v1129
    %1598 = vmatpush.bf16.msra.mxu0 %v1125
    %1599 = vmatpush.bf16.msra.mxu0 %v1121
    %1600 = vmatpush.bf16.msra.mxu0 %v1117
    %1601 = vmatpush.bf16.msra.mxu0 %v1113
    %1602 = vmatmul.bf16.gmra.mxu0 %v355
    %v1603 = vpop.f32.mrf.mxu0
    %v1604 = vadd.f32 %v1591, %v1603
    %v1605 = vpop.f32.mrf.mxu0
    %1606 = vdwg.mxu0
    %1607 = vmatpush.bf16.msra.mxu0 0
    %1608 = vmatpush.bf16.msra.mxu0 0
    %1609 = vmatpush.bf16.msra.mxu0 0
    %1610 = vmatpush.bf16.msra.mxu0 0
    %1611 = vmatpush.bf16.msra.mxu0 0
    %1612 = vmatpush.bf16.msra.mxu0 0
    %1613 = vmatpush.bf16.msra.mxu0 0
    %1614 = vmatpush.bf16.msra.mxu0 %v1145
    %1615 = vmatmul.bf16.gmra.mxu0 %v1345
    %v1616 = vpop.f32.mrf.mxu0
    %v1617 = vadd.f32 %v1604, %v1616
    %v1618 = vpop.f32.mrf.mxu0
    %1619 = vdwg.mxu0
    %1620 = vmatpush.bf16.msra.mxu0 %v982
    %1621 = vmatpush.bf16.msra.mxu0 %v978
    %1622 = vmatpush.bf16.msra.mxu0 %v974
    %1623 = vmatpush.bf16.msra.mxu0 %v970
    %1624 = vmatpush.bf16.msra.mxu0 %v966
    %1625 = vmatpush.bf16.msra.mxu0 %v962
    %1626 = vmatpush.bf16.msra.mxu0 %v958
    %1627 = vmatpush.bf16.msra.mxu0 %v954
    %1628 = vmatmul.bf16.gmra.mxu0 %v350
    %v1629 = vpop.f32.mrf.mxu0
    %v1630 = vadd.f32 %v336, %v1629
    %v1631 = vpop.f32.mrf.mxu0
    %1632 = vdwg.mxu0
    %1633 = vmatpush.bf16.msra.mxu0 %v1014
    %1634 = vmatpush.bf16.msra.mxu0 %v1010
    %1635 = vmatpush.bf16.msra.mxu0 %v1006
    %1636 = vmatpush.bf16.msra.mxu0 %v1002
    %1637 = vmatpush.bf16.msra.mxu0 %v998
    %1638 = vmatpush.bf16.msra.mxu0 %v994
    %1639 = vmatpush.bf16.msra.mxu0 %v990
    %1640 = vmatpush.bf16.msra.mxu0 %v986
    %1641 = vmatmul.bf16.gmra.mxu0 %v351
    %v1642 = vpop.f32.mrf.mxu0
    %v1643 = vadd.f32 %v1630, %v1642
    %v1644 = vpop.f32.mrf.mxu0
    %1645 = vdwg.mxu0
    %1646 = vmatpush.bf16.msra.mxu0 %v1046
    %1647 = vmatpush.bf16.msra.mxu0 %v1042
    %1648 = vmatpush.bf16.msra.mxu0 %v1038
    %1649 = vmatpush.bf16.msra.mxu0 %v1034
    %1650 = vmatpush.bf16.msra.mxu0 %v1030
    %1651 = vmatpush.bf16.msra.mxu0 %v1026
    %1652 = vmatpush.bf16.msra.mxu0 %v1022
    %1653 = vmatpush.bf16.msra.mxu0 %v1018
    %1654 = vmatmul.bf16.gmra.mxu0 %v352
    %v1655 = vpop.f32.mrf.mxu0
    %v1656 = vadd.f32 %v1643, %v1655
    %v1657 = vpop.f32.mrf.mxu0
    %1658 = vdwg.mxu0
    %1659 = vmatpush.bf16.msra.mxu0 %v1078
    %1660 = vmatpush.bf16.msra.mxu0 %v1074
    %1661 = vmatpush.bf16.msra.mxu0 %v1070
    %1662 = vmatpush.bf16.msra.mxu0 %v1066
    %1663 = vmatpush.bf16.msra.mxu0 %v1062
    %1664 = vmatpush.bf16.msra.mxu0 %v1058
    %1665 = vmatpush.bf16.msra.mxu0 %v1054
    %1666 = vmatpush.bf16.msra.mxu0 %v1050
    %1667 = vmatmul.bf16.gmra.mxu0 %v353
    %v1668 = vpop.f32.mrf.mxu0
    %v1669 = vadd.f32 %v1656, %v1668
    %v1670 = vpop.f32.mrf.mxu0
    %1671 = vdwg.mxu0
    %1672 = vmatpush.bf16.msra.mxu0 %v1110
    %1673 = vmatpush.bf16.msra.mxu0 %v1106
    %1674 = vmatpush.bf16.msra.mxu0 %v1102
    %1675 = vmatpush.bf16.msra.mxu0 %v1098
    %1676 = vmatpush.bf16.msra.mxu0 %v1094
    %1677 = vmatpush.bf16.msra.mxu0 %v1090
    %1678 = vmatpush.bf16.msra.mxu0 %v1086
    %1679 = vmatpush.bf16.msra.mxu0 %v1082
    %1680 = vmatmul.bf16.gmra.mxu0 %v354
    %v1681 = vpop.f32.mrf.mxu0
    %v1682 = vadd.f32 %v1669, %v1681
    %v1683 = vpop.f32.mrf.mxu0
    %1684 = vdwg.mxu0
    %1685 = vmatpush.bf16.msra.mxu0 %v1142
    %1686 = vmatpush.bf16.msra.mxu0 %v1138
    %1687 = vmatpush.bf16.msra.mxu0 %v1134
    %1688 = vmatpush.bf16.msra.mxu0 %v1130
    %1689 = vmatpush.bf16.msra.mxu0 %v1126
    %1690 = vmatpush.bf16.msra.mxu0 %v1122
    %1691 = vmatpush.bf16.msra.mxu0 %v1118
    %1692 = vmatpush.bf16.msra.mxu0 %v1114
    %1693 = vmatmul.bf16.gmra.mxu0 %v355
    %v1694 = vpop.f32.mrf.mxu0
    %v1695 = vadd.f32 %v1682, %v1694
    %v1696 = vpop.f32.mrf.mxu0
    %1697 = vdwg.mxu0
    %1698 = vmatpush.bf16.msra.mxu0 0
    %1699 = vmatpush.bf16.msra.mxu0 0
    %1700 = vmatpush.bf16.msra.mxu0 0
    %1701 = vmatpush.bf16.msra.mxu0 0
    %1702 = vmatpush.bf16.msra.mxu0 0
    %1703 = vmatpush.bf16.msra.mxu0 0
    %1704 = vmatpush.bf16.msra.mxu0 0
    %1705 = vmatpush.bf16.msra.mxu0 %v1146
    %1706 = vmatmul.bf16.gmra.mxu0 %v1345
    %v1707 = vpop.f32.mrf.mxu0
    %v1708 = vadd.f32 %v1695, %v1707
    %v1709 = vpop.f32.mrf.mxu0
    %1710 = vdwg.mxu0
    %v1711 = vld [vmem:[%s5] sm:$0xf]
    %v1713 = vperm.slane %v1711, 0
    %v1714 = vperm.slane %v1711, 1
    %v1715 = vperm.slane %v1711, 2
    %v1716 = vperm.slane %v1711, 3
    %v1721 = vadd.f32 %v1435, %v1713
    %v1722 = vadd.f32 %v1526, %v1714
    %v1723 = vadd.f32 %v1617, %v1715
    %v1724 = vadd.f32 %v1708, %v1716
    %v1725 = vmax.f32 %v1721, 0.0
    %v1726 = vmax.f32 %v1722, 0.0
    %v1727 = vmax.f32 %v1723, 0.0
    %v1728 = vmax.f32 %v1724, 0.0
    %v1729 = vpack.c.bf16 %v1725, %v1725
    %v1730 = vpack.c.bf16 %v1726, %v1726
    %v1731 = vpack.c.bf16 %v1727, %v1727
    %v1732 = vpack.c.bf16 %v1728, %v1728
    %v1733 = vld [vmem:[%s6] sm:$0xf]
    %v1734 = vld [vmem:[%s6 + $0x4] sm:$0xf]
    %v1735 = vld [vmem:[%s6 + $0x8] sm:$0xf]
    %v1736 = vld [vmem:[%s6 + $0xc] sm:$0xf]
    %v1737 = vld [vmem:[%s6 + $0x10] sm:$0xf]
    %v1738 = vld [vmem:[%s6 + $0x14] sm:$0xf]
    %v1739 = vld [vmem:[%s6 + $0x18] sm:$0xf]
    %v1740 = vld [vmem:[%s6 + $0x1c] sm:$0xf]
    %v1741 = vld [vmem:[%s6 + $0x20] sm:$0xf]
    %v1742 = vld [vmem:[%s6 + $0x24] sm:$0xf]
    %v1743 = vld [vmem:[%s6 + $0x28] sm:$0xf]
    %v1744 = vld [vmem:[%s6 + $0x2c] sm:$0xf]
    %v1745 = vld [vmem:[%s6 + $0x30] sm:$0xf]
    %v1746 = vld [vmem:[%s6 + $0x34] sm:$0xf]
    %v1747 = vld [vmem:[%s6 + $0x38] sm:$0xf]
    %v1748 = vld [vmem:[%s6 + $0x3c] sm:$0xf]
    %v1749 = vld [vmem:[%s6 + $0x40] sm:$0xf]
    %v1750 = vld [vmem:[%s6 + $0x44] sm:$0xf]
    %v1751 = vld [vmem:[%s6 + $0x48] sm:$0xf]
    %v1752 = vld [vmem:[%s6 + $0x4c] sm:$0xf]
    %v1753 = vld [vmem:[%s6 + $0x50] sm:$0xf]
    %v1754 = vld [vmem:[%s6 + $0x54] sm:$0xf]
    %v1755 = vld [vmem:[%s6 + $0x58] sm:$0xf]
    %v1756 = vld [vmem:[%s6 + $0x5c] sm:$0xf]
    %v1757 = vld [vmem:[%s6 + $0x60] sm:$0xf]
    %v1758 = vld [vmem:[%s6 + $0x64] sm:$0xf]
    %v1759 = vld [vmem:[%s6 + $0x68] sm:$0xf]
    %v1760 = vld [vmem:[%s6 + $0x6c] sm:$0xf]
    %v1761 = vld [vmem:[%s6 + $0x70] sm:$0xf]
    %v1762 = vld [vmem:[%s6 + $0x74] sm:$0xf]
    %v1763 = vld [vmem:[%s6 + $0x78] sm:$0xf]
    %v1764 = vld [vmem:[%s6 + $0x7c] sm:$0xf]
    %v1765 = vld [vmem:[%s6 + $0x80] sm:$0xf]
    %v1766 = vld [vmem:[%s6 + $0x84] sm:$0xf]
    %v1767 = vld [vmem:[%s6 + $0x88] sm:$0xf]
    %v1768 = vld [vmem:[%s6 + $0x8c] sm:$0xf]
    %v1769 = vld [vmem:[%s6 + $0x90] sm:$0xf]
    %v1770 = vld [vmem:[%s6 + $0x94] sm:$0xf]
    %v1771 = vld [vmem:[%s6 + $0x98] sm:$0xf]
    %v1772 = vld [vmem:[%s6 + $0x9c] sm:$0xf]
    %v1773 = vld [vmem:[%s6 + $0xa0] sm:$0xf]
    %v1774 = vld [vmem:[%s6 + $0xa4] sm:$0xf]
    %v1775 = vld [vmem:[%s6 + $0xa8] sm:$0xf]
    %v1776 = vld [vmem:[%s6 + $0xac] sm:$0xf]
    %v1777 = vld [vmem:[%s6 + $0xb0] sm:$0xf]
    %v1778 = vld [vmem:[%s6 + $0xb4] sm:$0xf]
    %v1779 = vld [vmem:[%s6 + $0xb8] sm:$0xf]
    %v1780 = vld [vmem:[%s6 + $0xbc] sm:$0xf]
    %v1781 = vld [vmem:[%s6 + $0xc0] sm:$0xf]
    %v1782 = vld [vmem:[%s6 + $0xc4] sm:$0xf]
    %v1783 = vld [vmem:[%s7] sm:$0x1]
    %v1785 = vperm.slane %v1783, 0
    %v1837 = vunpack.c.l.b16 %v1733
    %v1838 = vunpack.c.l.b16 %v1734
    %v1839 = vunpack.c.l.b16 %v1735
    %v1840 = vunpack.c.l.b16 %v1736
    %v1841 = vunpack.c.l.b16 %v1737
    %v1842 = vunpack.c.l.b16 %v1738
    %v1843 = vunpack.c.l.b16 %v1739
    %v1844 = vunpack.c.l.b16 %v1740
    %v1845 = vunpack.c.l.b16 %v1741
    %v1846 = vunpack.c.l.b16 %v1742
    %v1847 = vunpack.c.l.b16 %v1743
    %v1848 = vunpack.c.l.b16 %v1744
    %v1849 = vunpack.c.l.b16 %v1745
    %v1850 = vunpack.c.l.b16 %v1746
    %v1851 = vunpack.c.l.b16 %v1747
    %v1852 = vunpack.c.l.b16 %v1748
    %v1853 = vunpack.c.l.b16 %v1749
    %v1854 = vunpack.c.l.b16 %v1750
    %v1855 = vunpack.c.l.b16 %v1751
    %v1856 = vunpack.c.l.b16 %v1752
    %v1857 = vunpack.c.l.b16 %v1753
    %v1858 = vunpack.c.l.b16 %v1754
    %v1859 = vunpack.c.l.b16 %v1755
    %v1860 = vunpack.c.l.b16 %v1756
    %v1861 = vunpack.c.l.b16 %v1757
    %v1862 = vunpack.c.l.b16 %v1758
    %v1863 = vunpack.c.l.b16 %v1759
    %v1864 = vunpack.c.l.b16 %v1760
    %v1865 = vunpack.c.l.b16 %v1761
    %v1866 = vunpack.c.l.b16 %v1762
    %v1867 = vunpack.c.l.b16 %v1763
    %v1868 = vunpack.c.l.b16 %v1764
    %v1869 = vunpack.c.l.b16 %v1765
    %v1870 = vunpack.c.l.b16 %v1766
    %v1871 = vunpack.c.l.b16 %v1767
    %v1872 = vunpack.c.l.b16 %v1768
    %v1873 = vunpack.c.l.b16 %v1769
    %v1874 = vunpack.c.l.b16 %v1770
    %v1875 = vunpack.c.l.b16 %v1771
    %v1876 = vunpack.c.l.b16 %v1772
    %v1877 = vunpack.c.l.b16 %v1773
    %v1878 = vunpack.c.l.b16 %v1774
    %v1879 = vunpack.c.l.b16 %v1775
    %v1880 = vunpack.c.l.b16 %v1776
    %v1881 = vunpack.c.l.b16 %v1777
    %v1882 = vunpack.c.l.b16 %v1778
    %v1883 = vunpack.c.l.b16 %v1779
    %v1884 = vunpack.c.l.b16 %v1780
    %v1885 = vunpack.c.l.b16 %v1781
    %v1886 = vunpack.c.l.b16 %v1782
    %v1887 = vpack.c.b16 %v1838, %v1837
    %v1888 = vpack.c.b16 %v1840, %v1839
    %v1889 = vpack.c.b16 %v1842, %v1841
    %v1890 = vpack.c.b16 %v1844, %v1843
    %v1891 = vpack.c.b16 %v1846, %v1845
    %v1892 = vpack.c.b16 %v1848, %v1847
    %v1893 = vpack.c.b16 %v1850, %v1849
    %v1894 = vpack.c.b16 %v1852, %v1851
    %v1895 = vpack.c.b16 %v1854, %v1853
    %v1896 = vpack.c.b16 %v1856, %v1855
    %v1897 = vpack.c.b16 %v1858, %v1857
    %v1898 = vpack.c.b16 %v1860, %v1859
    %v1899 = vpack.c.b16 %v1862, %v1861
    %v1900 = vpack.c.b16 %v1864, %v1863
    %v1901 = vpack.c.b16 %v1866, %v1865
    %v1902 = vpack.c.b16 %v1868, %v1867
    %v1903 = vpack.c.b16 %v1870, %v1869
    %v1904 = vpack.c.b16 %v1872, %v1871
    %v1905 = vpack.c.b16 %v1874, %v1873
    %v1906 = vpack.c.b16 %v1876, %v1875
    %v1907 = vpack.c.b16 %v1878, %v1877
    %v1908 = vpack.c.b16 %v1880, %v1879
    %v1909 = vpack.c.b16 %v1882, %v1881
    %v1910 = vpack.c.b16 %v1884, %v1883
    %v1911 = vpack.c.b16 %v1886, %v1885
    %v1938 = vsel %vm1343, %v1732, 0
    %1940 = vmatpush.bf16.msra.mxu0 %v1894
    %1941 = vmatpush.bf16.msra.mxu0 %v1893
    %1942 = vmatpush.bf16.msra.mxu0 %v1892
    %1943 = vmatpush.bf16.msra.mxu0 %v1891
    %1944 = vmatpush.bf16.msra.mxu0 %v1890
    %1945 = vmatpush.bf16.msra.mxu0 %v1889
    %1946 = vmatpush.bf16.msra.mxu0 %v1888
    %1947 = vmatpush.bf16.msra.mxu0 %v1887
    %1948 = vmatmul.bf16.gmra.mxu0 %v1729
    %v1949 = vpop.f32.mrf.mxu0
    %v1950 = vadd.f32 %v1785, %v1949
    %v1951 = vpop.f32.mrf.mxu0
    %1952 = vdwg.mxu0
    %1953 = vmatpush.bf16.msra.mxu0 %v1902
    %1954 = vmatpush.bf16.msra.mxu0 %v1901
    %1955 = vmatpush.bf16.msra.mxu0 %v1900
    %1956 = vmatpush.bf16.msra.mxu0 %v1899
    %1957 = vmatpush.bf16.msra.mxu0 %v1898
    %1958 = vmatpush.bf16.msra.mxu0 %v1897
    %1959 = vmatpush.bf16.msra.mxu0 %v1896
    %1960 = vmatpush.bf16.msra.mxu0 %v1895
    %1961 = vmatmul.bf16.gmra.mxu0 %v1730
    %v1962 = vpop.f32.mrf.mxu0
    %v1963 = vadd.f32 %v1950, %v1962
    %v1964 = vpop.f32.mrf.mxu0
    %1965 = vdwg.mxu0
    %1966 = vmatpush.bf16.msra.mxu0 %v1910
    %1967 = vmatpush.bf16.msra.mxu0 %v1909
    %1968 = vmatpush.bf16.msra.mxu0 %v1908
    %1969 = vmatpush.bf16.msra.mxu0 %v1907
    %1970 = vmatpush.bf16.msra.mxu0 %v1906
    %1971 = vmatpush.bf16.msra.mxu0 %v1905
    %1972 = vmatpush.bf16.msra.mxu0 %v1904
    %1973 = vmatpush.bf16.msra.mxu0 %v1903
    %1974 = vmatmul.bf16.gmra.mxu0 %v1731
    %v1975 = vpop.f32.mrf.mxu0
    %v1976 = vadd.f32 %v1963, %v1975
    %v1977 = vpop.f32.mrf.mxu0
    %1978 = vdwg.mxu0
    %1979 = vmatpush.bf16.msra.mxu0 0
    %1980 = vmatpush.bf16.msra.mxu0 0
    %1981 = vmatpush.bf16.msra.mxu0 0
    %1982 = vmatpush.bf16.msra.mxu0 0
    %1983 = vmatpush.bf16.msra.mxu0 0
    %1984 = vmatpush.bf16.msra.mxu0 0
    %1985 = vmatpush.bf16.msra.mxu0 0
    %1986 = vmatpush.bf16.msra.mxu0 %v1911
    %1987 = vmatmul.bf16.gmra.mxu0 %v1938
    %v1988 = vpop.f32.mrf.mxu0
    %v1989 = vadd.f32 %v1976, %v1988
    %v1990 = vpop.f32.mrf.mxu0
    %1991 = vdwg.mxu0
    %v1992 = vmul.f32 %v1989, 0.5
    %v1993 = vmul.f32 %v1992, 1.442695
    %v1994 = vpow.pop %v1993
    %1996 = vrot.lane.b32.xlu0 %v1994, 126
    %v1997 = vpop.permute.xlu0 %1996
    %v1999 = vmul.f32 %v53, %v1997
    %v2000 = vadd.f32 %v1989, %v1999
    %v2001 = vpack.c.bf16 %v2000, %v2000
    %v2002 = vld [vmem:[%s8] sm:$0xf]
    %v2003 = vld [vmem:[%s9] sm:$0xff]
    %v2004 = vld [vmem:[%s9 + $0x8] sm:$0xff]
    %v2005 = vld [vmem:[%s9 + $0x10] sm:$0x11]
    %v2006 = vld [vmem:[%s9 + $0x18] sm:$0x11]
    %v2011 = vunpack.c.l.b16 %v2003
    %v2012 = vunpack.c.h.b16 %v2003
    %v2013 = vunpack.c.l.b16 %v2004
    %v2014 = vunpack.c.h.b16 %v2004
    %v2015 = vunpack.c.l.b16 %v2005
    %v2016 = vunpack.c.h.b16 %v2005
    %v2017 = vunpack.c.l.b16 %v2006
    %v2018 = vunpack.c.h.b16 %v2006
    %v2019 = vpack.c.b16 %v2015, %v2011
    %v2020 = vpack.c.b16 %v2016, %v2012
    %v2021 = vpack.c.b16 %v2017, %v2013
    %v2022 = vpack.c.b16 %v2018, %v2014
    %v2024 = vsel %vm274, %v2019, 0
    %v2027 = vsel %vm274, %v2020, 0
    %v2030 = vsel %vm274, %v2021, 0
    %v2033 = vsel %vm274, %v2022, 0
    %2035 = vmatpush.bf16.msra.mxu0 0
    %2036 = vmatpush.bf16.msra.mxu0 0
    %2037 = vmatpush.bf16.msra.mxu0 0
    %2038 = vmatpush.bf16.msra.mxu0 0
    %2039 = vmatpush.bf16.msra.mxu0 0
    %2040 = vmatpush.bf16.msra.mxu0 0
    %2041 = vmatpush.bf16.msra.mxu0 0
    %2042 = vmatpush.bf16.msra.mxu0 %v2024
    %2043 = vmatmul.bf16.gmra.mxu0 %v272
    %v2044 = vpop.f32.mrf.mxu0
    %v2045 = vadd.f32 0.0, %v2044
    %v2046 = vpop.f32.mrf.mxu0
    %2047 = vdwg.mxu0
    %2048 = vmatpush.bf16.msra.mxu0 0
    %2049 = vmatpush.bf16.msra.mxu0 0
    %2050 = vmatpush.bf16.msra.mxu0 0
    %2051 = vmatpush.bf16.msra.mxu0 0
    %2052 = vmatpush.bf16.msra.mxu0 0
    %2053 = vmatpush.bf16.msra.mxu0 0
    %2054 = vmatpush.bf16.msra.mxu0 0
    %2055 = vmatpush.bf16.msra.mxu0 %v2027
    %2056 = vmatmul.bf16.gmra.mxu0 %v272
    %v2057 = vpop.f32.mrf.mxu0
    %v2058 = vadd.f32 0.0, %v2057
    %v2059 = vpop.f32.mrf.mxu0
    %2060 = vdwg.mxu0
    %2061 = vmatpush.bf16.msra.mxu0 0
    %2062 = vmatpush.bf16.msra.mxu0 0
    %2063 = vmatpush.bf16.msra.mxu0 0
    %2064 = vmatpush.bf16.msra.mxu0 0
    %2065 = vmatpush.bf16.msra.mxu0 0
    %2066 = vmatpush.bf16.msra.mxu0 0
    %2067 = vmatpush.bf16.msra.mxu0 0
    %2068 = vmatpush.bf16.msra.mxu0 %v2030
    %2069 = vmatmul.bf16.gmra.mxu0 %v272
    %v2070 = vpop.f32.mrf.mxu0
    %v2071 = vadd.f32 0.0, %v2070
    %v2072 = vpop.f32.mrf.mxu0
    %2073 = vdwg.mxu0
    %2074 = vmatpush.bf16.msra.mxu0 0
    %2075 = vmatpush.bf16.msra.mxu0 0
    %2076 = vmatpush.bf16.msra.mxu0 0
    %2077 = vmatpush.bf16.msra.mxu0 0
    %2078 = vmatpush.bf16.msra.mxu0 0
    %2079 = vmatpush.bf16.msra.mxu0 0
    %2080 = vmatpush.bf16.msra.mxu0 0
    %2081 = vmatpush.bf16.msra.mxu0 %v2033
    %2082 = vmatmul.bf16.gmra.mxu0 %v272
    %v2083 = vpop.f32.mrf.mxu0
    %v2084 = vadd.f32 0.0, %v2083
    %v2085 = vpop.f32.mrf.mxu0
    %2086 = vdwg.mxu0
    %2088 = vst [vmem:[#allocation1] ss:$9 sm:$0xff] %v2002
    %v2089 = vld [vmem:[#allocation1] sm:$0xff]
    %v2090 = vld [vmem:[#allocation1 + $0x9] sm:$0xff]
    %v2091 = vld [vmem:[#allocation1 + $0x12] sm:$0xff]
    %v2092 = vld [vmem:[#allocation1 + $0x1b] sm:$0xff]
    %vm2093 = vcmask 15360
    %v2095 = vsel %vm2093, %v2001, 0
    %vm2097 = vcmask 1040384
    %v2098 = vsel %vm2097, %v2089, 0
    %v2100 = vsel %vm2097, %v2090, 0
    %v2102 = vsel %vm2097, %v2091, 0
    %v2104 = vsel %vm2097, %v2092, 0
    %2106 = vmatpush.bf16.msra.mxu0 0
    %2107 = vmatpush.bf16.msra.mxu0 0
    %2108 = vmatpush.bf16.msra.mxu0 0
    %2109 = vmatpush.bf16.msra.mxu0 0
    %2110 = vmatpush.bf16.msra.mxu0 0
    %2111 = vmatpush.bf16.msra.mxu0 0
    %2112 = vmatpush.bf16.msra.mxu0 0
    %2113 = vmatpush.bf16.msra.mxu0 %v2098
    %2114 = vmatmul.bf16.gmra.mxu0 %v2095
    %v2115 = vpop.f32.mrf.mxu0
    %v2116 = vadd.f32 %v2045, %v2115
    %v2117 = vpop.f32.mrf.mxu0
    %2118 = vdwg.mxu0
    %2119 = vmatpush.bf16.msra.mxu0 0
    %2120 = vmatpush.bf16.msra.mxu0 0
    %2121 = vmatpush.bf16.msra.mxu0 0
    %2122 = vmatpush.bf16.msra.mxu0 0
    %2123 = vmatpush.bf16.msra.mxu0 0
    %2124 = vmatpush.bf16.msra.mxu0 0
    %2125 = vmatpush.bf16.msra.mxu0 0
    %2126 = vmatpush.bf16.msra.mxu0 %v2100
    %2127 = vmatmul.bf16.gmra.mxu0 %v2095
    %v2128 = vpop.f32.mrf.mxu0
    %v2129 = vadd.f32 %v2058, %v2128
    %v2130 = vpop.f32.mrf.mxu0
    %2131 = vdwg.mxu0
    %2132 = vmatpush.bf16.msra.mxu0 0
    %2133 = vmatpush.bf16.msra.mxu0 0
    %2134 = vmatpush.bf16.msra.mxu0 0
    %2135 = vmatpush.bf16.msra.mxu0 0
    %2136 = vmatpush.bf16.msra.mxu0 0
    %2137 = vmatpush.bf16.msra.mxu0 0
    %2138 = vmatpush.bf16.msra.mxu0 0
    %2139 = vmatpush.bf16.msra.mxu0 %v2102
    %2140 = vmatmul.bf16.gmra.mxu0 %v2095
    %v2141 = vpop.f32.mrf.mxu0
    %v2142 = vadd.f32 %v2071, %v2141
    %v2143 = vpop.f32.mrf.mxu0
    %2144 = vdwg.mxu0
    %2145 = vmatpush.bf16.msra.mxu0 0
    %2146 = vmatpush.bf16.msra.mxu0 0
    %2147 = vmatpush.bf16.msra.mxu0 0
    %2148 = vmatpush.bf16.msra.mxu0 0
    %2149 = vmatpush.bf16.msra.mxu0 0
    %2150 = vmatpush.bf16.msra.mxu0 0
    %2151 = vmatpush.bf16.msra.mxu0 0
    %2152 = vmatpush.bf16.msra.mxu0 %v2104
    %2153 = vmatmul.bf16.gmra.mxu0 %v2095
    %v2154 = vpop.f32.mrf.mxu0
    %v2155 = vadd.f32 %v2084, %v2154
    %v2156 = vpop.f32.mrf.mxu0
    %2157 = vdwg.mxu0
    %v2158 = vld [vmem:[%s10] sm:$0xf]
    %v2160 = vperm.slane %v2158, 0
    %v2161 = vperm.slane %v2158, 1
    %v2162 = vperm.slane %v2158, 2
    %v2163 = vperm.slane %v2158, 3
    %v2168 = vadd.f32 %v2116, %v2160
    %v2169 = vadd.f32 %v2129, %v2161
    %v2170 = vadd.f32 %v2142, %v2162
    %v2171 = vadd.f32 %v2155, %v2163
    %v2172 = vmax.f32 %v2168, 0.0
    %v2173 = vmax.f32 %v2169, 0.0
    %v2174 = vmax.f32 %v2170, 0.0
    %v2175 = vmax.f32 %v2171, 0.0
    %v2176 = vpack.c.bf16 %v2172, %v2172
    %v2177 = vpack.c.bf16 %v2173, %v2173
    %v2178 = vpack.c.bf16 %v2174, %v2174
    %v2179 = vpack.c.bf16 %v2175, %v2175
    %v2180 = vld [vmem:[%s11] sm:$0xff]
    %v2181 = vld [vmem:[%s11 + $0x8] sm:$0xff]
    %v2182 = vld [vmem:[%s11 + $0x10] sm:$0xff]
    %v2183 = vld [vmem:[%s11 + $0x18] sm:$0xf]
    %v2184 = vld [vmem:[%s11 + $0x1c] sm:$0xff]
    %v2185 = vld [vmem:[%s11 + $0x24] sm:$0xff]
    %v2186 = vld [vmem:[%s11 + $0x2c] sm:$0xff]
    %v2187 = vld [vmem:[%s11 + $0x34] sm:$0xf]
    %v2188 = vld [vmem:[%s11 + $0x38] sm:$0xff]
    %v2189 = vld [vmem:[%s11 + $0x40] sm:$0xff]
    %v2190 = vld [vmem:[%s11 + $0x48] sm:$0xff]
    %v2191 = vld [vmem:[%s11 + $0x50] sm:$0xf]
    %v2192 = vld [vmem:[%s11 + $0x54] sm:$0xff]
    %v2193 = vld [vmem:[%s11 + $0x5c] sm:$0xff]
    %v2194 = vld [vmem:[%s11 + $0x64] sm:$0xff]
    %v2195 = vld [vmem:[%s11 + $0x6c] sm:$0xf]
    %v2196 = vld [vmem:[%s11 + $0x70] sm:$0xff]
    %v2197 = vld [vmem:[%s11 + $0x78] sm:$0xff]
    %v2198 = vld [vmem:[%s11 + $0x80] sm:$0xff]
    %v2199 = vld [vmem:[%s11 + $0x88] sm:$0xf]
    %v2200 = vld [vmem:[%s11 + $0x8c] sm:$0xff]
    %v2201 = vld [vmem:[%s11 + $0x94] sm:$0xff]
    %v2202 = vld [vmem:[%s11 + $0x9c] sm:$0xff]
    %v2203 = vld [vmem:[%s11 + $0xa4] sm:$0xf]
    %v2204 = vld [vmem:[%s11 + $0xa8] sm:$0xff]
    %v2205 = vld [vmem:[%s11 + $0xb0] sm:$0xff]
    %v2206 = vld [vmem:[%s11 + $0xb8] sm:$0xff]
    %v2207 = vld [vmem:[%s11 + $0xc0] sm:$0xf]
    %v2208 = vld [vmem:[%s11 + $0xc4] sm:$0xff]
    %v2209 = vld [vmem:[%s11 + $0xcc] sm:$0xff]
    %v2210 = vld [vmem:[%s11 + $0xd4] sm:$0xff]
    %v2211 = vld [vmem:[%s11 + $0xdc] sm:$0xf]
    %v2212 = vld [vmem:[%s11 + $0xe0] sm:$0xff]
    %v2213 = vld [vmem:[%s11 + $0xe8] sm:$0xff]
    %v2214 = vld [vmem:[%s11 + $0xf0] sm:$0xff]
    %v2215 = vld [vmem:[%s11 + $0xf8] sm:$0xf]
    %v2216 = vld [vmem:[%s11 + $0xfc] sm:$0xff]
    %v2217 = vld [vmem:[%s11 + $0x104] sm:$0xff]
    %v2218 = vld [vmem:[%s11 + $0x10c] sm:$0xff]
    %v2219 = vld [vmem:[%s11 + $0x114] sm:$0xf]
    %v2220 = vld [vmem:[%s11 + $0x118] sm:$0xff]
    %v2221 = vld [vmem:[%s11 + $0x120] sm:$0xff]
    %v2222 = vld [vmem:[%s11 + $0x128] sm:$0xff]
    %v2223 = vld [vmem:[%s11 + $0x130] sm:$0xf]
    %v2224 = vld [vmem:[%s11 + $0x134] sm:$0xff]
    %v2225 = vld [vmem:[%s11 + $0x13c] sm:$0xff]
    %v2226 = vld [vmem:[%s11 + $0x144] sm:$0xff]
    %v2227 = vld [vmem:[%s11 + $0x14c] sm:$0xf]
    %v2228 = vld [vmem:[%s11 + $0x150] sm:$0xff]
    %v2229 = vld [vmem:[%s11 + $0x158] sm:$0xff]
    %v2230 = vld [vmem:[%s11 + $0x160] sm:$0xff]
    %v2231 = vld [vmem:[%s11 + $0x168] sm:$0xf]
    %v2232 = vld [vmem:[%s11 + $0x16c] sm:$0xff]
    %v2233 = vld [vmem:[%s11 + $0x174] sm:$0xff]
    %v2234 = vld [vmem:[%s11 + $0x17c] sm:$0xff]
    %v2235 = vld [vmem:[%s11 + $0x184] sm:$0xf]
    %v2236 = vld [vmem:[%s11 + $0x188] sm:$0xff]
    %v2237 = vld [vmem:[%s11 + $0x190] sm:$0xff]
    %v2238 = vld [vmem:[%s11 + $0x198] sm:$0xff]
    %v2239 = vld [vmem:[%s11 + $0x1a0] sm:$0xf]
    %v2240 = vld [vmem:[%s11 + $0x1a4] sm:$0xff]
    %v2241 = vld [vmem:[%s11 + $0x1ac] sm:$0xff]
    %v2242 = vld [vmem:[%s11 + $0x1b4] sm:$0xff]
    %v2243 = vld [vmem:[%s11 + $0x1bc] sm:$0xf]
    %v2244 = vld [vmem:[%s11 + $0x1c0] sm:$0xff]
    %v2245 = vld [vmem:[%s11 + $0x1c8] sm:$0xff]
    %v2246 = vld [vmem:[%s11 + $0x1d0] sm:$0xff]
    %v2247 = vld [vmem:[%s11 + $0x1d8] sm:$0xf]
    %v2248 = vld [vmem:[%s11 + $0x1dc] sm:$0xff]
    %v2249 = vld [vmem:[%s11 + $0x1e4] sm:$0xff]
    %v2250 = vld [vmem:[%s11 + $0x1ec] sm:$0xff]
    %v2251 = vld [vmem:[%s11 + $0x1f4] sm:$0xf]
    %v2252 = vld [vmem:[%s11 + $0x1f8] sm:$0xff]
    %v2253 = vld [vmem:[%s11 + $0x200] sm:$0xff]
    %v2254 = vld [vmem:[%s11 + $0x208] sm:$0xff]
    %v2255 = vld [vmem:[%s11 + $0x210] sm:$0xf]
    %v2256 = vld [vmem:[%s11 + $0x214] sm:$0xff]
    %v2257 = vld [vmem:[%s11 + $0x21c] sm:$0xff]
    %v2258 = vld [vmem:[%s11 + $0x224] sm:$0xff]
    %v2259 = vld [vmem:[%s11 + $0x22c] sm:$0xf]
    %v2260 = vld [vmem:[%s11 + $0x230] sm:$0xff]
    %v2261 = vld [vmem:[%s11 + $0x238] sm:$0xff]
    %v2262 = vld [vmem:[%s11 + $0x240] sm:$0xff]
    %v2263 = vld [vmem:[%s11 + $0x248] sm:$0xf]
    %v2264 = vld [vmem:[%s11 + $0x24c] sm:$0xff]
    %v2265 = vld [vmem:[%s11 + $0x254] sm:$0xff]
    %v2266 = vld [vmem:[%s11 + $0x25c] sm:$0xff]
    %v2267 = vld [vmem:[%s11 + $0x264] sm:$0xf]
    %v2268 = vld [vmem:[%s11 + $0x268] sm:$0xff]
    %v2269 = vld [vmem:[%s11 + $0x270] sm:$0xff]
    %v2270 = vld [vmem:[%s11 + $0x278] sm:$0xff]
    %v2271 = vld [vmem:[%s11 + $0x280] sm:$0xf]
    %v2272 = vld [vmem:[%s11 + $0x284] sm:$0xff]
    %v2273 = vld [vmem:[%s11 + $0x28c] sm:$0xff]
    %v2274 = vld [vmem:[%s11 + $0x294] sm:$0xff]
    %v2275 = vld [vmem:[%s11 + $0x29c] sm:$0xf]
    %v2276 = vld [vmem:[%s11 + $0x2a0] sm:$0xff]
    %v2277 = vld [vmem:[%s11 + $0x2a8] sm:$0xff]
    %v2278 = vld [vmem:[%s11 + $0x2b0] sm:$0xff]
    %v2279 = vld [vmem:[%s11 + $0x2b8] sm:$0xf]
    %v2280 = vld [vmem:[%s11 + $0x2bc] sm:$0xff]
    %v2281 = vld [vmem:[%s11 + $0x2c4] sm:$0xff]
    %v2282 = vld [vmem:[%s11 + $0x2cc] sm:$0xff]
    %v2283 = vld [vmem:[%s11 + $0x2d4] sm:$0xf]
    %v2284 = vld [vmem:[%s11 + $0x2d8] sm:$0xff]
    %v2285 = vld [vmem:[%s11 + $0x2e0] sm:$0xff]
    %v2286 = vld [vmem:[%s11 + $0x2e8] sm:$0xff]
    %v2287 = vld [vmem:[%s11 + $0x2f0] sm:$0xf]
    %v2288 = vld [vmem:[%s11 + $0x2f4] sm:$0xff]
    %v2289 = vld [vmem:[%s11 + $0x2fc] sm:$0xff]
    %v2290 = vld [vmem:[%s11 + $0x304] sm:$0xff]
    %v2291 = vld [vmem:[%s11 + $0x30c] sm:$0xf]
    %v2292 = vld [vmem:[%s11 + $0x310] sm:$0xff]
    %v2293 = vld [vmem:[%s11 + $0x318] sm:$0xff]
    %v2294 = vld [vmem:[%s11 + $0x320] sm:$0xff]
    %v2295 = vld [vmem:[%s11 + $0x328] sm:$0xf]
    %v2296 = vld [vmem:[%s11 + $0x32c] sm:$0xff]
    %v2297 = vld [vmem:[%s11 + $0x334] sm:$0xff]
    %v2298 = vld [vmem:[%s11 + $0x33c] sm:$0xff]
    %v2299 = vld [vmem:[%s11 + $0x344] sm:$0xf]
    %v2300 = vld [vmem:[%s11 + $0x348] sm:$0xff]
    %v2301 = vld [vmem:[%s11 + $0x350] sm:$0xff]
    %v2302 = vld [vmem:[%s11 + $0x358] sm:$0xff]
    %v2303 = vld [vmem:[%s11 + $0x360] sm:$0xf]
    %v2304 = vld [vmem:[%s11 + $0x364] sm:$0xff]
    %v2305 = vld [vmem:[%s11 + $0x36c] sm:$0xff]
    %v2306 = vld [vmem:[%s11 + $0x374] sm:$0xff]
    %v2307 = vld [vmem:[%s11 + $0x37c] sm:$0xf]
    %v2308 = vld [vmem:[%s11 + $0x380] sm:$0xff]
    %v2309 = vld [vmem:[%s11 + $0x388] sm:$0xff]
    %v2310 = vld [vmem:[%s11 + $0x390] sm:$0xff]
    %v2311 = vld [vmem:[%s11 + $0x398] sm:$0xf]
    %v2312 = vld [vmem:[%s11 + $0x39c] sm:$0xff]
    %v2313 = vld [vmem:[%s11 + $0x3a4] sm:$0xff]
    %v2314 = vld [vmem:[%s11 + $0x3ac] sm:$0xff]
    %v2315 = vld [vmem:[%s11 + $0x3b4] sm:$0xf]
    %v2316 = vld [vmem:[%s11 + $0x3b8] sm:$0xff]
    %v2317 = vld [vmem:[%s11 + $0x3c0] sm:$0xff]
    %v2318 = vld [vmem:[%s11 + $0x3c8] sm:$0xff]
    %v2319 = vld [vmem:[%s11 + $0x3d0] sm:$0xf]
    %v2320 = vld [vmem:[%s11 + $0x3d4] sm:$0xff]
    %v2321 = vld [vmem:[%s11 + $0x3dc] sm:$0xff]
    %v2322 = vld [vmem:[%s11 + $0x3e4] sm:$0xff]
    %v2323 = vld [vmem:[%s11 + $0x3ec] sm:$0xf]
    %v2324 = vld [vmem:[%s11 + $0x3f0] sm:$0xff]
    %v2325 = vld [vmem:[%s11 + $0x3f8] sm:$0xff]
    %v2326 = vld [vmem:[%s11 + $0x400] sm:$0xff]
    %v2327 = vld [vmem:[%s11 + $0x408] sm:$0xf]
    %v2328 = vld [vmem:[%s11 + $0x40c] sm:$0xff]
    %v2329 = vld [vmem:[%s11 + $0x414] sm:$0xff]
    %v2330 = vld [vmem:[%s11 + $0x41c] sm:$0xff]
    %v2331 = vld [vmem:[%s11 + $0x424] sm:$0xf]
    %v2332 = vld [vmem:[%s11 + $0x428] sm:$0xff]
    %v2333 = vld [vmem:[%s11 + $0x430] sm:$0xff]
    %v2334 = vld [vmem:[%s11 + $0x438] sm:$0xff]
    %v2335 = vld [vmem:[%s11 + $0x440] sm:$0xf]
    %v2336 = vld [vmem:[%s11 + $0x444] sm:$0xff]
    %v2337 = vld [vmem:[%s11 + $0x44c] sm:$0xff]
    %v2338 = vld [vmem:[%s11 + $0x454] sm:$0xff]
    %v2339 = vld [vmem:[%s11 + $0x45c] sm:$0xf]
    %v2340 = vld [vmem:[%s11 + $0x460] sm:$0xff]
    %v2341 = vld [vmem:[%s11 + $0x468] sm:$0xff]
    %v2342 = vld [vmem:[%s11 + $0x470] sm:$0xff]
    %v2343 = vld [vmem:[%s11 + $0x478] sm:$0xf]
    %v2344 = vld [vmem:[%s11 + $0x47c] sm:$0xff]
    %v2345 = vld [vmem:[%s11 + $0x484] sm:$0xff]
    %v2346 = vld [vmem:[%s11 + $0x48c] sm:$0xff]
    %v2347 = vld [vmem:[%s11 + $0x494] sm:$0xf]
    %v2348 = vld [vmem:[%s11 + $0x498] sm:$0xff]
    %v2349 = vld [vmem:[%s11 + $0x4a0] sm:$0xff]
    %v2350 = vld [vmem:[%s11 + $0x4a8] sm:$0xff]
    %v2351 = vld [vmem:[%s11 + $0x4b0] sm:$0xf]
    %v2352 = vld [vmem:[%s11 + $0x4b4] sm:$0xff]
    %v2353 = vld [vmem:[%s11 + $0x4bc] sm:$0xff]
    %v2354 = vld [vmem:[%s11 + $0x4c4] sm:$0xff]
    %v2355 = vld [vmem:[%s11 + $0x4cc] sm:$0xf]
    %v2356 = vld [vmem:[%s11 + $0x4d0] sm:$0xff]
    %v2357 = vld [vmem:[%s11 + $0x4d8] sm:$0xff]
    %v2358 = vld [vmem:[%s11 + $0x4e0] sm:$0xff]
    %v2359 = vld [vmem:[%s11 + $0x4e8] sm:$0xf]
    %v2360 = vld [vmem:[%s11 + $0x4ec] sm:$0xff]
    %v2361 = vld [vmem:[%s11 + $0x4f4] sm:$0xff]
    %v2362 = vld [vmem:[%s11 + $0x4fc] sm:$0xff]
    %v2363 = vld [vmem:[%s11 + $0x504] sm:$0xf]
    %v2364 = vld [vmem:[%s11 + $0x508] sm:$0xff]
    %v2365 = vld [vmem:[%s11 + $0x510] sm:$0xff]
    %v2366 = vld [vmem:[%s11 + $0x518] sm:$0xff]
    %v2367 = vld [vmem:[%s11 + $0x520] sm:$0xf]
    %v2368 = vld [vmem:[%s11 + $0x524] sm:$0xff]
    %v2369 = vld [vmem:[%s11 + $0x52c] sm:$0xff]
    %v2370 = vld [vmem:[%s11 + $0x534] sm:$0xff]
    %v2371 = vld [vmem:[%s11 + $0x53c] sm:$0xf]
    %v2372 = vld [vmem:[%s11 + $0x540] sm:$0xff]
    %v2373 = vld [vmem:[%s11 + $0x548] sm:$0xff]
    %v2374 = vld [vmem:[%s11 + $0x550] sm:$0xff]
    %v2375 = vld [vmem:[%s11 + $0x558] sm:$0xf]
    %v2376 = vld [vmem:[%s11 + $0x55c] sm:$0xff]
    %v2377 = vld [vmem:[%s11 + $0x564] sm:$0xff]
    %v2378 = vld [vmem:[%s11 + $0x56c] sm:$0xff]
    %v2379 = vld [vmem:[%s11 + $0x574] sm:$0xf]
    %v2380 = vld [vmem:[%s12] sm:$0x7f]
    %v2382 = vperm.slane %v2380, 0
    %v2383 = vperm.slane %v2380, 1
    %v2384 = vperm.slane %v2380, 2
    %v2385 = vperm.slane %v2380, 3
    %v2386 = vperm.slane %v2380, 4
    %v2387 = vperm.slane %v2380, 5
    %v2388 = vperm.slane %v2380, 6
    %v2596 = vunpack.c.l.b16 %v2180
    %v2597 = vunpack.c.h.b16 %v2180
    %v2598 = vunpack.c.l.b16 %v2181
    %v2599 = vunpack.c.h.b16 %v2181
    %v2600 = vunpack.c.l.b16 %v2182
    %v2601 = vunpack.c.h.b16 %v2182
    %v2602 = vunpack.c.l.b16 %v2183
    %v2603 = vunpack.c.l.b16 %v2184
    %v2604 = vunpack.c.h.b16 %v2184
    %v2605 = vunpack.c.l.b16 %v2185
    %v2606 = vunpack.c.h.b16 %v2185
    %v2607 = vunpack.c.l.b16 %v2186
    %v2608 = vunpack.c.h.b16 %v2186
    %v2609 = vunpack.c.l.b16 %v2187
    %v2610 = vunpack.c.l.b16 %v2188
    %v2611 = vunpack.c.h.b16 %v2188
    %v2612 = vunpack.c.l.b16 %v2189
    %v2613 = vunpack.c.h.b16 %v2189
    %v2614 = vunpack.c.l.b16 %v2190
    %v2615 = vunpack.c.h.b16 %v2190
    %v2616 = vunpack.c.l.b16 %v2191
    %v2617 = vunpack.c.l.b16 %v2192
    %v2618 = vunpack.c.h.b16 %v2192
    %v2619 = vunpack.c.l.b16 %v2193
    %v2620 = vunpack.c.h.b16 %v2193
    %v2621 = vunpack.c.l.b16 %v2194
    %v2622 = vunpack.c.h.b16 %v2194
    %v2623 = vunpack.c.l.b16 %v2195
    %v2624 = vunpack.c.l.b16 %v2196
    %v2625 = vunpack.c.h.b16 %v2196
    %v2626 = vunpack.c.l.b16 %v2197
    %v2627 = vunpack.c.h.b16 %v2197
    %v2628 = vunpack.c.l.b16 %v2198
    %v2629 = vunpack.c.h.b16 %v2198
    %v2630 = vunpack.c.l.b16 %v2199
    %v2631 = vunpack.c.l.b16 %v2200
    %v2632 = vunpack.c.h.b16 %v2200
    %v2633 = vunpack.c.l.b16 %v2201
    %v2634 = vunpack.c.h.b16 %v2201
    %v2635 = vunpack.c.l.b16 %v2202
    %v2636 = vunpack.c.h.b16 %v2202
    %v2637 = vunpack.c.l.b16 %v2203
    %v2638 = vunpack.c.l.b16 %v2204
    %v2639 = vunpack.c.h.b16 %v2204
    %v2640 = vunpack.c.l.b16 %v2205
    %v2641 = vunpack.c.h.b16 %v2205
    %v2642 = vunpack.c.l.b16 %v2206
    %v2643 = vunpack.c.h.b16 %v2206
    %v2644 = vunpack.c.l.b16 %v2207
    %v2645 = vunpack.c.l.b16 %v2208
    %v2646 = vunpack.c.h.b16 %v2208
    %v2647 = vunpack.c.l.b16 %v2209
    %v2648 = vunpack.c.h.b16 %v2209
    %v2649 = vunpack.c.l.b16 %v2210
    %v2650 = vunpack.c.h.b16 %v2210
    %v2651 = vunpack.c.l.b16 %v2211
    %v2652 = vunpack.c.l.b16 %v2212
    %v2653 = vunpack.c.h.b16 %v2212
    %v2654 = vunpack.c.l.b16 %v2213
    %v2655 = vunpack.c.h.b16 %v2213
    %v2656 = vunpack.c.l.b16 %v2214
    %v2657 = vunpack.c.h.b16 %v2214
    %v2658 = vunpack.c.l.b16 %v2215
    %v2659 = vunpack.c.l.b16 %v2216
    %v2660 = vunpack.c.h.b16 %v2216
    %v2661 = vunpack.c.l.b16 %v2217
    %v2662 = vunpack.c.h.b16 %v2217
    %v2663 = vunpack.c.l.b16 %v2218
    %v2664 = vunpack.c.h.b16 %v2218
    %v2665 = vunpack.c.l.b16 %v2219
    %v2666 = vunpack.c.l.b16 %v2220
    %v2667 = vunpack.c.h.b16 %v2220
    %v2668 = vunpack.c.l.b16 %v2221
    %v2669 = vunpack.c.h.b16 %v2221
    %v2670 = vunpack.c.l.b16 %v2222
    %v2671 = vunpack.c.h.b16 %v2222
    %v2672 = vunpack.c.l.b16 %v2223
    %v2673 = vunpack.c.l.b16 %v2224
    %v2674 = vunpack.c.h.b16 %v2224
    %v2675 = vunpack.c.l.b16 %v2225
    %v2676 = vunpack.c.h.b16 %v2225
    %v2677 = vunpack.c.l.b16 %v2226
    %v2678 = vunpack.c.h.b16 %v2226
    %v2679 = vunpack.c.l.b16 %v2227
    %v2680 = vunpack.c.l.b16 %v2228
    %v2681 = vunpack.c.h.b16 %v2228
    %v2682 = vunpack.c.l.b16 %v2229
    %v2683 = vunpack.c.h.b16 %v2229
    %v2684 = vunpack.c.l.b16 %v2230
    %v2685 = vunpack.c.h.b16 %v2230
    %v2686 = vunpack.c.l.b16 %v2231
    %v2687 = vunpack.c.l.b16 %v2232
    %v2688 = vunpack.c.h.b16 %v2232
    %v2689 = vunpack.c.l.b16 %v2233
    %v2690 = vunpack.c.h.b16 %v2233
    %v2691 = vunpack.c.l.b16 %v2234
    %v2692 = vunpack.c.h.b16 %v2234
    %v2693 = vunpack.c.l.b16 %v2235
    %v2694 = vunpack.c.l.b16 %v2236
    %v2695 = vunpack.c.h.b16 %v2236
    %v2696 = vunpack.c.l.b16 %v2237
    %v2697 = vunpack.c.h.b16 %v2237
    %v2698 = vunpack.c.l.b16 %v2238
    %v2699 = vunpack.c.h.b16 %v2238
    %v2700 = vunpack.c.l.b16 %v2239
    %v2701 = vunpack.c.l.b16 %v2240
    %v2702 = vunpack.c.h.b16 %v2240
    %v2703 = vunpack.c.l.b16 %v2241
    %v2704 = vunpack.c.h.b16 %v2241
    %v2705 = vunpack.c.l.b16 %v2242
    %v2706 = vunpack.c.h.b16 %v2242
    %v2707 = vunpack.c.l.b16 %v2243
    %v2708 = vunpack.c.l.b16 %v2244
    %v2709 = vunpack.c.h.b16 %v2244
    %v2710 = vunpack.c.l.b16 %v2245
    %v2711 = vunpack.c.h.b16 %v2245
    %v2712 = vunpack.c.l.b16 %v2246
    %v2713 = vunpack.c.h.b16 %v2246
    %v2714 = vunpack.c.l.b16 %v2247
    %v2715 = vunpack.c.l.b16 %v2248
    %v2716 = vunpack.c.h.b16 %v2248
    %v2717 = vunpack.c.l.b16 %v2249
    %v2718 = vunpack.c.h.b16 %v2249
    %v2719 = vunpack.c.l.b16 %v2250
    %v2720 = vunpack.c.h.b16 %v2250
    %v2721 = vunpack.c.l.b16 %v2251
    %v2722 = vunpack.c.l.b16 %v2252
    %v2723 = vunpack.c.h.b16 %v2252
    %v2724 = vunpack.c.l.b16 %v2253
    %v2725 = vunpack.c.h.b16 %v2253
    %v2726 = vunpack.c.l.b16 %v2254
    %v2727 = vunpack.c.h.b16 %v2254
    %v2728 = vunpack.c.l.b16 %v2255
    %v2729 = vunpack.c.l.b16 %v2256
    %v2730 = vunpack.c.h.b16 %v2256
    %v2731 = vunpack.c.l.b16 %v2257
    %v2732 = vunpack.c.h.b16 %v2257
    %v2733 = vunpack.c.l.b16 %v2258
    %v2734 = vunpack.c.h.b16 %v2258
    %v2735 = vunpack.c.l.b16 %v2259
    %v2736 = vunpack.c.l.b16 %v2260
    %v2737 = vunpack.c.h.b16 %v2260
    %v2738 = vunpack.c.l.b16 %v2261
    %v2739 = vunpack.c.h.b16 %v2261
    %v2740 = vunpack.c.l.b16 %v2262
    %v2741 = vunpack.c.h.b16 %v2262
    %v2742 = vunpack.c.l.b16 %v2263
    %v2743 = vunpack.c.l.b16 %v2264
    %v2744 = vunpack.c.h.b16 %v2264
    %v2745 = vunpack.c.l.b16 %v2265
    %v2746 = vunpack.c.h.b16 %v2265
    %v2747 = vunpack.c.l.b16 %v2266
    %v2748 = vunpack.c.h.b16 %v2266
    %v2749 = vunpack.c.l.b16 %v2267
    %v2750 = vunpack.c.l.b16 %v2268
    %v2751 = vunpack.c.h.b16 %v2268
    %v2752 = vunpack.c.l.b16 %v2269
    %v2753 = vunpack.c.h.b16 %v2269
    %v2754 = vunpack.c.l.b16 %v2270
    %v2755 = vunpack.c.h.b16 %v2270
    %v2756 = vunpack.c.l.b16 %v2271
    %v2757 = vunpack.c.l.b16 %v2272
    %v2758 = vunpack.c.h.b16 %v2272
    %v2759 = vunpack.c.l.b16 %v2273
    %v2760 = vunpack.c.h.b16 %v2273
    %v2761 = vunpack.c.l.b16 %v2274
    %v2762 = vunpack.c.h.b16 %v2274
    %v2763 = vunpack.c.l.b16 %v2275
    %v2764 = vunpack.c.l.b16 %v2276
    %v2765 = vunpack.c.h.b16 %v2276
    %v2766 = vunpack.c.l.b16 %v2277
    %v2767 = vunpack.c.h.b16 %v2277
    %v2768 = vunpack.c.l.b16 %v2278
    %v2769 = vunpack.c.h.b16 %v2278
    %v2770 = vunpack.c.l.b16 %v2279
    %v2771 = vunpack.c.l.b16 %v2280
    %v2772 = vunpack.c.h.b16 %v2280
    %v2773 = vunpack.c.l.b16 %v2281
    %v2774 = vunpack.c.h.b16 %v2281
    %v2775 = vunpack.c.l.b16 %v2282
    %v2776 = vunpack.c.h.b16 %v2282
    %v2777 = vunpack.c.l.b16 %v2283
    %v2778 = vunpack.c.l.b16 %v2284
    %v2779 = vunpack.c.h.b16 %v2284
    %v2780 = vunpack.c.l.b16 %v2285
    %v2781 = vunpack.c.h.b16 %v2285
    %v2782 = vunpack.c.l.b16 %v2286
    %v2783 = vunpack.c.h.b16 %v2286
    %v2784 = vunpack.c.l.b16 %v2287
    %v2785 = vunpack.c.l.b16 %v2288
    %v2786 = vunpack.c.h.b16 %v2288
    %v2787 = vunpack.c.l.b16 %v2289
    %v2788 = vunpack.c.h.b16 %v2289
    %v2789 = vunpack.c.l.b16 %v2290
    %v2790 = vunpack.c.h.b16 %v2290
    %v2791 = vunpack.c.l.b16 %v2291
    %v2792 = vunpack.c.l.b16 %v2292
    %v2793 = vunpack.c.h.b16 %v2292
    %v2794 = vunpack.c.l.b16 %v2293
    %v2795 = vunpack.c.h.b16 %v2293
    %v2796 = vunpack.c.l.b16 %v2294
    %v2797 = vunpack.c.h.b16 %v2294
    %v2798 = vunpack.c.l.b16 %v2295
    %v2799 = vunpack.c.l.b16 %v2296
    %v2800 = vunpack.c.h.b16 %v2296
    %v2801 = vunpack.c.l.b16 %v2297
    %v2802 = vunpack.c.h.b16 %v2297
    %v2803 = vunpack.c.l.b16 %v2298
    %v2804 = vunpack.c.h.b16 %v2298
    %v2805 = vunpack.c.l.b16 %v2299
    %v2806 = vunpack.c.l.b16 %v2300
    %v2807 = vunpack.c.h.b16 %v2300
    %v2808 = vunpack.c.l.b16 %v2301
    %v2809 = vunpack.c.h.b16 %v2301
    %v2810 = vunpack.c.l.b16 %v2302
    %v2811 = vunpack.c.h.b16 %v2302
    %v2812 = vunpack.c.l.b16 %v2303
    %v2813 = vunpack.c.l.b16 %v2304
    %v2814 = vunpack.c.h.b16 %v2304
    %v2815 = vunpack.c.l.b16 %v2305
    %v2816 = vunpack.c.h.b16 %v2305
    %v2817 = vunpack.c.l.b16 %v2306
    %v2818 = vunpack.c.h.b16 %v2306
    %v2819 = vunpack.c.l.b16 %v2307
    %v2820 = vunpack.c.l.b16 %v2308
    %v2821 = vunpack.c.h.b16 %v2308
    %v2822 = vunpack.c.l.b16 %v2309
    %v2823 = vunpack.c.h.b16 %v2309
    %v2824 = vunpack.c.l.b16 %v2310
    %v2825 = vunpack.c.h.b16 %v2310
    %v2826 = vunpack.c.l.b16 %v2311
    %v2827 = vunpack.c.l.b16 %v2312
    %v2828 = vunpack.c.h.b16 %v2312
    %v2829 = vunpack.c.l.b16 %v2313
    %v2830 = vunpack.c.h.b16 %v2313
    %v2831 = vunpack.c.l.b16 %v2314
    %v2832 = vunpack.c.h.b16 %v2314
    %v2833 = vunpack.c.l.b16 %v2315
    %v2834 = vunpack.c.l.b16 %v2316
    %v2835 = vunpack.c.h.b16 %v2316
    %v2836 = vunpack.c.l.b16 %v2317
    %v2837 = vunpack.c.h.b16 %v2317
    %v2838 = vunpack.c.l.b16 %v2318
    %v2839 = vunpack.c.h.b16 %v2318
    %v2840 = vunpack.c.l.b16 %v2319
    %v2841 = vunpack.c.l.b16 %v2320
    %v2842 = vunpack.c.h.b16 %v2320
    %v2843 = vunpack.c.l.b16 %v2321
    %v2844 = vunpack.c.h.b16 %v2321
    %v2845 = vunpack.c.l.b16 %v2322
    %v2846 = vunpack.c.h.b16 %v2322
    %v2847 = vunpack.c.l.b16 %v2323
    %v2848 = vunpack.c.l.b16 %v2324
    %v2849 = vunpack.c.h.b16 %v2324
    %v2850 = vunpack.c.l.b16 %v2325
    %v2851 = vunpack.c.h.b16 %v2325
    %v2852 = vunpack.c.l.b16 %v2326
    %v2853 = vunpack.c.h.b16 %v2326
    %v2854 = vunpack.c.l.b16 %v2327
    %v2855 = vunpack.c.l.b16 %v2328
    %v2856 = vunpack.c.h.b16 %v2328
    %v2857 = vunpack.c.l.b16 %v2329
    %v2858 = vunpack.c.h.b16 %v2329
    %v2859 = vunpack.c.l.b16 %v2330
    %v2860 = vunpack.c.h.b16 %v2330
    %v2861 = vunpack.c.l.b16 %v2331
    %v2862 = vunpack.c.l.b16 %v2332
    %v2863 = vunpack.c.h.b16 %v2332
    %v2864 = vunpack.c.l.b16 %v2333
    %v2865 = vunpack.c.h.b16 %v2333
    %v2866 = vunpack.c.l.b16 %v2334
    %v2867 = vunpack.c.h.b16 %v2334
    %v2868 = vunpack.c.l.b16 %v2335
    %v2869 = vunpack.c.l.b16 %v2336
    %v2870 = vunpack.c.h.b16 %v2336
    %v2871 = vunpack.c.l.b16 %v2337
    %v2872 = vunpack.c.h.b16 %v2337
    %v2873 = vunpack.c.l.b16 %v2338
    %v2874 = vunpack.c.h.b16 %v2338
    %v2875 = vunpack.c.l.b16 %v2339
    %v2876 = vunpack.c.l.b16 %v2340
    %v2877 = vunpack.c.h.b16 %v2340
    %v2878 = vunpack.c.l.b16 %v2341
    %v2879 = vunpack.c.h.b16 %v2341
    %v2880 = vunpack.c.l.b16 %v2342
    %v2881 = vunpack.c.h.b16 %v2342
    %v2882 = vunpack.c.l.b16 %v2343
    %v2883 = vunpack.c.l.b16 %v2344
    %v2884 = vunpack.c.h.b16 %v2344
    %v2885 = vunpack.c.l.b16 %v2345
    %v2886 = vunpack.c.h.b16 %v2345
    %v2887 = vunpack.c.l.b16 %v2346
    %v2888 = vunpack.c.h.b16 %v2346
    %v2889 = vunpack.c.l.b16 %v2347
    %v2890 = vunpack.c.l.b16 %v2348
    %v2891 = vunpack.c.h.b16 %v2348
    %v2892 = vunpack.c.l.b16 %v2349
    %v2893 = vunpack.c.h.b16 %v2349
    %v2894 = vunpack.c.l.b16 %v2350
    %v2895 = vunpack.c.h.b16 %v2350
    %v2896 = vunpack.c.l.b16 %v2351
    %v2897 = vunpack.c.l.b16 %v2352
    %v2898 = vunpack.c.h.b16 %v2352
    %v2899 = vunpack.c.l.b16 %v2353
    %v2900 = vunpack.c.h.b16 %v2353
    %v2901 = vunpack.c.l.b16 %v2354
    %v2902 = vunpack.c.h.b16 %v2354
    %v2903 = vunpack.c.l.b16 %v2355
    %v2904 = vunpack.c.l.b16 %v2356
    %v2905 = vunpack.c.h.b16 %v2356
    %v2906 = vunpack.c.l.b16 %v2357
    %v2907 = vunpack.c.h.b16 %v2357
    %v2908 = vunpack.c.l.b16 %v2358
    %v2909 = vunpack.c.h.b16 %v2358
    %v2910 = vunpack.c.l.b16 %v2359
    %v2911 = vunpack.c.l.b16 %v2360
    %v2912 = vunpack.c.h.b16 %v2360
    %v2913 = vunpack.c.l.b16 %v2361
    %v2914 = vunpack.c.h.b16 %v2361
    %v2915 = vunpack.c.l.b16 %v2362
    %v2916 = vunpack.c.h.b16 %v2362
    %v2917 = vunpack.c.l.b16 %v2363
    %v2918 = vunpack.c.l.b16 %v2364
    %v2919 = vunpack.c.h.b16 %v2364
    %v2920 = vunpack.c.l.b16 %v2365
    %v2921 = vunpack.c.h.b16 %v2365
    %v2922 = vunpack.c.l.b16 %v2366
    %v2923 = vunpack.c.h.b16 %v2366
    %v2924 = vunpack.c.l.b16 %v2367
    %v2925 = vunpack.c.l.b16 %v2368
    %v2926 = vunpack.c.h.b16 %v2368
    %v2927 = vunpack.c.l.b16 %v2369
    %v2928 = vunpack.c.h.b16 %v2369
    %v2929 = vunpack.c.l.b16 %v2370
    %v2930 = vunpack.c.h.b16 %v2370
    %v2931 = vunpack.c.l.b16 %v2371
    %v2932 = vunpack.c.l.b16 %v2372
    %v2933 = vunpack.c.h.b16 %v2372
    %v2934 = vunpack.c.l.b16 %v2373
    %v2935 = vunpack.c.h.b16 %v2373
    %v2936 = vunpack.c.l.b16 %v2374
    %v2937 = vunpack.c.h.b16 %v2374
    %v2938 = vunpack.c.l.b16 %v2375
    %v2939 = vunpack.c.l.b16 %v2376
    %v2940 = vunpack.c.h.b16 %v2376
    %v2941 = vunpack.c.l.b16 %v2377
    %v2942 = vunpack.c.h.b16 %v2377
    %v2943 = vunpack.c.l.b16 %v2378
    %v2944 = vunpack.c.h.b16 %v2378
    %v2945 = vunpack.c.l.b16 %v2379
    %v2946 = vpack.c.b16 %v2603, %v2596
    %v2947 = vpack.c.b16 %v2604, %v2597
    %v2948 = vpack.c.b16 %v2605, %v2598
    %v2949 = vpack.c.b16 %v2606, %v2599
    %v2950 = vpack.c.b16 %v2607, %v2600
    %v2951 = vpack.c.b16 %v2608, %v2601
    %v2952 = vpack.c.b16 %v2609, %v2602
    %v2953 = vpack.c.b16 %v2617, %v2610
    %v2954 = vpack.c.b16 %v2618, %v2611
    %v2955 = vpack.c.b16 %v2619, %v2612
    %v2956 = vpack.c.b16 %v2620, %v2613
    %v2957 = vpack.c.b16 %v2621, %v2614
    %v2958 = vpack.c.b16 %v2622, %v2615
    %v2959 = vpack.c.b16 %v2623, %v2616
    %v2960 = vpack.c.b16 %v2631, %v2624
    %v2961 = vpack.c.b16 %v2632, %v2625
    %v2962 = vpack.c.b16 %v2633, %v2626
    %v2963 = vpack.c.b16 %v2634, %v2627
    %v2964 = vpack.c.b16 %v2635, %v2628
    %v2965 = vpack.c.b16 %v2636, %v2629
    %v2966 = vpack.c.b16 %v2637, %v2630
    %v2967 = vpack.c.b16 %v2645, %v2638
    %v2968 = vpack.c.b16 %v2646, %v2639
    %v2969 = vpack.c.b16 %v2647, %v2640
    %v2970 = vpack.c.b16 %v2648, %v2641
    %v2971 = vpack.c.b16 %v2649, %v2642
    %v2972 = vpack.c.b16 %v2650, %v2643
    %v2973 = vpack.c.b16 %v2651, %v2644
    %v2974 = vpack.c.b16 %v2659, %v2652
    %v2975 = vpack.c.b16 %v2660, %v2653
    %v2976 = vpack.c.b16 %v2661, %v2654
    %v2977 = vpack.c.b16 %v2662, %v2655
    %v2978 = vpack.c.b16 %v2663, %v2656
    %v2979 = vpack.c.b16 %v2664, %v2657
    %v2980 = vpack.c.b16 %v2665, %v2658
    %v2981 = vpack.c.b16 %v2673, %v2666
    %v2982 = vpack.c.b16 %v2674, %v2667
    %v2983 = vpack.c.b16 %v2675, %v2668
    %v2984 = vpack.c.b16 %v2676, %v2669
    %v2985 = vpack.c.b16 %v2677, %v2670
    %v2986 = vpack.c.b16 %v2678, %v2671
    %v2987 = vpack.c.b16 %v2679, %v2672
    %v2988 = vpack.c.b16 %v2687, %v2680
    %v2989 = vpack.c.b16 %v2688, %v2681
    %v2990 = vpack.c.b16 %v2689, %v2682
    %v2991 = vpack.c.b16 %v2690, %v2683
    %v2992 = vpack.c.b16 %v2691, %v2684
    %v2993 = vpack.c.b16 %v2692, %v2685
    %v2994 = vpack.c.b16 %v2693, %v2686
    %v2995 = vpack.c.b16 %v2701, %v2694
    %v2996 = vpack.c.b16 %v2702, %v2695
    %v2997 = vpack.c.b16 %v2703, %v2696
    %v2998 = vpack.c.b16 %v2704, %v2697
    %v2999 = vpack.c.b16 %v2705, %v2698
    %v3000 = vpack.c.b16 %v2706, %v2699
    %v3001 = vpack.c.b16 %v2707, %v2700
    %v3002 = vpack.c.b16 %v2715, %v2708
    %v3003 = vpack.c.b16 %v2716, %v2709
    %v3004 = vpack.c.b16 %v2717, %v2710
    %v3005 = vpack.c.b16 %v2718, %v2711
    %v3006 = vpack.c.b16 %v2719, %v2712
    %v3007 = vpack.c.b16 %v2720, %v2713
    %v3008 = vpack.c.b16 %v2721, %v2714
    %v3009 = vpack.c.b16 %v2729, %v2722
    %v3010 = vpack.c.b16 %v2730, %v2723
    %v3011 = vpack.c.b16 %v2731, %v2724
    %v3012 = vpack.c.b16 %v2732, %v2725
    %v3013 = vpack.c.b16 %v2733, %v2726
    %v3014 = vpack.c.b16 %v2734, %v2727
    %v3015 = vpack.c.b16 %v2735, %v2728
    %v3016 = vpack.c.b16 %v2743, %v2736
    %v3017 = vpack.c.b16 %v2744, %v2737
    %v3018 = vpack.c.b16 %v2745, %v2738
    %v3019 = vpack.c.b16 %v2746, %v2739
    %v3020 = vpack.c.b16 %v2747, %v2740
    %v3021 = vpack.c.b16 %v2748, %v2741
    %v3022 = vpack.c.b16 %v2749, %v2742
    %v3023 = vpack.c.b16 %v2757, %v2750
    %v3024 = vpack.c.b16 %v2758, %v2751
    %v3025 = vpack.c.b16 %v2759, %v2752
    %v3026 = vpack.c.b16 %v2760, %v2753
    %v3027 = vpack.c.b16 %v2761, %v2754
    %v3028 = vpack.c.b16 %v2762, %v2755
    %v3029 = vpack.c.b16 %v2763, %v2756
    %v3030 = vpack.c.b16 %v2771, %v2764
    %v3031 = vpack.c.b16 %v2772, %v2765
    %v3032 = vpack.c.b16 %v2773, %v2766
    %v3033 = vpack.c.b16 %v2774, %v2767
    %v3034 = vpack.c.b16 %v2775, %v2768
    %v3035 = vpack.c.b16 %v2776, %v2769
    %v3036 = vpack.c.b16 %v2777, %v2770
    %v3037 = vpack.c.b16 %v2785, %v2778
    %v3038 = vpack.c.b16 %v2786, %v2779
    %v3039 = vpack.c.b16 %v2787, %v2780
    %v3040 = vpack.c.b16 %v2788, %v2781
    %v3041 = vpack.c.b16 %v2789, %v2782
    %v3042 = vpack.c.b16 %v2790, %v2783
    %v3043 = vpack.c.b16 %v2791, %v2784
    %v3044 = vpack.c.b16 %v2799, %v2792
    %v3045 = vpack.c.b16 %v2800, %v2793
    %v3046 = vpack.c.b16 %v2801, %v2794
    %v3047 = vpack.c.b16 %v2802, %v2795
    %v3048 = vpack.c.b16 %v2803, %v2796
    %v3049 = vpack.c.b16 %v2804, %v2797
    %v3050 = vpack.c.b16 %v2805, %v2798
    %v3051 = vpack.c.b16 %v2813, %v2806
    %v3052 = vpack.c.b16 %v2814, %v2807
    %v3053 = vpack.c.b16 %v2815, %v2808
    %v3054 = vpack.c.b16 %v2816, %v2809
    %v3055 = vpack.c.b16 %v2817, %v2810
    %v3056 = vpack.c.b16 %v2818, %v2811
    %v3057 = vpack.c.b16 %v2819, %v2812
    %v3058 = vpack.c.b16 %v2827, %v2820
    %v3059 = vpack.c.b16 %v2828, %v2821
    %v3060 = vpack.c.b16 %v2829, %v2822
    %v3061 = vpack.c.b16 %v2830, %v2823
    %v3062 = vpack.c.b16 %v2831, %v2824
    %v3063 = vpack.c.b16 %v2832, %v2825
    %v3064 = vpack.c.b16 %v2833, %v2826
    %v3065 = vpack.c.b16 %v2841, %v2834
    %v3066 = vpack.c.b16 %v2842, %v2835
    %v3067 = vpack.c.b16 %v2843, %v2836
    %v3068 = vpack.c.b16 %v2844, %v2837
    %v3069 = vpack.c.b16 %v2845, %v2838
    %v3070 = vpack.c.b16 %v2846, %v2839
    %v3071 = vpack.c.b16 %v2847, %v2840
    %v3072 = vpack.c.b16 %v2855, %v2848
    %v3073 = vpack.c.b16 %v2856, %v2849
    %v3074 = vpack.c.b16 %v2857, %v2850
    %v3075 = vpack.c.b16 %v2858, %v2851
    %v3076 = vpack.c.b16 %v2859, %v2852
    %v3077 = vpack.c.b16 %v2860, %v2853
    %v3078 = vpack.c.b16 %v2861, %v2854
    %v3079 = vpack.c.b16 %v2869, %v2862
    %v3080 = vpack.c.b16 %v2870, %v2863
    %v3081 = vpack.c.b16 %v2871, %v2864
    %v3082 = vpack.c.b16 %v2872, %v2865
    %v3083 = vpack.c.b16 %v2873, %v2866
    %v3084 = vpack.c.b16 %v2874, %v2867
    %v3085 = vpack.c.b16 %v2875, %v2868
    %v3086 = vpack.c.b16 %v2883, %v2876
    %v3087 = vpack.c.b16 %v2884, %v2877
    %v3088 = vpack.c.b16 %v2885, %v2878
    %v3089 = vpack.c.b16 %v2886, %v2879
    %v3090 = vpack.c.b16 %v2887, %v2880
    %v3091 = vpack.c.b16 %v2888, %v2881
    %v3092 = vpack.c.b16 %v2889, %v2882
    %v3093 = vpack.c.b16 %v2897, %v2890
    %v3094 = vpack.c.b16 %v2898, %v2891
    %v3095 = vpack.c.b16 %v2899, %v2892
    %v3096 = vpack.c.b16 %v2900, %v2893
    %v3097 = vpack.c.b16 %v2901, %v2894
    %v3098 = vpack.c.b16 %v2902, %v2895
    %v3099 = vpack.c.b16 %v2903, %v2896
    %v3100 = vpack.c.b16 %v2911, %v2904
    %v3101 = vpack.c.b16 %v2912, %v2905
    %v3102 = vpack.c.b16 %v2913, %v2906
    %v3103 = vpack.c.b16 %v2914, %v2907
    %v3104 = vpack.c.b16 %v2915, %v2908
    %v3105 = vpack.c.b16 %v2916, %v2909
    %v3106 = vpack.c.b16 %v2917, %v2910
    %v3107 = vpack.c.b16 %v2925, %v2918
    %v3108 = vpack.c.b16 %v2926, %v2919
    %v3109 = vpack.c.b16 %v2927, %v2920
    %v3110 = vpack.c.b16 %v2928, %v2921
    %v3111 = vpack.c.b16 %v2929, %v2922
    %v3112 = vpack.c.b16 %v2930, %v2923
    %v3113 = vpack.c.b16 %v2931, %v2924
    %v3114 = vpack.c.b16 %v2939, %v2932
    %v3115 = vpack.c.b16 %v2940, %v2933
    %v3116 = vpack.c.b16 %v2941, %v2934
    %v3117 = vpack.c.b16 %v2942, %v2935
    %v3118 = vpack.c.b16 %v2943, %v2936
    %v3119 = vpack.c.b16 %v2944, %v2937
    %v3120 = vpack.c.b16 %v2945, %v2938
    %v3297 = vsel %vm1343, %v2179, 0
    %3299 = vmatpush.bf16.msra.mxu0 %v2995
    %3300 = vmatpush.bf16.msra.mxu0 %v2988
    %3301 = vmatpush.bf16.msra.mxu0 %v2981
    %3302 = vmatpush.bf16.msra.mxu0 %v2974
    %3303 = vmatpush.bf16.msra.mxu0 %v2967
    %3304 = vmatpush.bf16.msra.mxu0 %v2960
    %3305 = vmatpush.bf16.msra.mxu0 %v2953
    %3306 = vmatpush.bf16.msra.mxu0 %v2946
    %3307 = vmatmul.bf16.gmra.mxu0 %v2176
    %v3308 = vpop.f32.mrf.mxu0
    %v3309 = vadd.f32 %v2382, %v3308
    %v3310 = vpop.f32.mrf.mxu0
    %3311 = vdwg.mxu0
    %3312 = vmatpush.bf16.msra.mxu0 %v3051
    %3313 = vmatpush.bf16.msra.mxu0 %v3044
    %3314 = vmatpush.bf16.msra.mxu0 %v3037
    %3315 = vmatpush.bf16.msra.mxu0 %v3030
    %3316 = vmatpush.bf16.msra.mxu0 %v3023
    %3317 = vmatpush.bf16.msra.mxu0 %v3016
    %3318 = vmatpush.bf16.msra.mxu0 %v3009
    %3319 = vmatpush.bf16.msra.mxu0 %v3002
    %3320 = vmatmul.bf16.gmra.mxu0 %v2177
    %v3321 = vpop.f32.mrf.mxu0
    %v3322 = vadd.f32 %v3309, %v3321
    %v3323 = vpop.f32.mrf.mxu0
    %3324 = vdwg.mxu0
    %3325 = vmatpush.bf16.msra.mxu0 %v3107
    %3326 = vmatpush.bf16.msra.mxu0 %v3100
    %3327 = vmatpush.bf16.msra.mxu0 %v3093
    %3328 = vmatpush.bf16.msra.mxu0 %v3086
    %3329 = vmatpush.bf16.msra.mxu0 %v3079
    %3330 = vmatpush.bf16.msra.mxu0 %v3072
    %3331 = vmatpush.bf16.msra.mxu0 %v3065
    %3332 = vmatpush.bf16.msra.mxu0 %v3058
    %3333 = vmatmul.bf16.gmra.mxu0 %v2178
    %v3334 = vpop.f32.mrf.mxu0
    %v3335 = vadd.f32 %v3322, %v3334
    %v3336 = vpop.f32.mrf.mxu0
    %3337 = vdwg.mxu0
    %3338 = vmatpush.bf16.msra.mxu0 0
    %3339 = vmatpush.bf16.msra.mxu0 0
    %3340 = vmatpush.bf16.msra.mxu0 0
    %3341 = vmatpush.bf16.msra.mxu0 0
    %3342 = vmatpush.bf16.msra.mxu0 0
    %3343 = vmatpush.bf16.msra.mxu0 0
    %3344 = vmatpush.bf16.msra.mxu0 0
    %3345 = vmatpush.bf16.msra.mxu0 %v3114
    %3346 = vmatmul.bf16.gmra.mxu0 %v3297
    %v3347 = vpop.f32.mrf.mxu0
    %v3348 = vadd.f32 %v3335, %v3347
    %v3349 = vpop.f32.mrf.mxu0
    %3350 = vdwg.mxu0
    %3351 = vmatpush.bf16.msra.mxu0 %v2996
    %3352 = vmatpush.bf16.msra.mxu0 %v2989
    %3353 = vmatpush.bf16.msra.mxu0 %v2982
    %3354 = vmatpush.bf16.msra.mxu0 %v2975
    %3355 = vmatpush.bf16.msra.mxu0 %v2968
    %3356 = vmatpush.bf16.msra.mxu0 %v2961
    %3357 = vmatpush.bf16.msra.mxu0 %v2954
    %3358 = vmatpush.bf16.msra.mxu0 %v2947
    %3359 = vmatmul.bf16.gmra.mxu0 %v2176
    %v3360 = vpop.f32.mrf.mxu0
    %v3361 = vadd.f32 %v2383, %v3360
    %v3362 = vpop.f32.mrf.mxu0
    %3363 = vdwg.mxu0
    %3364 = vmatpush.bf16.msra.mxu0 %v3052
    %3365 = vmatpush.bf16.msra.mxu0 %v3045
    %3366 = vmatpush.bf16.msra.mxu0 %v3038
    %3367 = vmatpush.bf16.msra.mxu0 %v3031
    %3368 = vmatpush.bf16.msra.mxu0 %v3024
    %3369 = vmatpush.bf16.msra.mxu0 %v3017
    %3370 = vmatpush.bf16.msra.mxu0 %v3010
    %3371 = vmatpush.bf16.msra.mxu0 %v3003
    %3372 = vmatmul.bf16.gmra.mxu0 %v2177
    %v3373 = vpop.f32.mrf.mxu0
    %v3374 = vadd.f32 %v3361, %v3373
    %v3375 = vpop.f32.mrf.mxu0
    %3376 = vdwg.mxu0
    %3377 = vmatpush.bf16.msra.mxu0 %v3108
    %3378 = vmatpush.bf16.msra.mxu0 %v3101
    %3379 = vmatpush.bf16.msra.mxu0 %v3094
    %3380 = vmatpush.bf16.msra.mxu0 %v3087
    %3381 = vmatpush.bf16.msra.mxu0 %v3080
    %3382 = vmatpush.bf16.msra.mxu0 %v3073
    %3383 = vmatpush.bf16.msra.mxu0 %v3066
    %3384 = vmatpush.bf16.msra.mxu0 %v3059
    %3385 = vmatmul.bf16.gmra.mxu0 %v2178
    %v3386 = vpop.f32.mrf.mxu0
    %v3387 = vadd.f32 %v3374, %v3386
    %v3388 = vpop.f32.mrf.mxu0
    %3389 = vdwg.mxu0
    %3390 = vmatpush.bf16.msra.mxu0 0
    %3391 = vmatpush.bf16.msra.mxu0 0
    %3392 = vmatpush.bf16.msra.mxu0 0
    %3393 = vmatpush.bf16.msra.mxu0 0
    %3394 = vmatpush.bf16.msra.mxu0 0
    %3395 = vmatpush.bf16.msra.mxu0 0
    %3396 = vmatpush.bf16.msra.mxu0 0
    %3397 = vmatpush.bf16.msra.mxu0 %v3115
    %3398 = vmatmul.bf16.gmra.mxu0 %v3297
    %v3399 = vpop.f32.mrf.mxu0
    %v3400 = vadd.f32 %v3387, %v3399
    %v3401 = vpop.f32.mrf.mxu0
    %3402 = vdwg.mxu0
    %3403 = vmatpush.bf16.msra.mxu0 %v2997
    %3404 = vmatpush.bf16.msra.mxu0 %v2990
    %3405 = vmatpush.bf16.msra.mxu0 %v2983
    %3406 = vmatpush.bf16.msra.mxu0 %v2976
    %3407 = vmatpush.bf16.msra.mxu0 %v2969
    %3408 = vmatpush.bf16.msra.mxu0 %v2962
    %3409 = vmatpush.bf16.msra.mxu0 %v2955
    %3410 = vmatpush.bf16.msra.mxu0 %v2948
    %3411 = vmatmul.bf16.gmra.mxu0 %v2176
    %v3412 = vpop.f32.mrf.mxu0
    %v3413 = vadd.f32 %v2384, %v3412
    %v3414 = vpop.f32.mrf.mxu0
    %3415 = vdwg.mxu0
    %3416 = vmatpush.bf16.msra.mxu0 %v3053
    %3417 = vmatpush.bf16.msra.mxu0 %v3046
    %3418 = vmatpush.bf16.msra.mxu0 %v3039
    %3419 = vmatpush.bf16.msra.mxu0 %v3032
    %3420 = vmatpush.bf16.msra.mxu0 %v3025
    %3421 = vmatpush.bf16.msra.mxu0 %v3018
    %3422 = vmatpush.bf16.msra.mxu0 %v3011
    %3423 = vmatpush.bf16.msra.mxu0 %v3004
    %3424 = vmatmul.bf16.gmra.mxu0 %v2177
    %v3425 = vpop.f32.mrf.mxu0
    %v3426 = vadd.f32 %v3413, %v3425
    %v3427 = vpop.f32.mrf.mxu0
    %3428 = vdwg.mxu0
    %3429 = vmatpush.bf16.msra.mxu0 %v3109
    %3430 = vmatpush.bf16.msra.mxu0 %v3102
    %3431 = vmatpush.bf16.msra.mxu0 %v3095
    %3432 = vmatpush.bf16.msra.mxu0 %v3088
    %3433 = vmatpush.bf16.msra.mxu0 %v3081
    %3434 = vmatpush.bf16.msra.mxu0 %v3074
    %3435 = vmatpush.bf16.msra.mxu0 %v3067
    %3436 = vmatpush.bf16.msra.mxu0 %v3060
    %3437 = vmatmul.bf16.gmra.mxu0 %v2178
    %v3438 = vpop.f32.mrf.mxu0
    %v3439 = vadd.f32 %v3426, %v3438
    %v3440 = vpop.f32.mrf.mxu0
    %3441 = vdwg.mxu0
    %3442 = vmatpush.bf16.msra.mxu0 0
    %3443 = vmatpush.bf16.msra.mxu0 0
    %3444 = vmatpush.bf16.msra.mxu0 0
    %3445 = vmatpush.bf16.msra.mxu0 0
    %3446 = vmatpush.bf16.msra.mxu0 0
    %3447 = vmatpush.bf16.msra.mxu0 0
    %3448 = vmatpush.bf16.msra.mxu0 0
    %3449 = vmatpush.bf16.msra.mxu0 %v3116
    %3450 = vmatmul.bf16.gmra.mxu0 %v3297
    %v3451 = vpop.f32.mrf.mxu0
    %v3452 = vadd.f32 %v3439, %v3451
    %v3453 = vpop.f32.mrf.mxu0
    %3454 = vdwg.mxu0
    %3455 = vmatpush.bf16.msra.mxu0 %v2998
    %3456 = vmatpush.bf16.msra.mxu0 %v2991
    %3457 = vmatpush.bf16.msra.mxu0 %v2984
    %3458 = vmatpush.bf16.msra.mxu0 %v2977
    %3459 = vmatpush.bf16.msra.mxu0 %v2970
    %3460 = vmatpush.bf16.msra.mxu0 %v2963
    %3461 = vmatpush.bf16.msra.mxu0 %v2956
    %3462 = vmatpush.bf16.msra.mxu0 %v2949
    %3463 = vmatmul.bf16.gmra.mxu0 %v2176
    %v3464 = vpop.f32.mrf.mxu0
    %v3465 = vadd.f32 %v2385, %v3464
    %v3466 = vpop.f32.mrf.mxu0
    %3467 = vdwg.mxu0
    %3468 = vmatpush.bf16.msra.mxu0 %v3054
    %3469 = vmatpush.bf16.msra.mxu0 %v3047
    %3470 = vmatpush.bf16.msra.mxu0 %v3040
    %3471 = vmatpush.bf16.msra.mxu0 %v3033
    %3472 = vmatpush.bf16.msra.mxu0 %v3026
    %3473 = vmatpush.bf16.msra.mxu0 %v3019
    %3474 = vmatpush.bf16.msra.mxu0 %v3012
    %3475 = vmatpush.bf16.msra.mxu0 %v3005
    %3476 = vmatmul.bf16.gmra.mxu0 %v2177
    %v3477 = vpop.f32.mrf.mxu0
    %v3478 = vadd.f32 %v3465, %v3477
    %v3479 = vpop.f32.mrf.mxu0
    %3480 = vdwg.mxu0
    %3481 = vmatpush.bf16.msra.mxu0 %v3110
    %3482 = vmatpush.bf16.msra.mxu0 %v3103
    %3483 = vmatpush.bf16.msra.mxu0 %v3096
    %3484 = vmatpush.bf16.msra.mxu0 %v3089
    %3485 = vmatpush.bf16.msra.mxu0 %v3082
    %3486 = vmatpush.bf16.msra.mxu0 %v3075
    %3487 = vmatpush.bf16.msra.mxu0 %v3068
    %3488 = vmatpush.bf16.msra.mxu0 %v3061
    %3489 = vmatmul.bf16.gmra.mxu0 %v2178
    %v3490 = vpop.f32.mrf.mxu0
    %v3491 = vadd.f32 %v3478, %v3490
    %v3492 = vpop.f32.mrf.mxu0
    %3493 = vdwg.mxu0
    %3494 = vmatpush.bf16.msra.mxu0 0
    %3495 = vmatpush.bf16.msra.mxu0 0
    %3496 = vmatpush.bf16.msra.mxu0 0
    %3497 = vmatpush.bf16.msra.mxu0 0
    %3498 = vmatpush.bf16.msra.mxu0 0
    %3499 = vmatpush.bf16.msra.mxu0 0
    %3500 = vmatpush.bf16.msra.mxu0 0
    %3501 = vmatpush.bf16.msra.mxu0 %v3117
    %3502 = vmatmul.bf16.gmra.mxu0 %v3297
    %v3503 = vpop.f32.mrf.mxu0
    %v3504 = vadd.f32 %v3491, %v3503
    %v3505 = vpop.f32.mrf.mxu0
    %3506 = vdwg.mxu0
    %3507 = vmatpush.bf16.msra.mxu0 %v2999
    %3508 = vmatpush.bf16.msra.mxu0 %v2992
    %3509 = vmatpush.bf16.msra.mxu0 %v2985
    %3510 = vmatpush.bf16.msra.mxu0 %v2978
    %3511 = vmatpush.bf16.msra.mxu0 %v2971
    %3512 = vmatpush.bf16.msra.mxu0 %v2964
    %3513 = vmatpush.bf16.msra.mxu0 %v2957
    %3514 = vmatpush.bf16.msra.mxu0 %v2950
    %3515 = vmatmul.bf16.gmra.mxu0 %v2176
    %v3516 = vpop.f32.mrf.mxu0
    %v3517 = vadd.f32 %v2386, %v3516
    %v3518 = vpop.f32.mrf.mxu0
    %3519 = vdwg.mxu0
    %3520 = vmatpush.bf16.msra.mxu0 %v3055
    %3521 = vmatpush.bf16.msra.mxu0 %v3048
    %3522 = vmatpush.bf16.msra.mxu0 %v3041
    %3523 = vmatpush.bf16.msra.mxu0 %v3034
    %3524 = vmatpush.bf16.msra.mxu0 %v3027
    %3525 = vmatpush.bf16.msra.mxu0 %v3020
    %3526 = vmatpush.bf16.msra.mxu0 %v3013
    %3527 = vmatpush.bf16.msra.mxu0 %v3006
    %3528 = vmatmul.bf16.gmra.mxu0 %v2177
    %v3529 = vpop.f32.mrf.mxu0
    %v3530 = vadd.f32 %v3517, %v3529
    %v3531 = vpop.f32.mrf.mxu0
    %3532 = vdwg.mxu0
    %3533 = vmatpush.bf16.msra.mxu0 %v3111
    %3534 = vmatpush.bf16.msra.mxu0 %v3104
    %3535 = vmatpush.bf16.msra.mxu0 %v3097
    %3536 = vmatpush.bf16.msra.mxu0 %v3090
    %3537 = vmatpush.bf16.msra.mxu0 %v3083
    %3538 = vmatpush.bf16.msra.mxu0 %v3076
    %3539 = vmatpush.bf16.msra.mxu0 %v3069
    %3540 = vmatpush.bf16.msra.mxu0 %v3062
    %3541 = vmatmul.bf16.gmra.mxu0 %v2178
    %v3542 = vpop.f32.mrf.mxu0
    %v3543 = vadd.f32 %v3530, %v3542
    %v3544 = vpop.f32.mrf.mxu0
    %3545 = vdwg.mxu0
    %3546 = vmatpush.bf16.msra.mxu0 0
    %3547 = vmatpush.bf16.msra.mxu0 0
    %3548 = vmatpush.bf16.msra.mxu0 0
    %3549 = vmatpush.bf16.msra.mxu0 0
    %3550 = vmatpush.bf16.msra.mxu0 0
    %3551 = vmatpush.bf16.msra.mxu0 0
    %3552 = vmatpush.bf16.msra.mxu0 0
    %3553 = vmatpush.bf16.msra.mxu0 %v3118
    %3554 = vmatmul.bf16.gmra.mxu0 %v3297
    %v3555 = vpop.f32.mrf.mxu0
    %v3556 = vadd.f32 %v3543, %v3555
    %v3557 = vpop.f32.mrf.mxu0
    %3558 = vdwg.mxu0
    %3559 = vmatpush.bf16.msra.mxu0 %v3000
    %3560 = vmatpush.bf16.msra.mxu0 %v2993
    %3561 = vmatpush.bf16.msra.mxu0 %v2986
    %3562 = vmatpush.bf16.msra.mxu0 %v2979
    %3563 = vmatpush.bf16.msra.mxu0 %v2972
    %3564 = vmatpush.bf16.msra.mxu0 %v2965
    %3565 = vmatpush.bf16.msra.mxu0 %v2958
    %3566 = vmatpush.bf16.msra.mxu0 %v2951
    %3567 = vmatmul.bf16.gmra.mxu0 %v2176
    %v3568 = vpop.f32.mrf.mxu0
    %v3569 = vadd.f32 %v2387, %v3568
    %v3570 = vpop.f32.mrf.mxu0
    %3571 = vdwg.mxu0
    %3572 = vmatpush.bf16.msra.mxu0 %v3056
    %3573 = vmatpush.bf16.msra.mxu0 %v3049
    %3574 = vmatpush.bf16.msra.mxu0 %v3042
    %3575 = vmatpush.bf16.msra.mxu0 %v3035
    %3576 = vmatpush.bf16.msra.mxu0 %v3028
    %3577 = vmatpush.bf16.msra.mxu0 %v3021
    %3578 = vmatpush.bf16.msra.mxu0 %v3014
    %3579 = vmatpush.bf16.msra.mxu0 %v3007
    %3580 = vmatmul.bf16.gmra.mxu0 %v2177
    %v3581 = vpop.f32.mrf.mxu0
    %v3582 = vadd.f32 %v3569, %v3581
    %v3583 = vpop.f32.mrf.mxu0
    %3584 = vdwg.mxu0
    %3585 = vmatpush.bf16.msra.mxu0 %v3112
    %3586 = vmatpush.bf16.msra.mxu0 %v3105
    %3587 = vmatpush.bf16.msra.mxu0 %v3098
    %3588 = vmatpush.bf16.msra.mxu0 %v3091
    %3589 = vmatpush.bf16.msra.mxu0 %v3084
    %3590 = vmatpush.bf16.msra.mxu0 %v3077
    %3591 = vmatpush.bf16.msra.mxu0 %v3070
    %3592 = vmatpush.bf16.msra.mxu0 %v3063
    %3593 = vmatmul.bf16.gmra.mxu0 %v2178
    %v3594 = vpop.f32.mrf.mxu0
    %v3595 = vadd.f32 %v3582, %v3594
    %v3596 = vpop.f32.mrf.mxu0
    %3597 = vdwg.mxu0
    %3598 = vmatpush.bf16.msra.mxu0 0
    %3599 = vmatpush.bf16.msra.mxu0 0
    %3600 = vmatpush.bf16.msra.mxu0 0
    %3601 = vmatpush.bf16.msra.mxu0 0
    %3602 = vmatpush.bf16.msra.mxu0 0
    %3603 = vmatpush.bf16.msra.mxu0 0
    %3604 = vmatpush.bf16.msra.mxu0 0
    %3605 = vmatpush.bf16.msra.mxu0 %v3119
    %3606 = vmatmul.bf16.gmra.mxu0 %v3297
    %v3607 = vpop.f32.mrf.mxu0
    %v3608 = vadd.f32 %v3595, %v3607
    %v3609 = vpop.f32.mrf.mxu0
    %3610 = vdwg.mxu0
    %3611 = vmatpush.bf16.msra.mxu0 %v3001
    %3612 = vmatpush.bf16.msra.mxu0 %v2994
    %3613 = vmatpush.bf16.msra.mxu0 %v2987
    %3614 = vmatpush.bf16.msra.mxu0 %v2980
    %3615 = vmatpush.bf16.msra.mxu0 %v2973
    %3616 = vmatpush.bf16.msra.mxu0 %v2966
    %3617 = vmatpush.bf16.msra.mxu0 %v2959
    %3618 = vmatpush.bf16.msra.mxu0 %v2952
    %3619 = vmatmul.bf16.gmra.mxu0 %v2176
    %v3620 = vpop.f32.mrf.mxu0
    %v3621 = vadd.f32 %v2388, %v3620
    %v3622 = vpop.f32.mrf.mxu0
    %3623 = vdwg.mxu0
    %3624 = vmatpush.bf16.msra.mxu0 %v3057
    %3625 = vmatpush.bf16.msra.mxu0 %v3050
    %3626 = vmatpush.bf16.msra.mxu0 %v3043
    %3627 = vmatpush.bf16.msra.mxu0 %v3036
    %3628 = vmatpush.bf16.msra.mxu0 %v3029
    %3629 = vmatpush.bf16.msra.mxu0 %v3022
    %3630 = vmatpush.bf16.msra.mxu0 %v3015
    %3631 = vmatpush.bf16.msra.mxu0 %v3008
    %3632 = vmatmul.bf16.gmra.mxu0 %v2177
    %v3633 = vpop.f32.mrf.mxu0
    %v3634 = vadd.f32 %v3621, %v3633
    %v3635 = vpop.f32.mrf.mxu0
    %3636 = vdwg.mxu0
    %3637 = vmatpush.bf16.msra.mxu0 %v3113
    %3638 = vmatpush.bf16.msra.mxu0 %v3106
    %3639 = vmatpush.bf16.msra.mxu0 %v3099
    %3640 = vmatpush.bf16.msra.mxu0 %v3092
    %3641 = vmatpush.bf16.msra.mxu0 %v3085
    %3642 = vmatpush.bf16.msra.mxu0 %v3078
    %3643 = vmatpush.bf16.msra.mxu0 %v3071
    %3644 = vmatpush.bf16.msra.mxu0 %v3064
    %3645 = vmatmul.bf16.gmra.mxu0 %v2178
    %v3646 = vpop.f32.mrf.mxu0
    %v3647 = vadd.f32 %v3634, %v3646
    %v3648 = vpop.f32.mrf.mxu0
    %3649 = vdwg.mxu0
    %3650 = vmatpush.bf16.msra.mxu0 0
    %3651 = vmatpush.bf16.msra.mxu0 0
    %3652 = vmatpush.bf16.msra.mxu0 0
    %3653 = vmatpush.bf16.msra.mxu0 0
    %3654 = vmatpush.bf16.msra.mxu0 0
    %3655 = vmatpush.bf16.msra.mxu0 0
    %3656 = vmatpush.bf16.msra.mxu0 0
    %3657 = vmatpush.bf16.msra.mxu0 %v3120
    %3658 = vmatmul.bf16.gmra.mxu0 %v3297
    %v3659 = vpop.f32.mrf.mxu0
    %v3660 = vadd.f32 %v3647, %v3659
    %v3661 = vpop.f32.mrf.mxu0
    %3662 = vdwg.mxu0
    %v3663 = vxor.u32 %v3348, 2147483648
    %v3664 = vxor.u32 %v3400, 2147483648
    %v3665 = vxor.u32 %v3452, 2147483648
    %v3666 = vxor.u32 %v3504, 2147483648
    %v3667 = vxor.u32 %v3556, 2147483648
    %v3668 = vxor.u32 %v3608, 2147483648
    %v3669 = vxor.u32 %v3660, 2147483648
    %v3670 = vmul.f32 %v3663, 1.442695
    %v3671 = vpow.pop %v3670
    %v3672 = vmul.f32 %v3664, 1.442695
    %v3673 = vpow.pop %v3672
    %v3674 = vmul.f32 %v3665, 1.442695
    %v3675 = vpow.pop %v3674
    %v3676 = vmul.f32 %v3666, 1.442695
    %v3677 = vpow.pop %v3676
    %v3678 = vmul.f32 %v3667, 1.442695
    %v3679 = vpow.pop %v3678
    %v3680 = vmul.f32 %v3668, 1.442695
    %v3681 = vpow.pop %v3680
    %v3682 = vmul.f32 %v3669, 1.442695
    %v3683 = vpow.pop %v3682
    %v3684 = vadd.f32 %v3671, 1.0
    %v3685 = vadd.f32 %v3673, 1.0
    %v3686 = vadd.f32 %v3675, 1.0
    %v3687 = vadd.f32 %v3677, 1.0
    %v3688 = vadd.f32 %v3679, 1.0
    %v3689 = vadd.f32 %v3681, 1.0
    %v3690 = vadd.f32 %v3683, 1.0
    %v3691 = vrcp.pop %v3684
    %v3692 = vmul.f32 %v3684, %v3691
    %v3693 = vsub.f32 1.0, %v3692
    %v3694 = vmul.f32 %v3691, %v3693
    %v3695 = vadd.f32 %v3691, %v3694
    %vm3696 = vweird.f32 %v3684
    %vm3697 = vweird.f32 %v3691
    %vm3698 = vmor %vm3696, %vm3697
    %v3699 = vsel %vm3698, %v3691, %v3695
    %v3700 = vand.u32 2147483647, %v3684
    %vm3701 = vcmp.eq.f32.partialorder %v3700, 8.507059e+37
    %v3702 = vand.u32 %v3684, 2147483648
    %v3703 = vor.u32 1.1754944e-38, %v3702
    %v3704 = vsel %vm3701, %v3703, %v3699
    %v3705 = vmul.f32 1.0, %v3704
    %v3706 = vrcp.pop %v3685
    %v3707 = vmul.f32 %v3685, %v3706
    %v3708 = vsub.f32 1.0, %v3707
    %v3709 = vmul.f32 %v3706, %v3708
    %v3710 = vadd.f32 %v3706, %v3709
    %vm3711 = vweird.f32 %v3685
    %vm3712 = vweird.f32 %v3706
    %vm3713 = vmor %vm3711, %vm3712
    %v3714 = vsel %vm3713, %v3706, %v3710
    %v3715 = vand.u32 2147483647, %v3685
    %vm3716 = vcmp.eq.f32.partialorder %v3715, 8.507059e+37
    %v3717 = vand.u32 %v3685, 2147483648
    %v3718 = vor.u32 1.1754944e-38, %v3717
    %v3719 = vsel %vm3716, %v3718, %v3714
    %v3720 = vmul.f32 1.0, %v3719
    %v3721 = vrcp.pop %v3686
    %v3722 = vmul.f32 %v3686, %v3721
    %v3723 = vsub.f32 1.0, %v3722
    %v3724 = vmul.f32 %v3721, %v3723
    %v3725 = vadd.f32 %v3721, %v3724
    %vm3726 = vweird.f32 %v3686
    %vm3727 = vweird.f32 %v3721
    %vm3728 = vmor %vm3726, %vm3727
    %v3729 = vsel %vm3728, %v3721, %v3725
    %v3730 = vand.u32 2147483647, %v3686
    %vm3731 = vcmp.eq.f32.partialorder %v3730, 8.507059e+37
    %v3732 = vand.u32 %v3686, 2147483648
    %v3733 = vor.u32 1.1754944e-38, %v3732
    %v3734 = vsel %vm3731, %v3733, %v3729
    %v3735 = vmul.f32 1.0, %v3734
    %v3736 = vrcp.pop %v3687
    %v3737 = vmul.f32 %v3687, %v3736
    %v3738 = vsub.f32 1.0, %v3737
    %v3739 = vmul.f32 %v3736, %v3738
    %v3740 = vadd.f32 %v3736, %v3739
    %vm3741 = vweird.f32 %v3687
    %vm3742 = vweird.f32 %v3736
    %vm3743 = vmor %vm3741, %vm3742
    %v3744 = vsel %vm3743, %v3736, %v3740
    %v3745 = vand.u32 2147483647, %v3687
    %vm3746 = vcmp.eq.f32.partialorder %v3745, 8.507059e+37
    %v3747 = vand.u32 %v3687, 2147483648
    %v3748 = vor.u32 1.1754944e-38, %v3747
    %v3749 = vsel %vm3746, %v3748, %v3744
    %v3750 = vmul.f32 1.0, %v3749
    %v3751 = vrcp.pop %v3688
    %v3752 = vmul.f32 %v3688, %v3751
    %v3753 = vsub.f32 1.0, %v3752
    %v3754 = vmul.f32 %v3751, %v3753
    %v3755 = vadd.f32 %v3751, %v3754
    %vm3756 = vweird.f32 %v3688
    %vm3757 = vweird.f32 %v3751
    %vm3758 = vmor %vm3756, %vm3757
    %v3759 = vsel %vm3758, %v3751, %v3755
    %v3760 = vand.u32 2147483647, %v3688
    %vm3761 = vcmp.eq.f32.partialorder %v3760, 8.507059e+37
    %v3762 = vand.u32 %v3688, 2147483648
    %v3763 = vor.u32 1.1754944e-38, %v3762
    %v3764 = vsel %vm3761, %v3763, %v3759
    %v3765 = vmul.f32 1.0, %v3764
    %v3766 = vrcp.pop %v3689
    %v3767 = vmul.f32 %v3689, %v3766
    %v3768 = vsub.f32 1.0, %v3767
    %v3769 = vmul.f32 %v3766, %v3768
    %v3770 = vadd.f32 %v3766, %v3769
    %vm3771 = vweird.f32 %v3689
    %vm3772 = vweird.f32 %v3766
    %vm3773 = vmor %vm3771, %vm3772
    %v3774 = vsel %vm3773, %v3766, %v3770
    %v3775 = vand.u32 2147483647, %v3689
    %vm3776 = vcmp.eq.f32.partialorder %v3775, 8.507059e+37
    %v3777 = vand.u32 %v3689, 2147483648
    %v3778 = vor.u32 1.1754944e-38, %v3777
    %v3779 = vsel %vm3776, %v3778, %v3774
    %v3780 = vmul.f32 1.0, %v3779
    %v3781 = vrcp.pop %v3690
    %v3782 = vmul.f32 %v3690, %v3781
    %v3783 = vsub.f32 1.0, %v3782
    %v3784 = vmul.f32 %v3781, %v3783
    %v3785 = vadd.f32 %v3781, %v3784
    %vm3786 = vweird.f32 %v3690
    %vm3787 = vweird.f32 %v3781
    %vm3788 = vmor %vm3786, %vm3787
    %v3789 = vsel %vm3788, %v3781, %v3785
    %v3790 = vand.u32 2147483647, %v3690
    %vm3791 = vcmp.eq.f32.partialorder %v3790, 8.507059e+37
    %v3792 = vand.u32 %v3690, 2147483648
    %v3793 = vor.u32 1.1754944e-38, %v3792
    %v3794 = vsel %vm3791, %v3793, %v3789
    %v3795 = vmul.f32 1.0, %v3794
    %v3796 = vpack.c.bf16 %v3720, %v3705
    %v3797 = vpack.c.bf16 %v3750, %v3735
    %v3798 = vpack.c.bf16 %v3780, %v3765
    %v3799 = vpack.c.bf16 %v3795, %v3795
    %3800 = vst [vmem:[#allocation2] sm:$0xff] %v3796
    %3801 = vst [vmem:[#allocation2 + $0x8] sm:$0xff] %v3797
    %3802 = vst [vmem:[#allocation2 + $0x10] sm:$0xff] %v3798
    %vm3803 = vcmask 125952
    %3804 = vst.msk [vmem:[#allocation2 + $0x18] sm:$0xf] %vm3803, %v3799
    %vm3805 = vcmask 31744
    %3806 = vst.msk [vmem:[%s14] sm:$0xff] %vm3805, %v1989
    // Predicated region
    $region54: #{tpu_custom_call.1} parent=1 // pred_check
      _
    $region55: #{tpu_custom_call.1} parent=1 // pred_check_branch
      %3808 = sbr.rel (0) target = $region57
    $region56: #{tpu_custom_call.1} parent=1 // pred_region
      %3810 = vsyncadd [#allocation3], 0
      %s3812 = sshll.u32 [#allocation2], 4
      %s3813 = int_to_ptr.vmem [resolvable:$true] %s3812
      %s3814 = sshll.u32 %s13, 4
      %s3815 = int_to_ptr.hbm [resolvable:$true] %s3814
      %3817 = dma.vmem_to_hbm [thread:$0]  %s3813, 448, %s3815, [#allocation3]
    $region57: #{tpu_custom_call.1} parent=1 // pred_fallthru
      _
    // Predicated region
    $region58: #{tpu_custom_call.1} parent=1 // pred_check
      _
    $region59: #{tpu_custom_call.1} parent=1 // pred_check_branch
      %3819 = sbr.rel (0) target = $region61
    $region60: #{tpu_custom_call.1} parent=1 // pred_region
      _
    $region61: #{tpu_custom_call.1} parent=1 // pred_fallthru
      _
    // Predicated region
    $region62: #{tpu_custom_call.1} parent=1 // pred_check
      _
    $region63: #{tpu_custom_call.1} parent=1 // pred_check_branch
      %3821 = sbr.rel (0) target = $region65
    $region64: #{tpu_custom_call.1} parent=1 // pred_region
      %3823 = dma.done [#allocation3], 448
    $region65: #{tpu_custom_call.1} parent=1 // pred_fallthru
      _
    // Predicated region
    $region66: #{tpu_custom_call.1} parent=1 // pred_check
      _
    $region67: #{tpu_custom_call.1} parent=1 // pred_check_branch
      %3825 = sbr.rel (0) target = $region69
    $region68: #{tpu_custom_call.1} parent=1 // pred_region
      _
    $region69: #{tpu_custom_call.1} parent=1 // pred_fallthru
      _
    %3826 = vsyncpa [#allocation3], 1

</llo_original>
